<compile_context>
chip_gen: v7x
topology: tpu7x:2x2x1
jax: 0.10.0
libtpu: 0.0.40
codegen_flags: <defaults>
</compile_context>

<pallas_src>
import functools

import numpy as np
import jax
import jax.numpy as jnp
from jax import lax
from jax.experimental import pallas as pl
from jax.experimental.pallas import tpu as pltpu


SEG = 128  # lane-aligned width of each segment of the 'cat' interaction slab


# ----------------------------------------------------------------------------
# Fused DLRM forward kernel
# ----------------------------------------------------------------------------
def _dlrm_fused_kernel(*refs, n_bot, n_emb, n_top, sigmoid_bot, sigmoid_top, seg):
    """refs = [dense,
               (w,b) * n_bot,
               (table, idx, off_lo, off_hi) * n_emb,
               (w,b) * n_top,
               out_ref, z_scratch]"""
    n_in = 1 + 2 * n_bot + 4 * n_emb + 2 * n_top
    in_refs = refs[:n_in]
    out_ref = refs[n_in]
    z_ref = refs[n_in + 1]

    def act(y, is_sigmoid):
        return jax.nn.sigmoid(y) if is_sigmoid else jnp.maximum(y, 0.0)

    pos = 0
    x = in_refs[pos][...]
    pos += 1

    # ---- bottom MLP (activations never leave VMEM/vregs) ----
    for i in range(n_bot):
        w = in_refs[pos][...]
        b = in_refs[pos + 1][...]
        pos += 2
        x = act(jnp.dot(x, w, preferred_element_type=jnp.float32) + b,
                i == sigmoid_bot)

    bt = z_ref.shape[0]
    # last bottom layer is padded to `seg` output lanes -> lane-aligned store
    z_ref[:, 0:seg] = x

    # ---- embedding bags as two MXU matmuls each ----
    for k in range(n_emb):
        table = in_refs[pos][...]      # (n_rows, seg)   (zero-padded columns)
        idx = in_refs[pos + 1][...]    # (nnz_pad, 1)    int32
        lo = in_refs[pos + 2][...]     # (bt, 1)         int32
        hi = in_refs[pos + 3][...]     # (bt, 1)         int32
        pos += 4

        nnz_pad = idx.shape[0]
        n_rows = table.shape[0]

        # gather matrix: onehot[i, j] = 1 iff indices[i] == j  (OOB index -> all zero)
        row_ids = lax.broadcasted_iota(jnp.int32, (nnz_pad, n_rows), 1)
        onehot = (row_ids == idx).astype(jnp.float32)
        gathered = jnp.dot(onehot, table, preferred_element_type=jnp.float32)

        # per-bag segment matrix: segm[b, i] = 1 iff offsets[b] <= i < offsets[b+1]
        pos_ids = lax.broadcasted_iota(jnp.int32, (bt, nnz_pad), 1)
        segm = ((pos_ids >= lo) & (pos_ids < hi)).astype(jnp.float32)
        bag = jnp.dot(segm, gathered, preferred_element_type=jnp.float32)

        z_ref[:, (k + 1) * seg:(k + 2) * seg] = bag   # 128-aligned column slice

    # ---- top MLP over the lane-aligned interaction slab ----
    z = z_ref[...]
    for i in range(n_top):
        w = in_refs[pos][...]
        b = in_refs[pos + 1][...]
        pos += 2
        z = act(jnp.dot(z, w, preferred_element_type=jnp.float32) + b,
                i == sigmoid_top)

    out_ref[...] = z.astype(out_ref.dtype)


def dlrm_forward(padded_params, dense_x_p, sparse_inputs, *, B, BT,
                 sigmoid_bot=-1, sigmoid_top=-1, loss_threshold=0.0, n_last=1):
    bot_p, top_p, emb_p = padded_params
    n_bot, n_top, n_emb = len(bot_p), len(top_p), len(emb_p)
    z_pad = SEG * (1 + n_emb)
    assert B % BT == 0

    inputs = [dense_x_p]
    in_specs = [pl.BlockSpec((BT, dense_x_p.shape[1]), lambda i: (i, 0))]

    def full_spec(arr):
        return pl.BlockSpec(arr.shape, lambda i: (0, 0))

    for w, b in bot_p:
        inputs += [w, b]
        in_specs += [full_spec(w), full_spec(b)]
    for k in range(n_emb):
        idx_p, lo, hi = sparse_inputs[k]
        inputs += [emb_p[k], idx_p, lo, hi]
        in_specs += [full_spec(emb_p[k]), full_spec(idx_p),
                     pl.BlockSpec((BT, 1), lambda i: (i, 0)),
                     pl.BlockSpec((BT, 1), lambda i: (i, 0))]
    for w, b in top_p:
        inputs += [w, b]
        in_specs += [full_spec(w), full_spec(b)]

    kernel = functools.partial(
        _dlrm_fused_kernel, n_bot=n_bot, n_emb=n_emb, n_top=n_top,
        sigmoid_bot=sigmoid_bot, sigmoid_top=sigmoid_top, seg=SEG)

    out = pl.pallas_call(
        kernel,
        out_shape=jax.ShapeDtypeStruct((B, n_last), jnp.float32),
        grid_spec=pltpu.PrefetchScalarGridSpec(
            num_scalar_prefetch=0,
            grid=(B // BT,),
            in_specs=in_specs,
            out_specs=pl.BlockSpec((BT, n_last), lambda i: (i, 0)),
            scratch_shapes=[pltpu.VMEM((BT, z_pad), jnp.float32)],
        ),
        compiler_params=pltpu.CompilerParams(
            dimension_semantics=("parallel",),
            vmem_limit_bytes=32 * 1024 * 1024,
        ),
    )(*inputs)

    if 0.0 < loss_threshold < 1.0:
        out = jnp.clip(out, loss_threshold, 1.0 - loss_threshold)
    return out


# ----------------------------------------------------------------------------
# Parameter init (matches DLRM_Net.create_mlp / create_emb, deterministic)
# ----------------------------------------------------------------------------
def init_dlrm_params(ln_bot, ln_top, ln_emb, m_spa, seed=0):
    rng = np.random.RandomState(seed)

    def mlp(ln):
        layers = []
        for i in range(len(ln) - 1):
            n, m = int(ln[i]), int(ln[i + 1])
            W = rng.normal(0.0, np.sqrt(2.0 / (m + n)), size=(m, n)).astype(np.float32)
            b = rng.normal(0.0, np.sqrt(1.0 / m), size=(m,)).astype(np.float32)
            layers.append((W.T.copy(), b))   # stored as (in_features, out_features)
        return layers

    bot = mlp(ln_bot)
    top = mlp(ln_top)
    embs = []
    for n in ln_emb:
        n = int(n)
        embs.append(rng.uniform(-np.sqrt(1.0 / n), np.sqrt(1.0 / n),
                                size=(n, m_spa)).astype(np.float32))
    return bot, top, embs


def pad_params(bot, top, embs, *, k0_pad, seg):
    """Zero-pad params so all kernel-facing column offsets are 128-lane aligned."""
    widths = [bot[-1][0].shape[1]] + [W.shape[1] for W in embs]
    assert max(widths) <= seg

    bot_p = []
    for i, (w, b) in enumerate(bot):
        wp, bp = w, b
        if i == 0 and wp.shape[0] < k0_pad:                      # pad input dim
            w2 = np.zeros((k0_pad, wp.shape[1]), np.float32)
            w2[:wp.shape[0]] = wp
            wp = w2
        if i == len(bot) - 1 and wp.shape[1] < seg:              # pad output dim to seg
            w2 = np.zeros((wp.shape[0], seg), np.float32)
            w2[:, :wp.shape[1]] = wp
            b2 = np.zeros((seg,), np.float32)
            b2[:bp.shape[0]] = bp
            wp, bp = w2, b2
        bot_p.append((jnp.asarray(wp), jnp.asarray(bp[None, :])))

    embs_p = []
    for W in embs:
        Wp = np.zeros((W.shape[0], seg), np.float32)
        Wp[:, :W.shape[1]] = W
        embs_p.append(jnp.asarray(Wp))

    top_p = []
    for i, (w, b) in enumerate(top):
        wp = w
        if i == 0:                                               # expand to padded slab
            wp = np.zeros((seg * len(widths), w.shape[1]), np.float32)
            src = 0
            for j, wdt in enumerate(widths):
                wp[j * seg:j * seg + wdt, :] = w[src:src + wdt, :]
                src += wdt
        top_p.append((jnp.asarray(wp), jnp.asarray(b[None, :])))

    return bot_p, top_p, embs_p


def prep_sparse(offsets, indices, batch):
    """Build (padded indices, bag lower offsets, bag upper offsets) kernel inputs."""
    off = np.asarray(offsets, np.int32)
    idx = np.asarray(indices, np.int32)
    nnz = idx.shape[0]
    hi = np.concatenate([off[1:], np.array([nnz], np.int32)]).astype(np.int32)
    nnz_pad = max(8, int(np.ceil(nnz / 8)) * 8)
    idx_p = np.zeros((nnz_pad, 1), np.int32)
    idx_p[:nnz, 0] = idx
    return (jnp.asarray(idx_p),
            jnp.asarray(off.reshape(batch, 1)),
            jnp.asarray(hi.reshape(batch, 1)))


# ----------------------------------------------------------------------------
# Pure-NumPy reference (full semantics: relu / sigmoid layer / loss_threshold)
# ----------------------------------------------------------------------------
def ref_forward(params, dense_x, lS_o, lS_i, sigmoid_bot, sigmoid_top, loss_threshold):
    bot, top, embs = params

    def act(y, is_sigmoid):
        return 1.0 / (1.0 + np.exp(-y)) if is_sigmoid else np.maximum(y, 0.0)

    x = np.asarray(dense_x, np.float32)
    for i, (w, b) in enumerate(bot):
        x = act(x @ w + b, i == sigmoid_bot)
    ly = []
    for k, W in enumerate(embs):
        off = np.asarray(lS_o[k])
        idx = np.asarray(lS_i[k])
        ends = np.concatenate([off[1:], [idx.shape[0]]])
        ly.append(np.stack([W[idx[s:e]].sum(axis=0) for s, e in zip(off, ends)]))
    z = np.concatenate([x] + ly, axis=1)
    for i, (w, b) in enumerate(top):
        z = act(z @ w + b, i == sigmoid_top)
    if 0.0 < loss_threshold < 1.0:
        z = np.clip(z, loss_threshold, 1.0 - loss_threshold)
    return z


# ----------------------------------------------------------------------------
if __name__ == "__main__":
    m_spa = 30
    ln_bot = np.array([4, 512, 256, 128, 30], dtype=int)              # arch_mlp_bot
    ln_emb = np.array([50, 60, 70], dtype=int)                        # 3 small tables
    num_int = int(ln_bot[-1]) + len(ln_emb) * m_spa                   # 'cat' width = 120
    ln_top = np.array([num_int, 1024, 512, 512, 256, 1], dtype=int)   # arch_mlp_top_adjusted
    sigmoid_bot = -1
    sigmoid_top = len(ln_top) - 2          # sigmoid on the final top layer (real DLRM)
    loss_threshold = 0.0

    params = init_dlrm_params(ln_bot, ln_top, ln_emb, m_spa, seed=0)
    bot, top, embs = params

    batch = 8
    BT = 8          # batch tile (== batch here; multiple grid steps for larger batches)
    K0_PAD = 8      # pad dense feature count 4 -> 8 sublane-friendly columns

    key = jax.random.PRNGKey(0)
    k_dense, k_bag = jax.random.split(key)

    # dense features: log(x + 1), like CriteoDataset preprocessing
    dense_x = jnp.log1p(
        jax.random.uniform(k_dense, (batch, int(ln_bot[0])), minval=0.0, maxval=100.0)
    ).astype(jnp.float32)
    dense_np = np.asarray(dense_x)
    dense_pad = np.zeros((batch, K0_PAD), np.float32)
    dense_pad[:, :int(ln_bot[0])] = dense_np
    dense_x_p = jnp.asarray(dense_pad)

    lS_o, lS_i, sparse_inputs = [], [], []
    for t, n in enumerate(ln_emb):
        kb, ki = jax.random.split(jax.random.fold_in(k_bag, t))
        bag_sizes = np.asarray(jax.random.randint(kb, (batch,), 1, 4))   # 1..3 ids/bag
        offsets = np.concatenate([[0], np.cumsum(bag_sizes)[:-1]]).astype(np.int32)
        nnz = int(bag_sizes.sum())
        idx = np.asarray(jax.random.randint(ki, (nnz,), 0, int(n))).astype(np.int32)
        lS_o.append(offsets)
        lS_i.append(idx)
        sparse_inputs.append(prep_sparse(offsets, idx, batch))

    padded_params = pad_params(bot, top, embs, k0_pad=K0_PAD, seg=SEG)

    out = dlrm_forward(padded_params, dense_x_p, sparse_inputs, B=batch, BT=BT,
                       sigmoid_bot=sigmoid_bot, sigmoid_top=sigmoid_top,
                       loss_threshold=loss_threshold, n_last=int(ln_top[-1]))
    out = jax.block_until_ready(out)

    ref = ref_forward(params, dense_np, lS_o, lS_i,
                      sigmoid_bot, sigmoid_top, loss_threshold)
    np.testing.assert_allclose(np.asarray(out), ref, rtol=1e-4, atol=1e-4)

    print("KERNEL_OK")
</pallas_src>

<mosaic_0001>
module attributes {stable_mosaic.version = 11 : i64} {
  func.func @_dlrm_fused_kernel(%arg0: i32, %arg1: memref<8x8xf32, #tpu.memory_space<vmem>>, %arg2: memref<8x512xf32, #tpu.memory_space<vmem>>, %arg3: memref<1x512xf32, #tpu.memory_space<vmem>>, %arg4: memref<512x256xf32, #tpu.memory_space<vmem>>, %arg5: memref<1x256xf32, #tpu.memory_space<vmem>>, %arg6: memref<256x128xf32, #tpu.memory_space<vmem>>, %arg7: memref<1x128xf32, #tpu.memory_space<vmem>>, %arg8: memref<128x128xf32, #tpu.memory_space<vmem>>, %arg9: memref<1x128xf32, #tpu.memory_space<vmem>>, %arg10: memref<50x128xf32, #tpu.memory_space<vmem>>, %arg11: memref<16x1xi32, #tpu.memory_space<vmem>>, %arg12: memref<8x1xi32, #tpu.memory_space<vmem>>, %arg13: memref<8x1xi32, #tpu.memory_space<vmem>>, %arg14: memref<60x128xf32, #tpu.memory_space<vmem>>, %arg15: memref<16x1xi32, #tpu.memory_space<vmem>>, %arg16: memref<8x1xi32, #tpu.memory_space<vmem>>, %arg17: memref<8x1xi32, #tpu.memory_space<vmem>>, %arg18: memref<70x128xf32, #tpu.memory_space<vmem>>, %arg19: memref<16x1xi32, #tpu.memory_space<vmem>>, %arg20: memref<8x1xi32, #tpu.memory_space<vmem>>, %arg21: memref<8x1xi32, #tpu.memory_space<vmem>>, %arg22: memref<512x1024xf32, #tpu.memory_space<vmem>>, %arg23: memref<1x1024xf32, #tpu.memory_space<vmem>>, %arg24: memref<1024x512xf32, #tpu.memory_space<vmem>>, %arg25: memref<1x512xf32, #tpu.memory_space<vmem>>, %arg26: memref<512x512xf32, #tpu.memory_space<vmem>>, %arg27: memref<1x512xf32, #tpu.memory_space<vmem>>, %arg28: memref<512x256xf32, #tpu.memory_space<vmem>>, %arg29: memref<1x256xf32, #tpu.memory_space<vmem>>, %arg30: memref<256x1xf32, #tpu.memory_space<vmem>>, %arg31: memref<1x1xf32, #tpu.memory_space<vmem>>, %arg32: memref<8x1xf32, #tpu.memory_space<vmem>>, %arg33: memref<8x512xf32, #tpu.memory_space<vmem>>) attributes {dimension_semantics = [#tpu.dimension_semantics<parallel>], iteration_bounds = array<i64: 1>, scalar_prefetch = 0 : i64, scratch_operands = 1 : i64, tpu.core_type = #tpu.core_type<tc>, window_params = [{transform_indices = @transform_0, window_bounds = array<i64: 8, 8>}, {pipeline_mode = #tpu.pipeline_mode<synchronous>, transform_indices = @transform_1, window_bounds = array<i64: 8, 512>}, {pipeline_mode = #tpu.pipeline_mode<synchronous>, transform_indices = @transform_2, window_bounds = array<i64: 1, 512>}, {pipeline_mode = #tpu.pipeline_mode<synchronous>, transform_indices = @transform_3, window_bounds = array<i64: 512, 256>}, {pipeline_mode = #tpu.pipeline_mode<synchronous>, transform_indices = @transform_4, window_bounds = array<i64: 1, 256>}, {pipeline_mode = #tpu.pipeline_mode<synchronous>, transform_indices = @transform_5, window_bounds = array<i64: 256, 128>}, {pipeline_mode = #tpu.pipeline_mode<synchronous>, transform_indices = @transform_6, window_bounds = array<i64: 1, 128>}, {pipeline_mode = #tpu.pipeline_mode<synchronous>, transform_indices = @transform_7, window_bounds = array<i64: 128, 128>}, {pipeline_mode = #tpu.pipeline_mode<synchronous>, transform_indices = @transform_8, window_bounds = array<i64: 1, 128>}, {pipeline_mode = #tpu.pipeline_mode<synchronous>, transform_indices = @transform_9, window_bounds = array<i64: 50, 128>}, {pipeline_mode = #tpu.pipeline_mode<synchronous>, transform_indices = @transform_10, window_bounds = array<i64: 16, 1>}, {transform_indices = @transform_11, window_bounds = array<i64: 8, 1>}, {transform_indices = @transform_12, window_bounds = array<i64: 8, 1>}, {pipeline_mode = #tpu.pipeline_mode<synchronous>, transform_indices = @transform_13, window_bounds = array<i64: 60, 128>}, {pipeline_mode = #tpu.pipeline_mode<synchronous>, transform_indices = @transform_14, window_bounds = array<i64: 16, 1>}, {transform_indices = @transform_15, window_bounds = array<i64: 8, 1>}, {transform_indices = @transform_16, window_bounds = array<i64: 8, 1>}, {pipeline_mode = #tpu.pipeline_mode<synchronous>, transform_indices = @transform_17, window_bounds = array<i64: 70, 128>}, {pipeline_mode = #tpu.pipeline_mode<synchronous>, transform_indices = @transform_18, window_bounds = array<i64: 16, 1>}, {transform_indices = @transform_19, window_bounds = array<i64: 8, 1>}, {transform_indices = @transform_20, window_bounds = array<i64: 8, 1>}, {pipeline_mode = #tpu.pipeline_mode<synchronous>, transform_indices = @transform_21, window_bounds = array<i64: 512, 1024>}, {pipeline_mode = #tpu.pipeline_mode<synchronous>, transform_indices = @transform_22, window_bounds = array<i64: 1, 1024>}, {pipeline_mode = #tpu.pipeline_mode<synchronous>, transform_indices = @transform_23, window_bounds = array<i64: 1024, 512>}, {pipeline_mode = #tpu.pipeline_mode<synchronous>, transform_indices = @transform_24, window_bounds = array<i64: 1, 512>}, {pipeline_mode = #tpu.pipeline_mode<synchronous>, transform_indices = @transform_25, window_bounds = array<i64: 512, 512>}, {pipeline_mode = #tpu.pipeline_mode<synchronous>, transform_indices = @transform_26, window_bounds = array<i64: 1, 512>}, {pipeline_mode = #tpu.pipeline_mode<synchronous>, transform_indices = @transform_27, window_bounds = array<i64: 512, 256>}, {pipeline_mode = #tpu.pipeline_mode<synchronous>, transform_indices = @transform_28, window_bounds = array<i64: 1, 256>}, {pipeline_mode = #tpu.pipeline_mode<synchronous>, transform_indices = @transform_29, window_bounds = array<i64: 256, 1>}, {pipeline_mode = #tpu.pipeline_mode<synchronous>, transform_indices = @transform_30, window_bounds = array<i64: 1, 1>}, {transform_indices = @transform_31, window_bounds = array<i64: 8, 1>}]} {
    %c0 = arith.constant 0 : index
    %c0_0 = arith.constant 0 : index
    %0 = vector.load %arg1[%c0, %c0_0] : memref<8x8xf32, #tpu.memory_space<vmem>>, vector<8x8xf32>
    %c0_1 = arith.constant 0 : index
    %c0_2 = arith.constant 0 : index
    %1 = vector.load %arg2[%c0_1, %c0_2] : memref<8x512xf32, #tpu.memory_space<vmem>>, vector<8x512xf32>
    %c0_3 = arith.constant 0 : index
    %c0_4 = arith.constant 0 : index
    %2 = vector.load %arg3[%c0_3, %c0_4] : memref<1x512xf32, #tpu.memory_space<vmem>>, vector<1x512xf32>
    %cst = arith.constant dense<0.000000e+00> : vector<8x512xf32>
    %3 = tpu.matmul %0, %1, %cst {dimension_numbers = #tpu.dot_dimension_numbers<[1], [0], [0], [1], [0, 0, 1, 1], [], []>} : vector<8x8xf32>, vector<8x512xf32>, vector<8x512xf32> -> vector<8x512xf32>
    %4 = vector.broadcast %2 : vector<1x512xf32> to vector<8x512xf32>
    %5 = arith.addf %3, %4 : vector<8x512xf32>
    %cst_5 = arith.constant 0.000000e+00 : f32
    %6 = vector.broadcast %cst_5 : f32 to vector<8x512xf32>
    %7 = arith.maximumf %5, %6 : vector<8x512xf32>
    %c0_6 = arith.constant 0 : index
    %c0_7 = arith.constant 0 : index
    %8 = vector.load %arg4[%c0_6, %c0_7] : memref<512x256xf32, #tpu.memory_space<vmem>>, vector<512x256xf32>
    %c0_8 = arith.constant 0 : index
    %c0_9 = arith.constant 0 : index
    %9 = vector.load %arg5[%c0_8, %c0_9] : memref<1x256xf32, #tpu.memory_space<vmem>>, vector<1x256xf32>
    %cst_10 = arith.constant dense<0.000000e+00> : vector<8x256xf32>
    %10 = tpu.matmul %7, %8, %cst_10 {dimension_numbers = #tpu.dot_dimension_numbers<[1], [0], [0], [1], [0, 0, 1, 1], [], []>} : vector<8x512xf32>, vector<512x256xf32>, vector<8x256xf32> -> vector<8x256xf32>
    %11 = vector.broadcast %9 : vector<1x256xf32> to vector<8x256xf32>
    %12 = arith.addf %10, %11 : vector<8x256xf32>
    %cst_11 = arith.constant 0.000000e+00 : f32
    %13 = vector.broadcast %cst_11 : f32 to vector<8x256xf32>
    %14 = arith.maximumf %12, %13 : vector<8x256xf32>
    %c0_12 = arith.constant 0 : index
    %c0_13 = arith.constant 0 : index
    %15 = vector.load %arg6[%c0_12, %c0_13] : memref<256x128xf32, #tpu.memory_space<vmem>>, vector<256x128xf32>
    %c0_14 = arith.constant 0 : index
    %c0_15 = arith.constant 0 : index
    %16 = vector.load %arg7[%c0_14, %c0_15] : memref<1x128xf32, #tpu.memory_space<vmem>>, vector<1x128xf32>
    %cst_16 = arith.constant dense<0.000000e+00> : vector<8x128xf32>
    %17 = tpu.matmul %14, %15, %cst_16 {dimension_numbers = #tpu.dot_dimension_numbers<[1], [0], [0], [1], [0, 0, 1, 1], [], []>} : vector<8x256xf32>, vector<256x128xf32>, vector<8x128xf32> -> vector<8x128xf32>
    %18 = vector.broadcast %16 : vector<1x128xf32> to vector<8x128xf32>
    %19 = arith.addf %17, %18 : vector<8x128xf32>
    %cst_17 = arith.constant 0.000000e+00 : f32
    %20 = vector.broadcast %cst_17 : f32 to vector<8x128xf32>
    %21 = arith.maximumf %19, %20 : vector<8x128xf32>
    %c0_18 = arith.constant 0 : index
    %c0_19 = arith.constant 0 : index
    %22 = vector.load %arg8[%c0_18, %c0_19] : memref<128x128xf32, #tpu.memory_space<vmem>>, vector<128x128xf32>
    %c0_20 = arith.constant 0 : index
    %c0_21 = arith.constant 0 : index
    %23 = vector.load %arg9[%c0_20, %c0_21] : memref<1x128xf32, #tpu.memory_space<vmem>>, vector<1x128xf32>
    %cst_22 = arith.constant dense<0.000000e+00> : vector<8x128xf32>
    %24 = tpu.matmul %21, %22, %cst_22 {dimension_numbers = #tpu.dot_dimension_numbers<[1], [0], [0], [1], [0, 0, 1, 1], [], []>} : vector<8x128xf32>, vector<128x128xf32>, vector<8x128xf32> -> vector<8x128xf32>
    %25 = vector.broadcast %23 : vector<1x128xf32> to vector<8x128xf32>
    %26 = arith.addf %24, %25 : vector<8x128xf32>
    %cst_23 = arith.constant 0.000000e+00 : f32
    %27 = vector.broadcast %cst_23 : f32 to vector<8x128xf32>
    %28 = arith.maximumf %26, %27 : vector<8x128xf32>
    %c0_24 = arith.constant 0 : index
    %c0_25 = arith.constant 0 : index
    %29 = vector.load %arg33[%c0_24, %c0_25] : memref<8x512xf32, #tpu.memory_space<vmem>>, vector<8x128xf32>
    tpu.vector_store %arg33[%c0_24, %c0_25], %28 {strides = array<i32>} : memref<8x512xf32, #tpu.memory_space<vmem>>, vector<8x128xf32>,
    %c0_26 = arith.constant 0 : index
    %c0_27 = arith.constant 0 : index
    %30 = vector.load %arg10[%c0_26, %c0_27] : memref<50x128xf32, #tpu.memory_space<vmem>>, vector<50x128xf32>
    %c0_28 = arith.constant 0 : index
    %c0_29 = arith.constant 0 : index
    %31 = vector.load %arg11[%c0_28, %c0_29] : memref<16x1xi32, #tpu.memory_space<vmem>>, vector<16x1xi32>
    %c0_30 = arith.constant 0 : index
    %c0_31 = arith.constant 0 : index
    %32 = vector.load %arg12[%c0_30, %c0_31] : memref<8x1xi32, #tpu.memory_space<vmem>>, vector<8x1xi32>
    %c0_32 = arith.constant 0 : index
    %c0_33 = arith.constant 0 : index
    %33 = vector.load %arg13[%c0_32, %c0_33] : memref<8x1xi32, #tpu.memory_space<vmem>>, vector<8x1xi32>
    %34 = tpu.iota {dimensions = array<i32: 1>} : vector<16x50xi32>
    %35 = vector.broadcast %31 : vector<16x1xi32> to vector<16x50xi32>
    %36 = arith.cmpi eq, %34, %35 : vector<16x50xi32>
    %37 = arith.extui %36 : vector<16x50xi1> to vector<16x50xi32>
    %38 = arith.sitofp %37 : vector<16x50xi32> to vector<16x50xf32>
    %cst_34 = arith.constant dense<0.000000e+00> : vector<16x128xf32>
    %39 = tpu.matmul %38, %30, %cst_34 {dimension_numbers = #tpu.dot_dimension_numbers<[1], [0], [0], [1], [0, 0, 1, 1], [], []>} : vector<16x50xf32>, vector<50x128xf32>, vector<16x128xf32> -> vector<16x128xf32>
    %40 = tpu.iota {dimensions = array<i32: 1>} : vector<8x16xi32>
    %41 = vector.broadcast %32 : vector<8x1xi32> to vector<8x16xi32>
    %42 = arith.cmpi sge, %40, %41 : vector<8x16xi32>
    %43 = vector.broadcast %33 : vector<8x1xi32> to vector<8x16xi32>
    %44 = arith.cmpi slt, %40, %43 : vector<8x16xi32>
    %45 = arith.andi %42, %44 : vector<8x16xi1>
    %46 = arith.extui %45 : vector<8x16xi1> to vector<8x16xi32>
    %47 = arith.sitofp %46 : vector<8x16xi32> to vector<8x16xf32>
    %cst_35 = arith.constant dense<0.000000e+00> : vector<8x128xf32>
    %48 = tpu.matmul %47, %39, %cst_35 {dimension_numbers = #tpu.dot_dimension_numbers<[1], [0], [0], [1], [0, 0, 1, 1], [], []>} : vector<8x16xf32>, vector<16x128xf32>, vector<8x128xf32> -> vector<8x128xf32>
    %c0_36 = arith.constant 0 : index
    %c128 = arith.constant 128 : index
    %49 = vector.load %arg33[%c0_36, %c128] : memref<8x512xf32, #tpu.memory_space<vmem>>, vector<8x128xf32>
    tpu.vector_store %arg33[%c0_36, %c128], %48 {strides = array<i32>} : memref<8x512xf32, #tpu.memory_space<vmem>>, vector<8x128xf32>,
    %c0_37 = arith.constant 0 : index
    %c0_38 = arith.constant 0 : index
    %50 = vector.load %arg14[%c0_37, %c0_38] : memref<60x128xf32, #tpu.memory_space<vmem>>, vector<60x128xf32>
    %c0_39 = arith.constant 0 : index
    %c0_40 = arith.constant 0 : index
    %51 = vector.load %arg15[%c0_39, %c0_40] : memref<16x1xi32, #tpu.memory_space<vmem>>, vector<16x1xi32>
    %c0_41 = arith.constant 0 : index
    %c0_42 = arith.constant 0 : index
    %52 = vector.load %arg16[%c0_41, %c0_42] : memref<8x1xi32, #tpu.memory_space<vmem>>, vector<8x1xi32>
    %c0_43 = arith.constant 0 : index
    %c0_44 = arith.constant 0 : index
    %53 = vector.load %arg17[%c0_43, %c0_44] : memref<8x1xi32, #tpu.memory_space<vmem>>, vector<8x1xi32>
    %54 = tpu.iota {dimensions = array<i32: 1>} : vector<16x60xi32>
    %55 = vector.broadcast %51 : vector<16x1xi32> to vector<16x60xi32>
    %56 = arith.cmpi eq, %54, %55 : vector<16x60xi32>
    %57 = arith.extui %56 : vector<16x60xi1> to vector<16x60xi32>
    %58 = arith.sitofp %57 : vector<16x60xi32> to vector<16x60xf32>
    %cst_45 = arith.constant dense<0.000000e+00> : vector<16x128xf32>
    %59 = tpu.matmul %58, %50, %cst_45 {dimension_numbers = #tpu.dot_dimension_numbers<[1], [0], [0], [1], [0, 0, 1, 1], [], []>} : vector<16x60xf32>, vector<60x128xf32>, vector<16x128xf32> -> vector<16x128xf32>
    %60 = tpu.iota {dimensions = array<i32: 1>} : vector<8x16xi32>
    %61 = vector.broadcast %52 : vector<8x1xi32> to vector<8x16xi32>
    %62 = arith.cmpi sge, %60, %61 : vector<8x16xi32>
    %63 = vector.broadcast %53 : vector<8x1xi32> to vector<8x16xi32>
    %64 = arith.cmpi slt, %60, %63 : vector<8x16xi32>
    %65 = arith.andi %62, %64 : vector<8x16xi1>
    %66 = arith.extui %65 : vector<8x16xi1> to vector<8x16xi32>
    %67 = arith.sitofp %66 : vector<8x16xi32> to vector<8x16xf32>
    %cst_46 = arith.constant dense<0.000000e+00> : vector<8x128xf32>
    %68 = tpu.matmul %67, %59, %cst_46 {dimension_numbers = #tpu.dot_dimension_numbers<[1], [0], [0], [1], [0, 0, 1, 1], [], []>} : vector<8x16xf32>, vector<16x128xf32>, vector<8x128xf32> -> vector<8x128xf32>
    %c0_47 = arith.constant 0 : index
    %c256 = arith.constant 256 : index
    %69 = vector.load %arg33[%c0_47, %c256] : memref<8x512xf32, #tpu.memory_space<vmem>>, vector<8x128xf32>
    tpu.vector_store %arg33[%c0_47, %c256], %68 {strides = array<i32>} : memref<8x512xf32, #tpu.memory_space<vmem>>, vector<8x128xf32>,
    %c0_48 = arith.constant 0 : index
    %c0_49 = arith.constant 0 : index
    %70 = vector.load %arg18[%c0_48, %c0_49] : memref<70x128xf32, #tpu.memory_space<vmem>>, vector<70x128xf32>
    %c0_50 = arith.constant 0 : index
    %c0_51 = arith.constant 0 : index
    %71 = vector.load %arg19[%c0_50, %c0_51] : memref<16x1xi32, #tpu.memory_space<vmem>>, vector<16x1xi32>
    %c0_52 = arith.constant 0 : index
    %c0_53 = arith.constant 0 : index
    %72 = vector.load %arg20[%c0_52, %c0_53] : memref<8x1xi32, #tpu.memory_space<vmem>>, vector<8x1xi32>
    %c0_54 = arith.constant 0 : index
    %c0_55 = arith.constant 0 : index
    %73 = vector.load %arg21[%c0_54, %c0_55] : memref<8x1xi32, #tpu.memory_space<vmem>>, vector<8x1xi32>
    %74 = tpu.iota {dimensions = array<i32: 1>} : vector<16x70xi32>
    %75 = vector.broadcast %71 : vector<16x1xi32> to vector<16x70xi32>
    %76 = arith.cmpi eq, %74, %75 : vector<16x70xi32>
    %77 = arith.extui %76 : vector<16x70xi1> to vector<16x70xi32>
    %78 = arith.sitofp %77 : vector<16x70xi32> to vector<16x70xf32>
    %cst_56 = arith.constant dense<0.000000e+00> : vector<16x128xf32>
    %79 = tpu.matmul %78, %70, %cst_56 {dimension_numbers = #tpu.dot_dimension_numbers<[1], [0], [0], [1], [0, 0, 1, 1], [], []>} : vector<16x70xf32>, vector<70x128xf32>, vector<16x128xf32> -> vector<16x128xf32>
    %80 = tpu.iota {dimensions = array<i32: 1>} : vector<8x16xi32>
    %81 = vector.broadcast %72 : vector<8x1xi32> to vector<8x16xi32>
    %82 = arith.cmpi sge, %80, %81 : vector<8x16xi32>
    %83 = vector.broadcast %73 : vector<8x1xi32> to vector<8x16xi32>
    %84 = arith.cmpi slt, %80, %83 : vector<8x16xi32>
    %85 = arith.andi %82, %84 : vector<8x16xi1>
    %86 = arith.extui %85 : vector<8x16xi1> to vector<8x16xi32>
    %87 = arith.sitofp %86 : vector<8x16xi32> to vector<8x16xf32>
    %cst_57 = arith.constant dense<0.000000e+00> : vector<8x128xf32>
    %88 = tpu.matmul %87, %79, %cst_57 {dimension_numbers = #tpu.dot_dimension_numbers<[1], [0], [0], [1], [0, 0, 1, 1], [], []>} : vector<8x16xf32>, vector<16x128xf32>, vector<8x128xf32> -> vector<8x128xf32>
    %c0_58 = arith.constant 0 : index
    %c384 = arith.constant 384 : index
    %89 = vector.load %arg33[%c0_58, %c384] : memref<8x512xf32, #tpu.memory_space<vmem>>, vector<8x128xf32>
    tpu.vector_store %arg33[%c0_58, %c384], %88 {strides = array<i32>} : memref<8x512xf32, #tpu.memory_space<vmem>>, vector<8x128xf32>,
    %c0_59 = arith.constant 0 : index
    %c0_60 = arith.constant 0 : index
    %90 = vector.load %arg33[%c0_59, %c0_60] : memref<8x512xf32, #tpu.memory_space<vmem>>, vector<8x512xf32>
    %c0_61 = arith.constant 0 : index
    %c0_62 = arith.constant 0 : index
    %91 = vector.load %arg22[%c0_61, %c0_62] : memref<512x1024xf32, #tpu.memory_space<vmem>>, vector<512x1024xf32>
    %c0_63 = arith.constant 0 : index
    %c0_64 = arith.constant 0 : index
    %92 = vector.load %arg23[%c0_63, %c0_64] : memref<1x1024xf32, #tpu.memory_space<vmem>>, vector<1x1024xf32>
    %cst_65 = arith.constant dense<0.000000e+00> : vector<8x1024xf32>
    %93 = tpu.matmul %90, %91, %cst_65 {dimension_numbers = #tpu.dot_dimension_numbers<[1], [0], [0], [1], [0, 0, 1, 1], [], []>} : vector<8x512xf32>, vector<512x1024xf32>, vector<8x1024xf32> -> vector<8x1024xf32>
    %94 = vector.broadcast %92 : vector<1x1024xf32> to vector<8x1024xf32>
    %95 = arith.addf %93, %94 : vector<8x1024xf32>
    %cst_66 = arith.constant 0.000000e+00 : f32
    %96 = vector.broadcast %cst_66 : f32 to vector<8x1024xf32>
    %97 = arith.maximumf %95, %96 : vector<8x1024xf32>
    %c0_67 = arith.constant 0 : index
    %c0_68 = arith.constant 0 : index
    %98 = vector.load %arg24[%c0_67, %c0_68] : memref<1024x512xf32, #tpu.memory_space<vmem>>, vector<1024x512xf32>
    %c0_69 = arith.constant 0 : index
    %c0_70 = arith.constant 0 : index
    %99 = vector.load %arg25[%c0_69, %c0_70] : memref<1x512xf32, #tpu.memory_space<vmem>>, vector<1x512xf32>
    %cst_71 = arith.constant dense<0.000000e+00> : vector<8x512xf32>
    %100 = tpu.matmul %97, %98, %cst_71 {dimension_numbers = #tpu.dot_dimension_numbers<[1], [0], [0], [1], [0, 0, 1, 1], [], []>} : vector<8x1024xf32>, vector<1024x512xf32>, vector<8x512xf32> -> vector<8x512xf32>
    %101 = vector.broadcast %99 : vector<1x512xf32> to vector<8x512xf32>
    %102 = arith.addf %100, %101 : vector<8x512xf32>
    %cst_72 = arith.constant 0.000000e+00 : f32
    %103 = vector.broadcast %cst_72 : f32 to vector<8x512xf32>
    %104 = arith.maximumf %102, %103 : vector<8x512xf32>
    %c0_73 = arith.constant 0 : index
    %c0_74 = arith.constant 0 : index
    %105 = vector.load %arg26[%c0_73, %c0_74] : memref<512x512xf32, #tpu.memory_space<vmem>>, vector<512x512xf32>
    %c0_75 = arith.constant 0 : index
    %c0_76 = arith.constant 0 : index
    %106 = vector.load %arg27[%c0_75, %c0_76] : memref<1x512xf32, #tpu.memory_space<vmem>>, vector<1x512xf32>
    %cst_77 = arith.constant dense<0.000000e+00> : vector<8x512xf32>
    %107 = tpu.matmul %104, %105, %cst_77 {dimension_numbers = #tpu.dot_dimension_numbers<[1], [0], [0], [1], [0, 0, 1, 1], [], []>} : vector<8x512xf32>, vector<512x512xf32>, vector<8x512xf32> -> vector<8x512xf32>
    %108 = vector.broadcast %106 : vector<1x512xf32> to vector<8x512xf32>
    %109 = arith.addf %107, %108 : vector<8x512xf32>
    %cst_78 = arith.constant 0.000000e+00 : f32
    %110 = vector.broadcast %cst_78 : f32 to vector<8x512xf32>
    %111 = arith.maximumf %109, %110 : vector<8x512xf32>
    %c0_79 = arith.constant 0 : index
    %c0_80 = arith.constant 0 : index
    %112 = vector.load %arg28[%c0_79, %c0_80] : memref<512x256xf32, #tpu.memory_space<vmem>>, vector<512x256xf32>
    %c0_81 = arith.constant 0 : index
    %c0_82 = arith.constant 0 : index
    %113 = vector.load %arg29[%c0_81, %c0_82] : memref<1x256xf32, #tpu.memory_space<vmem>>, vector<1x256xf32>
    %cst_83 = arith.constant dense<0.000000e+00> : vector<8x256xf32>
    %114 = tpu.matmul %111, %112, %cst_83 {dimension_numbers = #tpu.dot_dimension_numbers<[1], [0], [0], [1], [0, 0, 1, 1], [], []>} : vector<8x512xf32>, vector<512x256xf32>, vector<8x256xf32> -> vector<8x256xf32>
    %115 = vector.broadcast %113 : vector<1x256xf32> to vector<8x256xf32>
    %116 = arith.addf %114, %115 : vector<8x256xf32>
    %cst_84 = arith.constant 0.000000e+00 : f32
    %117 = vector.broadcast %cst_84 : f32 to vector<8x256xf32>
    %118 = arith.maximumf %116, %117 : vector<8x256xf32>
    %c0_85 = arith.constant 0 : index
    %c0_86 = arith.constant 0 : index
    %119 = vector.load %arg30[%c0_85, %c0_86] : memref<256x1xf32, #tpu.memory_space<vmem>>, vector<256x1xf32>
    %c0_87 = arith.constant 0 : index
    %c0_88 = arith.constant 0 : index
    %120 = vector.load %arg31[%c0_87, %c0_88] : memref<1x1xf32, #tpu.memory_space<vmem>>, vector<1x1xf32>
    %cst_89 = arith.constant dense<0.000000e+00> : vector<8x1xf32>
    %121 = tpu.matmul %118, %119, %cst_89 {dimension_numbers = #tpu.dot_dimension_numbers<[1], [0], [0], [1], [0, 0, 1, 1], [], []>} : vector<8x256xf32>, vector<256x1xf32>, vector<8x1xf32> -> vector<8x1xf32>
    %122 = vector.broadcast %120 : vector<1x1xf32> to vector<8x1xf32>
    %123 = arith.addf %121, %122 : vector<8x1xf32>
    %124 = arith.negf %123 : vector<8x1xf32>
    %125 = math.exp %124 : vector<8x1xf32>
    %cst_90 = arith.constant 1.000000e+00 : f32
    %126 = vector.broadcast %cst_90 : f32 to vector<8x1xf32>
    %127 = arith.addf %126, %125 : vector<8x1xf32>
    %128 = arith.divf %126, %127 : vector<8x1xf32>
    %c0_91 = arith.constant 0 : index
    %c0_92 = arith.constant 0 : index
    %129 = vector.load %arg32[%c0_91, %c0_92] : memref<8x1xf32, #tpu.memory_space<vmem>>, vector<8x1xf32>
    tpu.vector_store %arg32[%c0_91, %c0_92], %128 {strides = array<i32>} : memref<8x1xf32, #tpu.memory_space<vmem>>, vector<8x1xf32>,
    return
  }
  func.func @transform_0(%arg0: i32) -> (i32, i32) {
    %c0_i32 = arith.constant 0 : i32
    %c0_i32_0 = arith.constant 0 : i32
    return %arg0, %c0_i32 : i32, i32
  }
  func.func @transform_1(%arg0: i32) -> (i32, i32) {
    %c0_i32 = arith.constant 0 : i32
    %c0_i32_0 = arith.constant 0 : i32
    %c0_i32_1 = arith.constant 0 : i32
    return %c0_i32, %c0_i32_0 : i32, i32
  }
  func.func @transform_2(%arg0: i32) -> (i32, i32) {
    %c0_i32 = arith.constant 0 : i32
    %c0_i32_0 = arith.constant 0 : i32
    %c0_i32_1 = arith.constant 0 : i32
    return %c0_i32, %c0_i32_0 : i32, i32
  }
  func.func @transform_3(%arg0: i32) -> (i32, i32) {
    %c0_i32 = arith.constant 0 : i32
    %c0_i32_0 = arith.constant 0 : i32
    %c0_i32_1 = arith.constant 0 : i32
    return %c0_i32, %c0_i32_0 : i32, i32
  }
  func.func @transform_4(%arg0: i32) -> (i32, i32) {
    %c0_i32 = arith.constant 0 : i32
    %c0_i32_0 = arith.constant 0 : i32
    %c0_i32_1 = arith.constant 0 : i32
    return %c0_i32, %c0_i32_0 : i32, i32
  }
  func.func @transform_5(%arg0: i32) -> (i32, i32) {
    %c0_i32 = arith.constant 0 : i32
    %c0_i32_0 = arith.constant 0 : i32
    %c0_i32_1 = arith.constant 0 : i32
    return %c0_i32, %c0_i32_0 : i32, i32
  }
  func.func @transform_6(%arg0: i32) -> (i32, i32) {
    %c0_i32 = arith.constant 0 : i32
    %c0_i32_0 = arith.constant 0 : i32
    %c0_i32_1 = arith.constant 0 : i32
    return %c0_i32, %c0_i32_0 : i32, i32
  }
  func.func @transform_7(%arg0: i32) -> (i32, i32) {
    %c0_i32 = arith.constant 0 : i32
    %c0_i32_0 = arith.constant 0 : i32
    %c0_i32_1 = arith.constant 0 : i32
    return %c0_i32, %c0_i32_0 : i32, i32
  }
  func.func @transform_8(%arg0: i32) -> (i32, i32) {
    %c0_i32 = arith.constant 0 : i32
    %c0_i32_0 = arith.constant 0 : i32
    %c0_i32_1 = arith.constant 0 : i32
    return %c0_i32, %c0_i32_0 : i32, i32
  }
  func.func @transform_9(%arg0: i32) -> (i32, i32) {
    %c0_i32 = arith.constant 0 : i32
    %c0_i32_0 = arith.constant 0 : i32
    %c0_i32_1 = arith.constant 0 : i32
    return %c0_i32, %c0_i32_0 : i32, i32
  }
  func.func @transform_10(%arg0: i32) -> (i32, i32) {
    %c0_i32 = arith.constant 0 : i32
    %c0_i32_0 = arith.constant 0 : i32
    %c0_i32_1 = arith.constant 0 : i32
    return %c0_i32, %c0_i32_0 : i32, i32
  }
  func.func @transform_11(%arg0: i32) -> (i32, i32) {
    %c0_i32 = arith.constant 0 : i32
    %c0_i32_0 = arith.constant 0 : i32
    return %arg0, %c0_i32 : i32, i32
  }
  func.func @transform_12(%arg0: i32) -> (i32, i32) {
    %c0_i32 = arith.constant 0 : i32
    %c0_i32_0 = arith.constant 0 : i32
    return %arg0, %c0_i32 : i32, i32
  }
  func.func @transform_13(%arg0: i32) -> (i32, i32) {
    %c0_i32 = arith.constant 0 : i32
    %c0_i32_0 = arith.constant 0 : i32
    %c0_i32_1 = arith.constant 0 : i32
    return %c0_i32, %c0_i32_0 : i32, i32
  }
  func.func @transform_14(%arg0: i32) -> (i32, i32) {
    %c0_i32 = arith.constant 0 : i32
    %c0_i32_0 = arith.constant 0 : i32
    %c0_i32_1 = arith.constant 0 : i32
    return %c0_i32, %c0_i32_0 : i32, i32
  }
  func.func @transform_15(%arg0: i32) -> (i32, i32) {
    %c0_i32 = arith.constant 0 : i32
    %c0_i32_0 = arith.constant 0 : i32
    return %arg0, %c0_i32 : i32, i32
  }
  func.func @transform_16(%arg0: i32) -> (i32, i32) {
    %c0_i32 = arith.constant 0 : i32
    %c0_i32_0 = arith.constant 0 : i32
    return %arg0, %c0_i32 : i32, i32
  }
  func.func @transform_17(%arg0: i32) -> (i32, i32) {
    %c0_i32 = arith.constant 0 : i32
    %c0_i32_0 = arith.constant 0 : i32
    %c0_i32_1 = arith.constant 0 : i32
    return %c0_i32, %c0_i32_0 : i32, i32
  }
  func.func @transform_18(%arg0: i32) -> (i32, i32) {
    %c0_i32 = arith.constant 0 : i32
    %c0_i32_0 = arith.constant 0 : i32
    %c0_i32_1 = arith.constant 0 : i32
    return %c0_i32, %c0_i32_0 : i32, i32
  }
  func.func @transform_19(%arg0: i32) -> (i32, i32) {
    %c0_i32 = arith.constant 0 : i32
    %c0_i32_0 = arith.constant 0 : i32
    return %arg0, %c0_i32 : i32, i32
  }
  func.func @transform_20(%arg0: i32) -> (i32, i32) {
    %c0_i32 = arith.constant 0 : i32
    %c0_i32_0 = arith.constant 0 : i32
    return %arg0, %c0_i32 : i32, i32
  }
  func.func @transform_21(%arg0: i32) -> (i32, i32) {
    %c0_i32 = arith.constant 0 : i32
    %c0_i32_0 = arith.constant 0 : i32
    %c0_i32_1 = arith.constant 0 : i32
    return %c0_i32, %c0_i32_0 : i32, i32
  }
  func.func @transform_22(%arg0: i32) -> (i32, i32) {
    %c0_i32 = arith.constant 0 : i32
    %c0_i32_0 = arith.constant 0 : i32
    %c0_i32_1 = arith.constant 0 : i32
    return %c0_i32, %c0_i32_0 : i32, i32
  }
  func.func @transform_23(%arg0: i32) -> (i32, i32) {
    %c0_i32 = arith.constant 0 : i32
    %c0_i32_0 = arith.constant 0 : i32
    %c0_i32_1 = arith.constant 0 : i32
    return %c0_i32, %c0_i32_0 : i32, i32
  }
  func.func @transform_24(%arg0: i32) -> (i32, i32) {
    %c0_i32 = arith.constant 0 : i32
    %c0_i32_0 = arith.constant 0 : i32
    %c0_i32_1 = arith.constant 0 : i32
    return %c0_i32, %c0_i32_0 : i32, i32
  }
  func.func @transform_25(%arg0: i32) -> (i32, i32) {
    %c0_i32 = arith.constant 0 : i32
    %c0_i32_0 = arith.constant 0 : i32
    %c0_i32_1 = arith.constant 0 : i32
    return %c0_i32, %c0_i32_0 : i32, i32
  }
  func.func @transform_26(%arg0: i32) -> (i32, i32) {
    %c0_i32 = arith.constant 0 : i32
    %c0_i32_0 = arith.constant 0 : i32
    %c0_i32_1 = arith.constant 0 : i32
    return %c0_i32, %c0_i32_0 : i32, i32
  }
  func.func @transform_27(%arg0: i32) -> (i32, i32) {
    %c0_i32 = arith.constant 0 : i32
    %c0_i32_0 = arith.constant 0 : i32
    %c0_i32_1 = arith.constant 0 : i32
    return %c0_i32, %c0_i32_0 : i32, i32
  }
  func.func @transform_28(%arg0: i32) -> (i32, i32) {
    %c0_i32 = arith.constant 0 : i32
    %c0_i32_0 = arith.constant 0 : i32
    %c0_i32_1 = arith.constant 0 : i32
    return %c0_i32, %c0_i32_0 : i32, i32
  }
  func.func @transform_29(%arg0: i32) -> (i32, i32) {
    %c0_i32 = arith.constant 0 : i32
    %c0_i32_0 = arith.constant 0 : i32
    %c0_i32_1 = arith.constant 0 : i32
    return %c0_i32, %c0_i32_0 : i32, i32
  }
  func.func @transform_30(%arg0: i32) -> (i32, i32) {
    %c0_i32 = arith.constant 0 : i32
    %c0_i32_0 = arith.constant 0 : i32
    %c0_i32_1 = arith.constant 0 : i32
    return %c0_i32, %c0_i32_0 : i32, i32
  }
  func.func @transform_31(%arg0: i32) -> (i32, i32) {
    %c0_i32 = arith.constant 0 : i32
    %c0_i32_0 = arith.constant 0 : i32
    return %arg0, %c0_i32 : i32, i32
  }
}

</mosaic_0001>

<llo_original>
// kernel: tpu_custom_call.1
$region0: #{tpu_custom_call.1}
  #allocation0 [shape = 'u32[]', space=smem, size = 0x4, offset = 0x4, fixed_abs, tag = 'smem constant byte address 0x4 - core index']
  #allocation1 [shape = 'u32[144,128]{1,0:T(1,128)}', space=vmem, size = 0x12000, scoped, tag = 'internal scratch']
  #allocation2 [shape = 'f32[8,512]{1,0:T(8,128)}', space=vmem, size = 0x4000, scoped, tag = 'scratch operand']
  #allocation3 [shape = 'f32[1,1]{1,0:T(1,128)S(1)}', space=vmem, size = 0x200, scoped, tag = 'scoped memory for tpu_custom_call.1']
  %s0 = inlined_call_operand.smem [shape: u32[32], index: -1, kind: input, shape index: {}]
  %s1 = sld [smem:[%s0]]
  %s2 = scalar_lea.smem %s0, 1
  %s3 = sld [smem:[%s2]]
  %s4 = scalar_lea.smem %s0, 2
  %s5 = sld [smem:[%s4]]
  %s6 = scalar_lea.smem %s0, 3
  %s7 = sld [smem:[%s6]]
  %s8 = scalar_lea.smem %s0, 4
  %s9 = sld [smem:[%s8]]
  %s10 = scalar_lea.smem %s0, 5
  %s11 = sld [smem:[%s10]]
  %s12 = scalar_lea.smem %s0, 6
  %s13 = sld [smem:[%s12]]
  %s14 = scalar_lea.smem %s0, 7
  %s15 = sld [smem:[%s14]]
  %s16 = scalar_lea.smem %s0, 8
  %s17 = sld [smem:[%s16]]
  %s18 = scalar_lea.smem %s0, 9
  %s19 = sld [smem:[%s18]]
  %s20 = scalar_lea.smem %s0, 10
  %s21 = sld [smem:[%s20]]
  %s22 = scalar_lea.smem %s0, 11
  %s23 = sld [smem:[%s22]]
  %s24 = scalar_lea.smem %s0, 12
  %s25 = sld [smem:[%s24]]
  %s26 = scalar_lea.smem %s0, 13
  %s27 = sld [smem:[%s26]]
  %s28 = scalar_lea.smem %s0, 14
  %s29 = sld [smem:[%s28]]
  %s30 = scalar_lea.smem %s0, 15
  %s31 = sld [smem:[%s30]]
  %s32 = scalar_lea.smem %s0, 16
  %s33 = sld [smem:[%s32]]
  %s34 = scalar_lea.smem %s0, 17
  %s35 = sld [smem:[%s34]]
  %s36 = scalar_lea.smem %s0, 18
  %s37 = sld [smem:[%s36]]
  %s38 = scalar_lea.smem %s0, 19
  %s39 = sld [smem:[%s38]]
  %s40 = scalar_lea.smem %s0, 20
  %s41 = sld [smem:[%s40]]
  %s42 = scalar_lea.smem %s0, 21
  %s43 = sld [smem:[%s42]]
  %s44 = scalar_lea.smem %s0, 22
  %s45 = sld [smem:[%s44]]
  %s46 = scalar_lea.smem %s0, 23
  %s47 = sld [smem:[%s46]]
  %s48 = scalar_lea.smem %s0, 24
  %s49 = sld [smem:[%s48]]
  %s50 = scalar_lea.smem %s0, 25
  %s51 = sld [smem:[%s50]]
  %s52 = scalar_lea.smem %s0, 26
  %s53 = sld [smem:[%s52]]
  %s54 = scalar_lea.smem %s0, 27
  %s55 = sld [smem:[%s54]]
  %s56 = scalar_lea.smem %s0, 28
  %s57 = sld [smem:[%s56]]
  %s58 = scalar_lea.smem %s0, 29
  %s59 = sld [smem:[%s58]]
  %s60 = scalar_lea.smem %s0, 30
  %s61 = sld [smem:[%s60]]
  %s62 = scalar_lea.smem %s0, 31
  %s63 = sld [smem:[%s62]]
  %s64 = sld [smem:[#allocation0]]
  $region214: #{tpu_custom_call.1} parent=0
    _
  %s66 = ssub.s32 1, %s64
  %s67 = scalar_select 0, %s66, %s64
  %v68 = vstv %s61
  %69 = vst [vmem:[#allocation3] sm:$0x1] %v68
  $region1: #{tpu_custom_call.1} parent=0
    #allocation4 [shape = 'u8[4096]{0}', space=vmem, size = 0x1000, scoped, tag = 'input window, operand 0, single buffered']
    #allocation5 [shape = 's32[1]{0}', space=sflag, size = 0x4, scoped, tag = 'scoped memory for tpu_custom_call.1']
    #allocation6 [shape = 'u8[16384]{0}', space=vmem, size = 0x4000, scoped, tag = 'input window, operand 1, single buffered']
    #allocation7 [shape = 's32[1]{0}', space=sflag, size = 0x4, scoped, tag = 'scoped memory for tpu_custom_call.1']
    #allocation8 [shape = 'u8[2048]{0}', space=vmem, size = 0x800, scoped, tag = 'input window, operand 2, single buffered']
    #allocation9 [shape = 'u8[524288]{0}', space=vmem, size = 0x80000, scoped, tag = 'input window, operand 3, single buffered']
    #allocation10 [shape = 's32[1]{0}', space=sflag, size = 0x4, scoped, tag = 'scoped memory for tpu_custom_call.1']
    #allocation11 [shape = 'u8[1024]{0}', space=vmem, size = 0x400, scoped, tag = 'input window, operand 4, single buffered']
    #allocation12 [shape = 'u8[131072]{0}', space=vmem, size = 0x20000, scoped, tag = 'input window, operand 5, single buffered']
    #allocation13 [shape = 's32[1]{0}', space=sflag, size = 0x4, scoped, tag = 'scoped memory for tpu_custom_call.1']
    #allocation14 [shape = 'u8[512]{0}', space=vmem, size = 0x400, scoped, tag = 'input window, operand 6, single buffered']
    #allocation15 [shape = 'u8[65536]{0}', space=vmem, size = 0x10000, scoped, tag = 'input window, operand 7, single buffered']
    #allocation16 [shape = 's32[1]{0}', space=sflag, size = 0x4, scoped, tag = 'scoped memory for tpu_custom_call.1']
    #allocation17 [shape = 'u8[512]{0}', space=vmem, size = 0x400, scoped, tag = 'input window, operand 8, single buffered']
    #allocation18 [shape = 'u8[28672]{0}', space=vmem, size = 0x7000, scoped, tag = 'input window, operand 9, single buffered']
    #allocation19 [shape = 's32[1]{0}', space=sflag, size = 0x4, scoped, tag = 'scoped memory for tpu_custom_call.1']
    #allocation20 [shape = 'u8[32768]{0}', space=vmem, size = 0x8000, scoped, tag = 'input window, operand 13, single buffered']
    #allocation21 [shape = 'u8[36864]{0}', space=vmem, size = 0x9000, scoped, tag = 'input window, operand 17, single buffered']
    #allocation22 [shape = 's32[1]{0}', space=sflag, size = 0x4, scoped, tag = 'scoped memory for tpu_custom_call.1']
    #allocation23 [shape = 'u8[2097152]{0}', space=vmem, size = 0x200000, scoped, tag = 'input window, operand 21, single buffered']
    #allocation24 [shape = 'u8[4096]{0}', space=vmem, size = 0x1000, scoped, tag = 'input window, operand 22, single buffered']
    #allocation25 [shape = 's32[1]{0}', space=sflag, size = 0x4, scoped, tag = 'scoped memory for tpu_custom_call.1']
    #allocation26 [shape = 'u8[2097152]{0}', space=vmem, size = 0x200000, scoped, tag = 'input window, operand 23, single buffered']
    #allocation27 [shape = 'u8[2048]{0}', space=vmem, size = 0x800, scoped, tag = 'input window, operand 24, single buffered']
    #allocation28 [shape = 's32[1]{0}', space=sflag, size = 0x4, scoped, tag = 'scoped memory for tpu_custom_call.1']
    #allocation29 [shape = 'u8[1048576]{0}', space=vmem, size = 0x100000, scoped, tag = 'input window, operand 25, single buffered']
    #allocation30 [shape = 'u8[2048]{0}', space=vmem, size = 0x800, scoped, tag = 'input window, operand 26, single buffered']
    #allocation31 [shape = 's32[1]{0}', space=sflag, size = 0x4, scoped, tag = 'scoped memory for tpu_custom_call.1']
    #allocation32 [shape = 'u8[524288]{0}', space=vmem, size = 0x80000, scoped, tag = 'input window, operand 27, single buffered']
    #allocation33 [shape = 'u8[1024]{0}', space=vmem, size = 0x400, scoped, tag = 'input window, operand 28, single buffered']
    #allocation34 [shape = 's32[1]{0}', space=sflag, size = 0x4, scoped, tag = 'scoped memory for tpu_custom_call.1']
    %70 = vsyncpa [#allocation5], 0
    %71 = vsyncpa [#allocation7], 0
    %72 = vsyncpa [#allocation10], 0
    %73 = vsyncpa [#allocation13], 0
    %74 = vsyncpa [#allocation16], 0
    %75 = vsyncpa [#allocation19], 0
    %76 = vsyncpa [#allocation22], 0
    %77 = vsyncpa [#allocation25], 0
    %78 = vsyncpa [#allocation28], 0
    %79 = vsyncpa [#allocation31], 0
    %80 = vsyncpa [#allocation34], 0
    // Predicated region
    $region2: #{tpu_custom_call.1} parent=1 // pred_check
      _
    $region3: #{tpu_custom_call.1} parent=1 // pred_check_branch
      %82 = sbr.rel (0) target = $region5
    $region4: #{tpu_custom_call.1} parent=1 // pred_region
      %s84 = ssub.s32 128, 128
      %85 = vsyncadd [#allocation5], %s84
      %s87 = sshll.u32 [#allocation4], 4
      %s88 = int_to_ptr.vmem [resolvable:$true] %s87
      %90 = dma.hbm_to_vmem [thread:$0]  %s1, 128, %s88, [#allocation5]
    $region5: #{tpu_custom_call.1} parent=1 // pred_fallthru
      _
    // Predicated region
    $region6: #{tpu_custom_call.1} parent=1 // pred_check
      _
    $region7: #{tpu_custom_call.1} parent=1 // pred_check_branch
      %92 = sbr.rel (0) target = $region9
    $region8: #{tpu_custom_call.1} parent=1 // pred_region
      %s94 = ssub.s32 512, 512
      %95 = vsyncadd [#allocation7], %s94
      %s97 = sshll.u32 [#allocation6], 4
      %s98 = int_to_ptr.vmem [resolvable:$true] %s97
      %100 = dma.hbm_to_vmem [thread:$0]  %s3, 512, %s98, [#allocation7]
    $region9: #{tpu_custom_call.1} parent=1 // pred_fallthru
      _
    // Predicated region
    $region10: #{tpu_custom_call.1} parent=1 // pred_check
      _
    $region11: #{tpu_custom_call.1} parent=1 // pred_check_branch
      %102 = sbr.rel (0) target = $region13
    $region12: #{tpu_custom_call.1} parent=1 // pred_region
      %s104 = ssub.s32 64, 64
      %105 = vsyncadd [#allocation7], %s104
      %s107 = sshll.u32 [#allocation8], 4
      %s108 = int_to_ptr.vmem [resolvable:$true] %s107
      %110 = dma.hbm_to_vmem [thread:$0]  %s5, 64, %s108, [#allocation7]
    $region13: #{tpu_custom_call.1} parent=1 // pred_fallthru
      _
    // Predicated region
    $region14: #{tpu_custom_call.1} parent=1 // pred_check
      _
    $region15: #{tpu_custom_call.1} parent=1 // pred_check_branch
      %112 = sbr.rel (0) target = $region17
    $region16: #{tpu_custom_call.1} parent=1 // pred_region
      %s114 = ssub.s32 16384, 16384
      %115 = vsyncadd [#allocation10], %s114
      %s116 = sshll.u32 [#allocation9], 4
      %s117 = int_to_ptr.vmem [resolvable:$true] %s116
      %122 = dma.hbm_to_vmem [thread:$0]  %s7, 16384, %s117, [#allocation10], 256, 256, 16
    $region17: #{tpu_custom_call.1} parent=1 // pred_fallthru
      _
    // Predicated region
    $region18: #{tpu_custom_call.1} parent=1 // pred_check
      _
    $region19: #{tpu_custom_call.1} parent=1 // pred_check_branch
      %124 = sbr.rel (0) target = $region21
    $region20: #{tpu_custom_call.1} parent=1 // pred_region
      %s126 = ssub.s32 32, 32
      %127 = vsyncadd [#allocation10], %s126
      %s129 = sshll.u32 [#allocation11], 4
      %s130 = int_to_ptr.vmem [resolvable:$true] %s129
      %132 = dma.hbm_to_vmem [thread:$0]  %s9, 32, %s130, [#allocation10]
    $region21: #{tpu_custom_call.1} parent=1 // pred_fallthru
      _
    // Predicated region
    $region22: #{tpu_custom_call.1} parent=1 // pred_check
      _
    $region23: #{tpu_custom_call.1} parent=1 // pred_check_branch
      %134 = sbr.rel (0) target = $region25
    $region24: #{tpu_custom_call.1} parent=1 // pred_region
      %s136 = ssub.s32 4096, 4096
      %137 = vsyncadd [#allocation13], %s136
      %s138 = sshll.u32 [#allocation12], 4
      %s139 = int_to_ptr.vmem [resolvable:$true] %s138
      %144 = dma.hbm_to_vmem [thread:$0]  %s11, 4096, %s139, [#allocation13], 128, 128, 8
    $region25: #{tpu_custom_call.1} parent=1 // pred_fallthru
      _
    // Predicated region
    $region26: #{tpu_custom_call.1} parent=1 // pred_check
      _
    $region27: #{tpu_custom_call.1} parent=1 // pred_check_branch
      %146 = sbr.rel (0) target = $region29
    $region28: #{tpu_custom_call.1} parent=1 // pred_region
      %s148 = ssub.s32 16, 16
      %149 = vsyncadd [#allocation13], %s148
      %s151 = sshll.u32 [#allocation14], 4
      %s152 = int_to_ptr.vmem [resolvable:$true] %s151
      %154 = dma.hbm_to_vmem [thread:$0]  %s13, 16, %s152, [#allocation13]
    $region29: #{tpu_custom_call.1} parent=1 // pred_fallthru
      _
    // Predicated region
    $region30: #{tpu_custom_call.1} parent=1 // pred_check
      _
    $region31: #{tpu_custom_call.1} parent=1 // pred_check_branch
      %156 = sbr.rel (0) target = $region33
    $region32: #{tpu_custom_call.1} parent=1 // pred_region
      %s158 = ssub.s32 2048, 2048
      %159 = vsyncadd [#allocation16], %s158
      %s160 = sshll.u32 [#allocation15], 4
      %s161 = int_to_ptr.vmem [resolvable:$true] %s160
      %166 = dma.hbm_to_vmem [thread:$0]  %s15, 2048, %s161, [#allocation16], 128, 128, 8
    $region33: #{tpu_custom_call.1} parent=1 // pred_fallthru
      _
    // Predicated region
    $region34: #{tpu_custom_call.1} parent=1 // pred_check
      _
    $region35: #{tpu_custom_call.1} parent=1 // pred_check_branch
      %168 = sbr.rel (0) target = $region37
    $region36: #{tpu_custom_call.1} parent=1 // pred_region
      %s170 = ssub.s32 16, 16
      %171 = vsyncadd [#allocation16], %s170
      %s173 = sshll.u32 [#allocation17], 4
      %s174 = int_to_ptr.vmem [resolvable:$true] %s173
      %176 = dma.hbm_to_vmem [thread:$0]  %s17, 16, %s174, [#allocation16]
    $region37: #{tpu_custom_call.1} parent=1 // pred_fallthru
      _
    // Predicated region
    $region38: #{tpu_custom_call.1} parent=1 // pred_check
      _
    $region39: #{tpu_custom_call.1} parent=1 // pred_check_branch
      %178 = sbr.rel (0) target = $region41
    $region40: #{tpu_custom_call.1} parent=1 // pred_region
      %s180 = ssub.s32 896, 896
      %181 = vsyncadd [#allocation19], %s180
      %s182 = sshll.u32 [#allocation18], 4
      %s183 = int_to_ptr.vmem [resolvable:$true] %s182
      %188 = dma.hbm_to_vmem [thread:$0]  %s19, 896, %s183, [#allocation19], 128, 128, 8
    $region41: #{tpu_custom_call.1} parent=1 // pred_fallthru
      _
    // Predicated region
    $region42: #{tpu_custom_call.1} parent=1 // pred_check
      _
    $region43: #{tpu_custom_call.1} parent=1 // pred_check_branch
      %190 = sbr.rel (0) target = $region45
    $region44: #{tpu_custom_call.1} parent=1 // pred_region
      _
    $region45: #{tpu_custom_call.1} parent=1 // pred_fallthru
      _
    // Predicated region
    $region46: #{tpu_custom_call.1} parent=1 // pred_check
      _
    $region47: #{tpu_custom_call.1} parent=1 // pred_check_branch
      %192 = sbr.rel (0) target = $region49
    $region48: #{tpu_custom_call.1} parent=1 // pred_region
      _
    $region49: #{tpu_custom_call.1} parent=1 // pred_fallthru
      _
    // Predicated region
    $region50: #{tpu_custom_call.1} parent=1 // pred_check
      _
    $region51: #{tpu_custom_call.1} parent=1 // pred_check_branch
      %194 = sbr.rel (0) target = $region53
    $region52: #{tpu_custom_call.1} parent=1 // pred_region
      _
    $region53: #{tpu_custom_call.1} parent=1 // pred_fallthru
      _
    // Predicated region
    $region54: #{tpu_custom_call.1} parent=1 // pred_check
      _
    $region55: #{tpu_custom_call.1} parent=1 // pred_check_branch
      %196 = sbr.rel (0) target = $region57
    $region56: #{tpu_custom_call.1} parent=1 // pred_region
      %s198 = ssub.s32 1024, 1024
      %199 = vsyncadd [#allocation19], %s198
      %s200 = sshll.u32 [#allocation20], 4
      %s201 = int_to_ptr.vmem [resolvable:$true] %s200
      %206 = dma.hbm_to_vmem [thread:$0]  %s27, 1024, %s201, [#allocation19], 128, 128, 8
    $region57: #{tpu_custom_call.1} parent=1 // pred_fallthru
      _
    // Predicated region
    $region58: #{tpu_custom_call.1} parent=1 // pred_check
      _
    $region59: #{tpu_custom_call.1} parent=1 // pred_check_branch
      %208 = sbr.rel (0) target = $region61
    $region60: #{tpu_custom_call.1} parent=1 // pred_region
      _
    $region61: #{tpu_custom_call.1} parent=1 // pred_fallthru
      _
    // Predicated region
    $region62: #{tpu_custom_call.1} parent=1 // pred_check
      _
    $region63: #{tpu_custom_call.1} parent=1 // pred_check_branch
      %210 = sbr.rel (0) target = $region65
    $region64: #{tpu_custom_call.1} parent=1 // pred_region
      _
    $region65: #{tpu_custom_call.1} parent=1 // pred_fallthru
      _
    // Predicated region
    $region66: #{tpu_custom_call.1} parent=1 // pred_check
      _
    $region67: #{tpu_custom_call.1} parent=1 // pred_check_branch
      %212 = sbr.rel (0) target = $region69
    $region68: #{tpu_custom_call.1} parent=1 // pred_region
      _
    $region69: #{tpu_custom_call.1} parent=1 // pred_fallthru
      _
    // Predicated region
    $region70: #{tpu_custom_call.1} parent=1 // pred_check
      _
    $region71: #{tpu_custom_call.1} parent=1 // pred_check_branch
      %214 = sbr.rel (0) target = $region73
    $region72: #{tpu_custom_call.1} parent=1 // pred_region
      %s216 = ssub.s32 1152, 1152
      %217 = vsyncadd [#allocation22], %s216
      %s218 = sshll.u32 [#allocation21], 4
      %s219 = int_to_ptr.vmem [resolvable:$true] %s218
      %224 = dma.hbm_to_vmem [thread:$0]  %s35, 1152, %s219, [#allocation22], 128, 128, 8
    $region73: #{tpu_custom_call.1} parent=1 // pred_fallthru
      _
    // Predicated region
    $region74: #{tpu_custom_call.1} parent=1 // pred_check
      _
    $region75: #{tpu_custom_call.1} parent=1 // pred_check_branch
      %226 = sbr.rel (0) target = $region77
    $region76: #{tpu_custom_call.1} parent=1 // pred_region
      _
    $region77: #{tpu_custom_call.1} parent=1 // pred_fallthru
      _
    // Predicated region
    $region78: #{tpu_custom_call.1} parent=1 // pred_check
      _
    $region79: #{tpu_custom_call.1} parent=1 // pred_check_branch
      %228 = sbr.rel (0) target = $region81
    $region80: #{tpu_custom_call.1} parent=1 // pred_region
      _
    $region81: #{tpu_custom_call.1} parent=1 // pred_fallthru
      _
    // Predicated region
    $region82: #{tpu_custom_call.1} parent=1 // pred_check
      _
    $region83: #{tpu_custom_call.1} parent=1 // pred_check_branch
      %230 = sbr.rel (0) target = $region85
    $region84: #{tpu_custom_call.1} parent=1 // pred_region
      _
    $region85: #{tpu_custom_call.1} parent=1 // pred_fallthru
      _
    // Predicated region
    $region86: #{tpu_custom_call.1} parent=1 // pred_check
      _
    $region87: #{tpu_custom_call.1} parent=1 // pred_check_branch
      %232 = sbr.rel (0) target = $region89
    $region88: #{tpu_custom_call.1} parent=1 // pred_region
      %s234 = ssub.s32 65536, 65536
      %235 = vsyncadd [#allocation22], %s234
      %s236 = sshll.u32 [#allocation23], 4
      %s237 = int_to_ptr.vmem [resolvable:$true] %s236
      %242 = dma.hbm_to_vmem [thread:$0]  %s43, 65536, %s237, [#allocation22], 1024, 1024, 64
    $region89: #{tpu_custom_call.1} parent=1 // pred_fallthru
      _
    // Predicated region
    $region90: #{tpu_custom_call.1} parent=1 // pred_check
      _
    $region91: #{tpu_custom_call.1} parent=1 // pred_check_branch
      %244 = sbr.rel (0) target = $region93
    $region92: #{tpu_custom_call.1} parent=1 // pred_region
      %s246 = ssub.s32 128, 128
      %247 = vsyncadd [#allocation25], %s246
      %s249 = sshll.u32 [#allocation24], 4
      %s250 = int_to_ptr.vmem [resolvable:$true] %s249
      %252 = dma.hbm_to_vmem [thread:$0]  %s45, 128, %s250, [#allocation25]
    $region93: #{tpu_custom_call.1} parent=1 // pred_fallthru
      _
    // Predicated region
    $region94: #{tpu_custom_call.1} parent=1 // pred_check
      _
    $region95: #{tpu_custom_call.1} parent=1 // pred_check_branch
      %254 = sbr.rel (0) target = $region97
    $region96: #{tpu_custom_call.1} parent=1 // pred_region
      %s256 = ssub.s32 65536, 65536
      %257 = vsyncadd [#allocation25], %s256
      %s258 = sshll.u32 [#allocation26], 4
      %s259 = int_to_ptr.vmem [resolvable:$true] %s258
      %264 = dma.hbm_to_vmem [thread:$0]  %s47, 65536, %s259, [#allocation25], 512, 512, 32
    $region97: #{tpu_custom_call.1} parent=1 // pred_fallthru
      _
    // Predicated region
    $region98: #{tpu_custom_call.1} parent=1 // pred_check
      _
    $region99: #{tpu_custom_call.1} parent=1 // pred_check_branch
      %266 = sbr.rel (0) target = $region101
    $region100: #{tpu_custom_call.1} parent=1 // pred_region
      %s268 = ssub.s32 64, 64
      %269 = vsyncadd [#allocation28], %s268
      %s271 = sshll.u32 [#allocation27], 4
      %s272 = int_to_ptr.vmem [resolvable:$true] %s271
      %274 = dma.hbm_to_vmem [thread:$0]  %s49, 64, %s272, [#allocation28]
    $region101: #{tpu_custom_call.1} parent=1 // pred_fallthru
      _
    // Predicated region
    $region102: #{tpu_custom_call.1} parent=1 // pred_check
      _
    $region103: #{tpu_custom_call.1} parent=1 // pred_check_branch
      %276 = sbr.rel (0) target = $region105
    $region104: #{tpu_custom_call.1} parent=1 // pred_region
      %s278 = ssub.s32 32768, 32768
      %279 = vsyncadd [#allocation28], %s278
      %s280 = sshll.u32 [#allocation29], 4
      %s281 = int_to_ptr.vmem [resolvable:$true] %s280
      %286 = dma.hbm_to_vmem [thread:$0]  %s51, 32768, %s281, [#allocation28], 512, 512, 32
    $region105: #{tpu_custom_call.1} parent=1 // pred_fallthru
      _
    // Predicated region
    $region106: #{tpu_custom_call.1} parent=1 // pred_check
      _
    $region107: #{tpu_custom_call.1} parent=1 // pred_check_branch
      %288 = sbr.rel (0) target = $region109
    $region108: #{tpu_custom_call.1} parent=1 // pred_region
      %s290 = ssub.s32 64, 64
      %291 = vsyncadd [#allocation31], %s290
      %s293 = sshll.u32 [#allocation30], 4
      %s294 = int_to_ptr.vmem [resolvable:$true] %s293
      %296 = dma.hbm_to_vmem [thread:$0]  %s53, 64, %s294, [#allocation31]
    $region109: #{tpu_custom_call.1} parent=1 // pred_fallthru
      _
    // Predicated region
    $region110: #{tpu_custom_call.1} parent=1 // pred_check
      _
    $region111: #{tpu_custom_call.1} parent=1 // pred_check_branch
      %298 = sbr.rel (0) target = $region113
    $region112: #{tpu_custom_call.1} parent=1 // pred_region
      %s300 = ssub.s32 16384, 16384
      %301 = vsyncadd [#allocation31], %s300
      %s302 = sshll.u32 [#allocation32], 4
      %s303 = int_to_ptr.vmem [resolvable:$true] %s302
      %308 = dma.hbm_to_vmem [thread:$0]  %s55, 16384, %s303, [#allocation31], 256, 256, 16
    $region113: #{tpu_custom_call.1} parent=1 // pred_fallthru
      _
    // Predicated region
    $region114: #{tpu_custom_call.1} parent=1 // pred_check
      _
    $region115: #{tpu_custom_call.1} parent=1 // pred_check_branch
      %310 = sbr.rel (0) target = $region117
    $region116: #{tpu_custom_call.1} parent=1 // pred_region
      %s312 = ssub.s32 32, 32
      %313 = vsyncadd [#allocation34], %s312
      %s315 = sshll.u32 [#allocation33], 4
      %s316 = int_to_ptr.vmem [resolvable:$true] %s315
      %318 = dma.hbm_to_vmem [thread:$0]  %s57, 32, %s316, [#allocation34]
    $region117: #{tpu_custom_call.1} parent=1 // pred_fallthru
      _
    // Predicated region
    $region118: #{tpu_custom_call.1} parent=1 // pred_check
      _
    $region119: #{tpu_custom_call.1} parent=1 // pred_check_branch
      %320 = sbr.rel (0) target = $region121
    $region120: #{tpu_custom_call.1} parent=1 // pred_region
      _
    $region121: #{tpu_custom_call.1} parent=1 // pred_fallthru
      _
    // Predicated region
    $region122: #{tpu_custom_call.1} parent=1 // pred_check
      _
    $region123: #{tpu_custom_call.1} parent=1 // pred_check_branch
      %322 = sbr.rel (0) target = $region125
    $region124: #{tpu_custom_call.1} parent=1 // pred_region
      _
    $region125: #{tpu_custom_call.1} parent=1 // pred_fallthru
      _
    // Predicated region
    $region126: #{tpu_custom_call.1} parent=1 // pred_check
      _
    $region127: #{tpu_custom_call.1} parent=1 // pred_check_branch
      %324 = sbr.rel (0) target = $region129
    $region128: #{tpu_custom_call.1} parent=1 // pred_region
      %325 = dma.done [#allocation5], 128
    $region129: #{tpu_custom_call.1} parent=1 // pred_fallthru
      _
    // Predicated region
    $region130: #{tpu_custom_call.1} parent=1 // pred_check
      _
    $region131: #{tpu_custom_call.1} parent=1 // pred_check_branch
      %327 = sbr.rel (0) target = $region133
    $region132: #{tpu_custom_call.1} parent=1 // pred_region
      %328 = dma.done [#allocation7], 512
    $region133: #{tpu_custom_call.1} parent=1 // pred_fallthru
      _
    // Predicated region
    $region134: #{tpu_custom_call.1} parent=1 // pred_check
      _
    $region135: #{tpu_custom_call.1} parent=1 // pred_check_branch
      %330 = sbr.rel (0) target = $region137
    $region136: #{tpu_custom_call.1} parent=1 // pred_region
      %331 = dma.done [#allocation7], 64
    $region137: #{tpu_custom_call.1} parent=1 // pred_fallthru
      _
    // Predicated region
    $region138: #{tpu_custom_call.1} parent=1 // pred_check
      _
    $region139: #{tpu_custom_call.1} parent=1 // pred_check_branch
      %333 = sbr.rel (0) target = $region141
    $region140: #{tpu_custom_call.1} parent=1 // pred_region
      %334 = dma.done [#allocation10], 16384
    $region141: #{tpu_custom_call.1} parent=1 // pred_fallthru
      _
    // Predicated region
    $region142: #{tpu_custom_call.1} parent=1 // pred_check
      _
    $region143: #{tpu_custom_call.1} parent=1 // pred_check_branch
      %336 = sbr.rel (0) target = $region145
    $region144: #{tpu_custom_call.1} parent=1 // pred_region
      %337 = dma.done [#allocation10], 32
    $region145: #{tpu_custom_call.1} parent=1 // pred_fallthru
      _
    // Predicated region
    $region146: #{tpu_custom_call.1} parent=1 // pred_check
      _
    $region147: #{tpu_custom_call.1} parent=1 // pred_check_branch
      %339 = sbr.rel (0) target = $region149
    $region148: #{tpu_custom_call.1} parent=1 // pred_region
      %340 = dma.done [#allocation13], 4096
    $region149: #{tpu_custom_call.1} parent=1 // pred_fallthru
      _
    // Predicated region
    $region150: #{tpu_custom_call.1} parent=1 // pred_check
      _
    $region151: #{tpu_custom_call.1} parent=1 // pred_check_branch
      %342 = sbr.rel (0) target = $region153
    $region152: #{tpu_custom_call.1} parent=1 // pred_region
      %343 = dma.done [#allocation13], 16
    $region153: #{tpu_custom_call.1} parent=1 // pred_fallthru
      _
    // Predicated region
    $region154: #{tpu_custom_call.1} parent=1 // pred_check
      _
    $region155: #{tpu_custom_call.1} parent=1 // pred_check_branch
      %345 = sbr.rel (0) target = $region157
    $region156: #{tpu_custom_call.1} parent=1 // pred_region
      %346 = dma.done [#allocation16], 2048
    $region157: #{tpu_custom_call.1} parent=1 // pred_fallthru
      _
    // Predicated region
    $region158: #{tpu_custom_call.1} parent=1 // pred_check
      _
    $region159: #{tpu_custom_call.1} parent=1 // pred_check_branch
      %348 = sbr.rel (0) target = $region161
    $region160: #{tpu_custom_call.1} parent=1 // pred_region
      %349 = dma.done [#allocation16], 16
    $region161: #{tpu_custom_call.1} parent=1 // pred_fallthru
      _
    // Predicated region
    $region162: #{tpu_custom_call.1} parent=1 // pred_check
      _
    $region163: #{tpu_custom_call.1} parent=1 // pred_check_branch
      %351 = sbr.rel (0) target = $region165
    $region164: #{tpu_custom_call.1} parent=1 // pred_region
      %352 = dma.done [#allocation19], 896
    $region165: #{tpu_custom_call.1} parent=1 // pred_fallthru
      _
    // Predicated region
    $region166: #{tpu_custom_call.1} parent=1 // pred_check
      _
    $region167: #{tpu_custom_call.1} parent=1 // pred_check_branch
      %354 = sbr.rel (0) target = $region169
    $region168: #{tpu_custom_call.1} parent=1 // pred_region
      %355 = dma.done [#allocation19], 1024
    $region169: #{tpu_custom_call.1} parent=1 // pred_fallthru
      _
    // Predicated region
    $region170: #{tpu_custom_call.1} parent=1 // pred_check
      _
    $region171: #{tpu_custom_call.1} parent=1 // pred_check_branch
      %357 = sbr.rel (0) target = $region173
    $region172: #{tpu_custom_call.1} parent=1 // pred_region
      %358 = dma.done [#allocation22], 1152
    $region173: #{tpu_custom_call.1} parent=1 // pred_fallthru
      _
    // Predicated region
    $region174: #{tpu_custom_call.1} parent=1 // pred_check
      _
    $region175: #{tpu_custom_call.1} parent=1 // pred_check_branch
      %360 = sbr.rel (0) target = $region177
    $region176: #{tpu_custom_call.1} parent=1 // pred_region
      %361 = dma.done [#allocation22], 65536
    $region177: #{tpu_custom_call.1} parent=1 // pred_fallthru
      _
    // Predicated region
    $region178: #{tpu_custom_call.1} parent=1 // pred_check
      _
    $region179: #{tpu_custom_call.1} parent=1 // pred_check_branch
      %363 = sbr.rel (0) target = $region181
    $region180: #{tpu_custom_call.1} parent=1 // pred_region
      %364 = dma.done [#allocation25], 128
    $region181: #{tpu_custom_call.1} parent=1 // pred_fallthru
      _
    // Predicated region
    $region182: #{tpu_custom_call.1} parent=1 // pred_check
      _
    $region183: #{tpu_custom_call.1} parent=1 // pred_check_branch
      %366 = sbr.rel (0) target = $region185
    $region184: #{tpu_custom_call.1} parent=1 // pred_region
      %367 = dma.done [#allocation25], 65536
    $region185: #{tpu_custom_call.1} parent=1 // pred_fallthru
      _
    // Predicated region
    $region186: #{tpu_custom_call.1} parent=1 // pred_check
      _
    $region187: #{tpu_custom_call.1} parent=1 // pred_check_branch
      %369 = sbr.rel (0) target = $region189
    $region188: #{tpu_custom_call.1} parent=1 // pred_region
      %370 = dma.done [#allocation28], 64
    $region189: #{tpu_custom_call.1} parent=1 // pred_fallthru
      _
    // Predicated region
    $region190: #{tpu_custom_call.1} parent=1 // pred_check
      _
    $region191: #{tpu_custom_call.1} parent=1 // pred_check_branch
      %372 = sbr.rel (0) target = $region193
    $region192: #{tpu_custom_call.1} parent=1 // pred_region
      %373 = dma.done [#allocation28], 32768
    $region193: #{tpu_custom_call.1} parent=1 // pred_fallthru
      _
    // Predicated region
    $region194: #{tpu_custom_call.1} parent=1 // pred_check
      _
    $region195: #{tpu_custom_call.1} parent=1 // pred_check_branch
      %375 = sbr.rel (0) target = $region197
    $region196: #{tpu_custom_call.1} parent=1 // pred_region
      %376 = dma.done [#allocation31], 64
    $region197: #{tpu_custom_call.1} parent=1 // pred_fallthru
      _
    // Predicated region
    $region198: #{tpu_custom_call.1} parent=1 // pred_check
      _
    $region199: #{tpu_custom_call.1} parent=1 // pred_check_branch
      %378 = sbr.rel (0) target = $region201
    $region200: #{tpu_custom_call.1} parent=1 // pred_region
      %379 = dma.done [#allocation31], 16384
    $region201: #{tpu_custom_call.1} parent=1 // pred_fallthru
      _
    // Predicated region
    $region202: #{tpu_custom_call.1} parent=1 // pred_check
      _
    $region203: #{tpu_custom_call.1} parent=1 // pred_check_branch
      %381 = sbr.rel (0) target = $region205
    $region204: #{tpu_custom_call.1} parent=1 // pred_region
      %382 = dma.done [#allocation34], 32
    $region205: #{tpu_custom_call.1} parent=1 // pred_fallthru
      _
    %v383 = vld [vmem:[#allocation4] sm:$0xff]
    %v384 = vld [vmem:[#allocation6] sm:$0xff]
    %v385 = vld [vmem:[#allocation6 + $0x8] sm:$0xff]
    %v386 = vld [vmem:[#allocation6 + $0x10] sm:$0xff]
    %v387 = vld [vmem:[#allocation6 + $0x18] sm:$0xff]
    %v388 = vld [vmem:[#allocation8] sm:$0xf]
    %v390 = vlaneseq
    %v391 = vshrl.u32 %v390, 7
    %v392 = vsub.s32 0, %v391
    %v393 = vrot.slane %v388, %v392
    %v394 = vlaneseq
    %v395 = vshrl.u32 %v394, 7
    %v396 = vsub.s32 1, %v395
    %v397 = vrot.slane %v388, %v396
    %v398 = vlaneseq
    %v399 = vshrl.u32 %v398, 7
    %v400 = vsub.s32 2, %v399
    %v401 = vrot.slane %v388, %v400
    %v402 = vlaneseq
    %v403 = vshrl.u32 %v402, 7
    %v404 = vsub.s32 3, %v403
    %v405 = vrot.slane %v388, %v404
    %vm410 = vcmask 64512
    %v412 = vsel %vm410, %v383, 0
    %414 = vmatprep.subr.mxu0 %v385
    %415 = vmatpush1.msra.mxu0 %v384
    %416 = vmatprep.subr.mxu0 0.0
    %417 = vmatpush1.msra.mxu0 0.0
    %418 = vmatprep.subr.mxu0 0.0
    %419 = vmatpush1.msra.mxu0 0.0
    %420 = vmatprep.subr.mxu0 0.0
    %421 = vmatpush1.msra.mxu0 0.0
    %422 = vmatprep.subr.mxu0 0.0
    %423 = vmatpush1.msra.mxu0 0.0
    %424 = vmatprep.subr.mxu0 0.0
    %425 = vmatpush1.msra.mxu0 0.0
    %426 = vmatprep.subr.mxu0 0.0
    %427 = vmatpush1.msra.mxu0 0.0
    %428 = vmatprep.subr.mxu0 0.0
    %429 = vmatpush1.msra.mxu0 0.0
    %430 = vmatprep.subr.mxu0 0.0
    %431 = vmatpush1.msra.mxu0 0.0
    %432 = vmatprep.subr.mxu0 0.0
    %433 = vmatpush1.msra.mxu0 0.0
    %434 = vmatprep.subr.mxu0 0.0
    %435 = vmatpush1.msra.mxu0 0.0
    %436 = vmatprep.subr.mxu0 0.0
    %437 = vmatpush1.msra.mxu0 0.0
    %438 = vmatprep.subr.mxu0 0.0
    %439 = vmatpush1.msra.mxu0 0.0
    %440 = vmatprep.subr.mxu0 0.0
    %441 = vmatpush1.msra.mxu0 0.0
    %442 = vmatprep.subr.mxu0 0.0
    %443 = vmatpush1.msra.mxu0 0.0
    %444 = vmatprep.subr.mxu0 0.0
    %445 = vmatpush1.msra.mxu0 0.0
    %446 = vmatprep.subr.mxu0 0.0
    %447 = vmatpush1.msra.mxu0 0.0
    %448 = vmatprep.subr.mxu0 0.0
    %449 = vmatpush1.msra.mxu0 0.0
    %450 = vmatprep.subr.mxu0 0.0
    %451 = vmatpush1.msra.mxu0 0.0
    %452 = vmatprep.subr.mxu0 0.0
    %453 = vmatpush1.msra.mxu0 0.0
    %454 = vmatprep.subr.mxu0 0.0
    %455 = vmatpush1.msra.mxu0 0.0
    %456 = vmatprep.subr.mxu0 0.0
    %457 = vmatpush1.msra.mxu0 0.0
    %458 = vmatprep.subr.mxu0 0.0
    %459 = vmatpush1.msra.mxu0 0.0
    %460 = vmatprep.subr.mxu0 0.0
    %461 = vmatpush1.msra.mxu0 0.0
    %462 = vmatprep.subr.mxu0 0.0
    %463 = vmatpush1.msra.mxu0 0.0
    %464 = vmatprep.subr.mxu0 0.0
    %465 = vmatpush1.msra.mxu0 0.0
    %466 = vmatprep.subr.mxu0 0.0
    %467 = vmatpush1.msra.mxu0 0.0
    %468 = vmatprep.subr.mxu0 0.0
    %469 = vmatpush1.msra.mxu0 0.0
    %470 = vmatprep.subr.mxu0 0.0
    %471 = vmatpush1.msra.mxu0 0.0
    %472 = vmatprep.subr.mxu0 0.0
    %473 = vmatpush1.msra.mxu0 0.0
    %474 = vmatprep.subr.mxu0 0.0
    %475 = vmatpush1.msra.mxu0 0.0
    %476 = vmatprep.subr.mxu0 0.0
    %477 = vmatpush1.msra.mxu0 0.0
    %478 = vmatprep.mubr.f32.mxu0 0.0
    %479 = vmatmul.mubr.f32.gmra.mrb[0].mxu0 %v412
    %v480 = vpop.f32.mrb[0].mxu0
    %v481 = vadd.f32 %v393, %v480
    %v482 = vpop.f32.mrb[0].mxu0
    %v483 = vadd.f32 %v397, %v482
    %484 = vdwg.mxu0
    %485 = vmatprep.subr.mxu0 %v387
    %486 = vmatpush1.msra.mxu0 %v386
    %487 = vmatprep.subr.mxu0 0.0
    %488 = vmatpush1.msra.mxu0 0.0
    %489 = vmatprep.subr.mxu0 0.0
    %490 = vmatpush1.msra.mxu0 0.0
    %491 = vmatprep.subr.mxu0 0.0
    %492 = vmatpush1.msra.mxu0 0.0
    %493 = vmatprep.subr.mxu0 0.0
    %494 = vmatpush1.msra.mxu0 0.0
    %495 = vmatprep.subr.mxu0 0.0
    %496 = vmatpush1.msra.mxu0 0.0
    %497 = vmatprep.subr.mxu0 0.0
    %498 = vmatpush1.msra.mxu0 0.0
    %499 = vmatprep.subr.mxu0 0.0
    %500 = vmatpush1.msra.mxu0 0.0
    %501 = vmatprep.subr.mxu0 0.0
    %502 = vmatpush1.msra.mxu0 0.0
    %503 = vmatprep.subr.mxu0 0.0
    %504 = vmatpush1.msra.mxu0 0.0
    %505 = vmatprep.subr.mxu0 0.0
    %506 = vmatpush1.msra.mxu0 0.0
    %507 = vmatprep.subr.mxu0 0.0
    %508 = vmatpush1.msra.mxu0 0.0
    %509 = vmatprep.subr.mxu0 0.0
    %510 = vmatpush1.msra.mxu0 0.0
    %511 = vmatprep.subr.mxu0 0.0
    %512 = vmatpush1.msra.mxu0 0.0
    %513 = vmatprep.subr.mxu0 0.0
    %514 = vmatpush1.msra.mxu0 0.0
    %515 = vmatprep.subr.mxu0 0.0
    %516 = vmatpush1.msra.mxu0 0.0
    %517 = vmatprep.subr.mxu0 0.0
    %518 = vmatpush1.msra.mxu0 0.0
    %519 = vmatprep.subr.mxu0 0.0
    %520 = vmatpush1.msra.mxu0 0.0
    %521 = vmatprep.subr.mxu0 0.0
    %522 = vmatpush1.msra.mxu0 0.0
    %523 = vmatprep.subr.mxu0 0.0
    %524 = vmatpush1.msra.mxu0 0.0
    %525 = vmatprep.subr.mxu0 0.0
    %526 = vmatpush1.msra.mxu0 0.0
    %527 = vmatprep.subr.mxu0 0.0
    %528 = vmatpush1.msra.mxu0 0.0
    %529 = vmatprep.subr.mxu0 0.0
    %530 = vmatpush1.msra.mxu0 0.0
    %531 = vmatprep.subr.mxu0 0.0
    %532 = vmatpush1.msra.mxu0 0.0
    %533 = vmatprep.subr.mxu0 0.0
    %534 = vmatpush1.msra.mxu0 0.0
    %535 = vmatprep.subr.mxu0 0.0
    %536 = vmatpush1.msra.mxu0 0.0
    %537 = vmatprep.subr.mxu0 0.0
    %538 = vmatpush1.msra.mxu0 0.0
    %539 = vmatprep.subr.mxu0 0.0
    %540 = vmatpush1.msra.mxu0 0.0
    %541 = vmatprep.subr.mxu0 0.0
    %542 = vmatpush1.msra.mxu0 0.0
    %543 = vmatprep.subr.mxu0 0.0
    %544 = vmatpush1.msra.mxu0 0.0
    %545 = vmatprep.subr.mxu0 0.0
    %546 = vmatpush1.msra.mxu0 0.0
    %547 = vmatprep.subr.mxu0 0.0
    %548 = vmatpush1.msra.mxu0 0.0
    %549 = vmatprep.mubr.f32.mxu0 0.0
    %550 = vmatmul.mubr.f32.gmra.mrb[0].mxu0 %v412
    %v551 = vpop.f32.mrb[0].mxu0
    %v552 = vadd.f32 %v401, %v551
    %v553 = vpop.f32.mrb[0].mxu0
    %v554 = vadd.f32 %v405, %v553
    %555 = vdwg.mxu0
    %v556 = vmax.f32 %v481, 0.0
    %v557 = vmax.f32 %v483, 0.0
    %v558 = vmax.f32 %v552, 0.0
    %v559 = vmax.f32 %v554, 0.0
    %v560 = vld [vmem:[#allocation9] sm:$0xff]
    %v561 = vld [vmem:[#allocation9 + $0x8] sm:$0xff]
    %v562 = vld [vmem:[#allocation9 + $0x10] sm:$0xff]
    %v563 = vld [vmem:[#allocation9 + $0x18] sm:$0xff]
    %v564 = vld [vmem:[#allocation9 + $0x20] sm:$0xff]
    %v565 = vld [vmem:[#allocation9 + $0x28] sm:$0xff]
    %v566 = vld [vmem:[#allocation9 + $0x30] sm:$0xff]
    %v567 = vld [vmem:[#allocation9 + $0x38] sm:$0xff]
    %v568 = vld [vmem:[#allocation9 + $0x40] sm:$0xff]
    %v569 = vld [vmem:[#allocation9 + $0x48] sm:$0xff]
    %v570 = vld [vmem:[#allocation9 + $0x50] sm:$0xff]
    %v571 = vld [vmem:[#allocation9 + $0x58] sm:$0xff]
    %v572 = vld [vmem:[#allocation9 + $0x60] sm:$0xff]
    %v573 = vld [vmem:[#allocation9 + $0x68] sm:$0xff]
    %v574 = vld [vmem:[#allocation9 + $0x70] sm:$0xff]
    %v575 = vld [vmem:[#allocation9 + $0x78] sm:$0xff]
    %v576 = vld [vmem:[#allocation9 + $0x80] sm:$0xff]
    %v577 = vld [vmem:[#allocation9 + $0x88] sm:$0xff]
    %v578 = vld [vmem:[#allocation9 + $0x90] sm:$0xff]
    %v579 = vld [vmem:[#allocation9 + $0x98] sm:$0xff]
    %v580 = vld [vmem:[#allocation9 + $0xa0] sm:$0xff]
    %v581 = vld [vmem:[#allocation9 + $0xa8] sm:$0xff]
    %v582 = vld [vmem:[#allocation9 + $0xb0] sm:$0xff]
    %v583 = vld [vmem:[#allocation9 + $0xb8] sm:$0xff]
    %v584 = vld [vmem:[#allocation9 + $0xc0] sm:$0xff]
    %v585 = vld [vmem:[#allocation9 + $0xc8] sm:$0xff]
    %v586 = vld [vmem:[#allocation9 + $0xd0] sm:$0xff]
    %v587 = vld [vmem:[#allocation9 + $0xd8] sm:$0xff]
    %v588 = vld [vmem:[#allocation9 + $0xe0] sm:$0xff]
    %v589 = vld [vmem:[#allocation9 + $0xe8] sm:$0xff]
    %v590 = vld [vmem:[#allocation9 + $0xf0] sm:$0xff]
    %v591 = vld [vmem:[#allocation9 + $0xf8] sm:$0xff]
    %v592 = vld [vmem:[#allocation9 + $0x100] sm:$0xff]
    %v593 = vld [vmem:[#allocation9 + $0x108] sm:$0xff]
    %v594 = vld [vmem:[#allocation9 + $0x110] sm:$0xff]
    %v595 = vld [vmem:[#allocation9 + $0x118] sm:$0xff]
    %v596 = vld [vmem:[#allocation9 + $0x120] sm:$0xff]
    %v597 = vld [vmem:[#allocation9 + $0x128] sm:$0xff]
    %v598 = vld [vmem:[#allocation9 + $0x130] sm:$0xff]
    %v599 = vld [vmem:[#allocation9 + $0x138] sm:$0xff]
    %v600 = vld [vmem:[#allocation9 + $0x140] sm:$0xff]
    %v601 = vld [vmem:[#allocation9 + $0x148] sm:$0xff]
    %v602 = vld [vmem:[#allocation9 + $0x150] sm:$0xff]
    %v603 = vld [vmem:[#allocation9 + $0x158] sm:$0xff]
    %v604 = vld [vmem:[#allocation9 + $0x160] sm:$0xff]
    %v605 = vld [vmem:[#allocation9 + $0x168] sm:$0xff]
    %v606 = vld [vmem:[#allocation9 + $0x170] sm:$0xff]
    %v607 = vld [vmem:[#allocation9 + $0x178] sm:$0xff]
    %v608 = vld [vmem:[#allocation9 + $0x180] sm:$0xff]
    %v609 = vld [vmem:[#allocation9 + $0x188] sm:$0xff]
    %v610 = vld [vmem:[#allocation9 + $0x190] sm:$0xff]
    %v611 = vld [vmem:[#allocation9 + $0x198] sm:$0xff]
    %v612 = vld [vmem:[#allocation9 + $0x1a0] sm:$0xff]
    %v613 = vld [vmem:[#allocation9 + $0x1a8] sm:$0xff]
    %v614 = vld [vmem:[#allocation9 + $0x1b0] sm:$0xff]
    %v615 = vld [vmem:[#allocation9 + $0x1b8] sm:$0xff]
    %v616 = vld [vmem:[#allocation9 + $0x1c0] sm:$0xff]
    %v617 = vld [vmem:[#allocation9 + $0x1c8] sm:$0xff]
    %v618 = vld [vmem:[#allocation9 + $0x1d0] sm:$0xff]
    %v619 = vld [vmem:[#allocation9 + $0x1d8] sm:$0xff]
    %v620 = vld [vmem:[#allocation9 + $0x1e0] sm:$0xff]
    %v621 = vld [vmem:[#allocation9 + $0x1e8] sm:$0xff]
    %v622 = vld [vmem:[#allocation9 + $0x1f0] sm:$0xff]
    %v623 = vld [vmem:[#allocation9 + $0x1f8] sm:$0xff]
    %v624 = vld [vmem:[#allocation9 + $0x200] sm:$0xff]
    %v625 = vld [vmem:[#allocation9 + $0x208] sm:$0xff]
    %v626 = vld [vmem:[#allocation9 + $0x210] sm:$0xff]
    %v627 = vld [vmem:[#allocation9 + $0x218] sm:$0xff]
    %v628 = vld [vmem:[#allocation9 + $0x220] sm:$0xff]
    %v629 = vld [vmem:[#allocation9 + $0x228] sm:$0xff]
    %v630 = vld [vmem:[#allocation9 + $0x230] sm:$0xff]
    %v631 = vld [vmem:[#allocation9 + $0x238] sm:$0xff]
    %v632 = vld [vmem:[#allocation9 + $0x240] sm:$0xff]
    %v633 = vld [vmem:[#allocation9 + $0x248] sm:$0xff]
    %v634 = vld [vmem:[#allocation9 + $0x250] sm:$0xff]
    %v635 = vld [vmem:[#allocation9 + $0x258] sm:$0xff]
    %v636 = vld [vmem:[#allocation9 + $0x260] sm:$0xff]
    %v637 = vld [vmem:[#allocation9 + $0x268] sm:$0xff]
    %v638 = vld [vmem:[#allocation9 + $0x270] sm:$0xff]
    %v639 = vld [vmem:[#allocation9 + $0x278] sm:$0xff]
    %v640 = vld [vmem:[#allocation9 + $0x280] sm:$0xff]
    %v641 = vld [vmem:[#allocation9 + $0x288] sm:$0xff]
    %v642 = vld [vmem:[#allocation9 + $0x290] sm:$0xff]
    %v643 = vld [vmem:[#allocation9 + $0x298] sm:$0xff]
    %v644 = vld [vmem:[#allocation9 + $0x2a0] sm:$0xff]
    %v645 = vld [vmem:[#allocation9 + $0x2a8] sm:$0xff]
    %v646 = vld [vmem:[#allocation9 + $0x2b0] sm:$0xff]
    %v647 = vld [vmem:[#allocation9 + $0x2b8] sm:$0xff]
    %v648 = vld [vmem:[#allocation9 + $0x2c0] sm:$0xff]
    %v649 = vld [vmem:[#allocation9 + $0x2c8] sm:$0xff]
    %v650 = vld [vmem:[#allocation9 + $0x2d0] sm:$0xff]
    %v651 = vld [vmem:[#allocation9 + $0x2d8] sm:$0xff]
    %v652 = vld [vmem:[#allocation9 + $0x2e0] sm:$0xff]
    %v653 = vld [vmem:[#allocation9 + $0x2e8] sm:$0xff]
    %v654 = vld [vmem:[#allocation9 + $0x2f0] sm:$0xff]
    %v655 = vld [vmem:[#allocation9 + $0x2f8] sm:$0xff]
    %v656 = vld [vmem:[#allocation9 + $0x300] sm:$0xff]
    %v657 = vld [vmem:[#allocation9 + $0x308] sm:$0xff]
    %v658 = vld [vmem:[#allocation9 + $0x310] sm:$0xff]
    %v659 = vld [vmem:[#allocation9 + $0x318] sm:$0xff]
    %v660 = vld [vmem:[#allocation9 + $0x320] sm:$0xff]
    %v661 = vld [vmem:[#allocation9 + $0x328] sm:$0xff]
    %v662 = vld [vmem:[#allocation9 + $0x330] sm:$0xff]
    %v663 = vld [vmem:[#allocation9 + $0x338] sm:$0xff]
    %v664 = vld [vmem:[#allocation9 + $0x340] sm:$0xff]
    %v665 = vld [vmem:[#allocation9 + $0x348] sm:$0xff]
    %v666 = vld [vmem:[#allocation9 + $0x350] sm:$0xff]
    %v667 = vld [vmem:[#allocation9 + $0x358] sm:$0xff]
    %v668 = vld [vmem:[#allocation9 + $0x360] sm:$0xff]
    %v669 = vld [vmem:[#allocation9 + $0x368] sm:$0xff]
    %v670 = vld [vmem:[#allocation9 + $0x370] sm:$0xff]
    %v671 = vld [vmem:[#allocation9 + $0x378] sm:$0xff]
    %v672 = vld [vmem:[#allocation9 + $0x380] sm:$0xff]
    %v673 = vld [vmem:[#allocation9 + $0x388] sm:$0xff]
    %v674 = vld [vmem:[#allocation9 + $0x390] sm:$0xff]
    %v675 = vld [vmem:[#allocation9 + $0x398] sm:$0xff]
    %v676 = vld [vmem:[#allocation9 + $0x3a0] sm:$0xff]
    %v677 = vld [vmem:[#allocation9 + $0x3a8] sm:$0xff]
    %v678 = vld [vmem:[#allocation9 + $0x3b0] sm:$0xff]
    %v679 = vld [vmem:[#allocation9 + $0x3b8] sm:$0xff]
    %v680 = vld [vmem:[#allocation9 + $0x3c0] sm:$0xff]
    %v681 = vld [vmem:[#allocation9 + $0x3c8] sm:$0xff]
    %v682 = vld [vmem:[#allocation9 + $0x3d0] sm:$0xff]
    %v683 = vld [vmem:[#allocation9 + $0x3d8] sm:$0xff]
    %v684 = vld [vmem:[#allocation9 + $0x3e0] sm:$0xff]
    %v685 = vld [vmem:[#allocation9 + $0x3e8] sm:$0xff]
    %v686 = vld [vmem:[#allocation9 + $0x3f0] sm:$0xff]
    %v687 = vld [vmem:[#allocation9 + $0x3f8] sm:$0xff]
    %v688 = vld [vmem:[#allocation11] sm:$0x3]
    %v690 = vlaneseq
    %v691 = vshrl.u32 %v690, 7
    %v692 = vsub.s32 0, %v691
    %v693 = vrot.slane %v688, %v692
    %v694 = vlaneseq
    %v695 = vshrl.u32 %v694, 7
    %v696 = vsub.s32 1, %v695
    %v697 = vrot.slane %v688, %v696
    %700 = vmatprep.subr.mxu0 %v561
    %701 = vmatpush1.msra.mxu0 %v560
    %702 = vmatprep.subr.mxu0 %v563
    %703 = vmatpush1.msra.mxu0 %v562
    %704 = vmatprep.subr.mxu0 %v565
    %705 = vmatpush1.msra.mxu0 %v564
    %706 = vmatprep.subr.mxu0 %v567
    %707 = vmatpush1.msra.mxu0 %v566
    %708 = vmatprep.subr.mxu0 %v569
    %709 = vmatpush1.msra.mxu0 %v568
    %710 = vmatprep.subr.mxu0 %v571
    %711 = vmatpush1.msra.mxu0 %v570
    %712 = vmatprep.subr.mxu0 %v573
    %713 = vmatpush1.msra.mxu0 %v572
    %714 = vmatprep.subr.mxu0 %v575
    %715 = vmatpush1.msra.mxu0 %v574
    %716 = vmatprep.subr.mxu0 %v577
    %717 = vmatpush1.msra.mxu0 %v576
    %718 = vmatprep.subr.mxu0 %v579
    %719 = vmatpush1.msra.mxu0 %v578
    %720 = vmatprep.subr.mxu0 %v581
    %721 = vmatpush1.msra.mxu0 %v580
    %722 = vmatprep.subr.mxu0 %v583
    %723 = vmatpush1.msra.mxu0 %v582
    %724 = vmatprep.subr.mxu0 %v585
    %725 = vmatpush1.msra.mxu0 %v584
    %726 = vmatprep.subr.mxu0 %v587
    %727 = vmatpush1.msra.mxu0 %v586
    %728 = vmatprep.subr.mxu0 %v589
    %729 = vmatpush1.msra.mxu0 %v588
    %730 = vmatprep.subr.mxu0 %v591
    %731 = vmatpush1.msra.mxu0 %v590
    %732 = vmatprep.subr.mxu0 %v593
    %733 = vmatpush1.msra.mxu0 %v592
    %734 = vmatprep.subr.mxu0 %v595
    %735 = vmatpush1.msra.mxu0 %v594
    %736 = vmatprep.subr.mxu0 %v597
    %737 = vmatpush1.msra.mxu0 %v596
    %738 = vmatprep.subr.mxu0 %v599
    %739 = vmatpush1.msra.mxu0 %v598
    %740 = vmatprep.subr.mxu0 %v601
    %741 = vmatpush1.msra.mxu0 %v600
    %742 = vmatprep.subr.mxu0 %v603
    %743 = vmatpush1.msra.mxu0 %v602
    %744 = vmatprep.subr.mxu0 %v605
    %745 = vmatpush1.msra.mxu0 %v604
    %746 = vmatprep.subr.mxu0 %v607
    %747 = vmatpush1.msra.mxu0 %v606
    %748 = vmatprep.subr.mxu0 %v609
    %749 = vmatpush1.msra.mxu0 %v608
    %750 = vmatprep.subr.mxu0 %v611
    %751 = vmatpush1.msra.mxu0 %v610
    %752 = vmatprep.subr.mxu0 %v613
    %753 = vmatpush1.msra.mxu0 %v612
    %754 = vmatprep.subr.mxu0 %v615
    %755 = vmatpush1.msra.mxu0 %v614
    %756 = vmatprep.subr.mxu0 %v617
    %757 = vmatpush1.msra.mxu0 %v616
    %758 = vmatprep.subr.mxu0 %v619
    %759 = vmatpush1.msra.mxu0 %v618
    %760 = vmatprep.subr.mxu0 %v621
    %761 = vmatpush1.msra.mxu0 %v620
    %762 = vmatprep.subr.mxu0 %v623
    %763 = vmatpush1.msra.mxu0 %v622
    %764 = vmatprep.mubr.f32.mxu0 %v557
    %765 = vmatmul.mubr.f32.gmra.mrb[0].mxu0 %v556
    %v766 = vpop.f32.mrb[0].mxu0
    %v767 = vadd.f32 %v693, %v766
    %v768 = vpop.f32.mrb[0].mxu0
    %v769 = vadd.f32 %v697, %v768
    %770 = vdwg.mxu0
    %771 = vmatprep.subr.mxu0 %v625
    %772 = vmatpush1.msra.mxu0 %v624
    %773 = vmatprep.subr.mxu0 %v627
    %774 = vmatpush1.msra.mxu0 %v626
    %775 = vmatprep.subr.mxu0 %v629
    %776 = vmatpush1.msra.mxu0 %v628
    %777 = vmatprep.subr.mxu0 %v631
    %778 = vmatpush1.msra.mxu0 %v630
    %779 = vmatprep.subr.mxu0 %v633
    %780 = vmatpush1.msra.mxu0 %v632
    %781 = vmatprep.subr.mxu0 %v635
    %782 = vmatpush1.msra.mxu0 %v634
    %783 = vmatprep.subr.mxu0 %v637
    %784 = vmatpush1.msra.mxu0 %v636
    %785 = vmatprep.subr.mxu0 %v639
    %786 = vmatpush1.msra.mxu0 %v638
    %787 = vmatprep.subr.mxu0 %v641
    %788 = vmatpush1.msra.mxu0 %v640
    %789 = vmatprep.subr.mxu0 %v643
    %790 = vmatpush1.msra.mxu0 %v642
    %791 = vmatprep.subr.mxu0 %v645
    %792 = vmatpush1.msra.mxu0 %v644
    %793 = vmatprep.subr.mxu0 %v647
    %794 = vmatpush1.msra.mxu0 %v646
    %795 = vmatprep.subr.mxu0 %v649
    %796 = vmatpush1.msra.mxu0 %v648
    %797 = vmatprep.subr.mxu0 %v651
    %798 = vmatpush1.msra.mxu0 %v650
    %799 = vmatprep.subr.mxu0 %v653
    %800 = vmatpush1.msra.mxu0 %v652
    %801 = vmatprep.subr.mxu0 %v655
    %802 = vmatpush1.msra.mxu0 %v654
    %803 = vmatprep.subr.mxu0 %v657
    %804 = vmatpush1.msra.mxu0 %v656
    %805 = vmatprep.subr.mxu0 %v659
    %806 = vmatpush1.msra.mxu0 %v658
    %807 = vmatprep.subr.mxu0 %v661
    %808 = vmatpush1.msra.mxu0 %v660
    %809 = vmatprep.subr.mxu0 %v663
    %810 = vmatpush1.msra.mxu0 %v662
    %811 = vmatprep.subr.mxu0 %v665
    %812 = vmatpush1.msra.mxu0 %v664
    %813 = vmatprep.subr.mxu0 %v667
    %814 = vmatpush1.msra.mxu0 %v666
    %815 = vmatprep.subr.mxu0 %v669
    %816 = vmatpush1.msra.mxu0 %v668
    %817 = vmatprep.subr.mxu0 %v671
    %818 = vmatpush1.msra.mxu0 %v670
    %819 = vmatprep.subr.mxu0 %v673
    %820 = vmatpush1.msra.mxu0 %v672
    %821 = vmatprep.subr.mxu0 %v675
    %822 = vmatpush1.msra.mxu0 %v674
    %823 = vmatprep.subr.mxu0 %v677
    %824 = vmatpush1.msra.mxu0 %v676
    %825 = vmatprep.subr.mxu0 %v679
    %826 = vmatpush1.msra.mxu0 %v678
    %827 = vmatprep.subr.mxu0 %v681
    %828 = vmatpush1.msra.mxu0 %v680
    %829 = vmatprep.subr.mxu0 %v683
    %830 = vmatpush1.msra.mxu0 %v682
    %831 = vmatprep.subr.mxu0 %v685
    %832 = vmatpush1.msra.mxu0 %v684
    %833 = vmatprep.subr.mxu0 %v687
    %834 = vmatpush1.msra.mxu0 %v686
    %835 = vmatprep.mubr.f32.mxu0 %v559
    %836 = vmatmul.mubr.f32.gmra.mrb[0].mxu0 %v558
    %v837 = vpop.f32.mrb[0].mxu0
    %v838 = vadd.f32 %v767, %v837
    %v839 = vpop.f32.mrb[0].mxu0
    %v840 = vadd.f32 %v769, %v839
    %841 = vdwg.mxu0
    %v842 = vmax.f32 %v838, 0.0
    %v843 = vmax.f32 %v840, 0.0
    %v844 = vld [vmem:[#allocation12] sm:$0xff]
    %v845 = vld [vmem:[#allocation12 + $0x8] sm:$0xff]
    %v846 = vld [vmem:[#allocation12 + $0x10] sm:$0xff]
    %v847 = vld [vmem:[#allocation12 + $0x18] sm:$0xff]
    %v848 = vld [vmem:[#allocation12 + $0x20] sm:$0xff]
    %v849 = vld [vmem:[#allocation12 + $0x28] sm:$0xff]
    %v850 = vld [vmem:[#allocation12 + $0x30] sm:$0xff]
    %v851 = vld [vmem:[#allocation12 + $0x38] sm:$0xff]
    %v852 = vld [vmem:[#allocation12 + $0x40] sm:$0xff]
    %v853 = vld [vmem:[#allocation12 + $0x48] sm:$0xff]
    %v854 = vld [vmem:[#allocation12 + $0x50] sm:$0xff]
    %v855 = vld [vmem:[#allocation12 + $0x58] sm:$0xff]
    %v856 = vld [vmem:[#allocation12 + $0x60] sm:$0xff]
    %v857 = vld [vmem:[#allocation12 + $0x68] sm:$0xff]
    %v858 = vld [vmem:[#allocation12 + $0x70] sm:$0xff]
    %v859 = vld [vmem:[#allocation12 + $0x78] sm:$0xff]
    %v860 = vld [vmem:[#allocation12 + $0x80] sm:$0xff]
    %v861 = vld [vmem:[#allocation12 + $0x88] sm:$0xff]
    %v862 = vld [vmem:[#allocation12 + $0x90] sm:$0xff]
    %v863 = vld [vmem:[#allocation12 + $0x98] sm:$0xff]
    %v864 = vld [vmem:[#allocation12 + $0xa0] sm:$0xff]
    %v865 = vld [vmem:[#allocation12 + $0xa8] sm:$0xff]
    %v866 = vld [vmem:[#allocation12 + $0xb0] sm:$0xff]
    %v867 = vld [vmem:[#allocation12 + $0xb8] sm:$0xff]
    %v868 = vld [vmem:[#allocation12 + $0xc0] sm:$0xff]
    %v869 = vld [vmem:[#allocation12 + $0xc8] sm:$0xff]
    %v870 = vld [vmem:[#allocation12 + $0xd0] sm:$0xff]
    %v871 = vld [vmem:[#allocation12 + $0xd8] sm:$0xff]
    %v872 = vld [vmem:[#allocation12 + $0xe0] sm:$0xff]
    %v873 = vld [vmem:[#allocation12 + $0xe8] sm:$0xff]
    %v874 = vld [vmem:[#allocation12 + $0xf0] sm:$0xff]
    %v875 = vld [vmem:[#allocation12 + $0xf8] sm:$0xff]
    %v876 = vld [vmem:[#allocation14] sm:$0x1]
    %v878 = vlaneseq
    %v879 = vshrl.u32 %v878, 7
    %v880 = vsub.s32 0, %v879
    %v881 = vrot.slane %v876, %v880
    %883 = vmatprep.subr.mxu0 0.0
    %884 = vmatpush1.msra.mxu0 %v844
    %885 = vmatprep.subr.mxu0 0.0
    %886 = vmatpush1.msra.mxu0 %v845
    %887 = vmatprep.subr.mxu0 0.0
    %888 = vmatpush1.msra.mxu0 %v846
    %889 = vmatprep.subr.mxu0 0.0
    %890 = vmatpush1.msra.mxu0 %v847
    %891 = vmatprep.subr.mxu0 0.0
    %892 = vmatpush1.msra.mxu0 %v848
    %893 = vmatprep.subr.mxu0 0.0
    %894 = vmatpush1.msra.mxu0 %v849
    %895 = vmatprep.subr.mxu0 0.0
    %896 = vmatpush1.msra.mxu0 %v850
    %897 = vmatprep.subr.mxu0 0.0
    %898 = vmatpush1.msra.mxu0 %v851
    %899 = vmatprep.subr.mxu0 0.0
    %900 = vmatpush1.msra.mxu0 %v852
    %901 = vmatprep.subr.mxu0 0.0
    %902 = vmatpush1.msra.mxu0 %v853
    %903 = vmatprep.subr.mxu0 0.0
    %904 = vmatpush1.msra.mxu0 %v854
    %905 = vmatprep.subr.mxu0 0.0
    %906 = vmatpush1.msra.mxu0 %v855
    %907 = vmatprep.subr.mxu0 0.0
    %908 = vmatpush1.msra.mxu0 %v856
    %909 = vmatprep.subr.mxu0 0.0
    %910 = vmatpush1.msra.mxu0 %v857
    %911 = vmatprep.subr.mxu0 0.0
    %912 = vmatpush1.msra.mxu0 %v858
    %913 = vmatprep.subr.mxu0 0.0
    %914 = vmatpush1.msra.mxu0 %v859
    %915 = vmatprep.subr.mxu0 0.0
    %916 = vmatpush1.msra.mxu0 %v860
    %917 = vmatprep.subr.mxu0 0.0
    %918 = vmatpush1.msra.mxu0 %v861
    %919 = vmatprep.subr.mxu0 0.0
    %920 = vmatpush1.msra.mxu0 %v862
    %921 = vmatprep.subr.mxu0 0.0
    %922 = vmatpush1.msra.mxu0 %v863
    %923 = vmatprep.subr.mxu0 0.0
    %924 = vmatpush1.msra.mxu0 %v864
    %925 = vmatprep.subr.mxu0 0.0
    %926 = vmatpush1.msra.mxu0 %v865
    %927 = vmatprep.subr.mxu0 0.0
    %928 = vmatpush1.msra.mxu0 %v866
    %929 = vmatprep.subr.mxu0 0.0
    %930 = vmatpush1.msra.mxu0 %v867
    %931 = vmatprep.subr.mxu0 0.0
    %932 = vmatpush1.msra.mxu0 %v868
    %933 = vmatprep.subr.mxu0 0.0
    %934 = vmatpush1.msra.mxu0 %v869
    %935 = vmatprep.subr.mxu0 0.0
    %936 = vmatpush1.msra.mxu0 %v870
    %937 = vmatprep.subr.mxu0 0.0
    %938 = vmatpush1.msra.mxu0 %v871
    %939 = vmatprep.subr.mxu0 0.0
    %940 = vmatpush1.msra.mxu0 %v872
    %941 = vmatprep.subr.mxu0 0.0
    %942 = vmatpush1.msra.mxu0 %v873
    %943 = vmatprep.subr.mxu0 0.0
    %944 = vmatpush1.msra.mxu0 %v874
    %945 = vmatprep.subr.mxu0 0.0
    %946 = vmatpush1.msra.mxu0 %v875
    %947 = vmatprep.mubr.f32.mxu0 %v843
    %948 = vmatmul.mubr.f32.gmra.mrb[0].mxu0 %v842
    %v949 = vpop.f32.mrb[0].mxu0
    %v950 = vadd.f32 %v881, %v949
    %v951 = vpop.f32.mrb[0].mxu0
    %952 = vdwg.mxu0
    %v953 = vmax.f32 %v950, 0.0
    %v954 = vld [vmem:[#allocation15] sm:$0xff]
    %v955 = vld [vmem:[#allocation15 + $0x8] sm:$0xff]
    %v956 = vld [vmem:[#allocation15 + $0x10] sm:$0xff]
    %v957 = vld [vmem:[#allocation15 + $0x18] sm:$0xff]
    %v958 = vld [vmem:[#allocation15 + $0x20] sm:$0xff]
    %v959 = vld [vmem:[#allocation15 + $0x28] sm:$0xff]
    %v960 = vld [vmem:[#allocation15 + $0x30] sm:$0xff]
    %v961 = vld [vmem:[#allocation15 + $0x38] sm:$0xff]
    %v962 = vld [vmem:[#allocation15 + $0x40] sm:$0xff]
    %v963 = vld [vmem:[#allocation15 + $0x48] sm:$0xff]
    %v964 = vld [vmem:[#allocation15 + $0x50] sm:$0xff]
    %v965 = vld [vmem:[#allocation15 + $0x58] sm:$0xff]
    %v966 = vld [vmem:[#allocation15 + $0x60] sm:$0xff]
    %v967 = vld [vmem:[#allocation15 + $0x68] sm:$0xff]
    %v968 = vld [vmem:[#allocation15 + $0x70] sm:$0xff]
    %v969 = vld [vmem:[#allocation15 + $0x78] sm:$0xff]
    %v970 = vld [vmem:[#allocation17] sm:$0x1]
    %v972 = vlaneseq
    %v973 = vshrl.u32 %v972, 7
    %v974 = vsub.s32 0, %v973
    %v975 = vrot.slane %v970, %v974
    %977 = vmatprep.subr.mxu0 0.0
    %978 = vmatpush1.msra.mxu0 %v954
    %979 = vmatprep.subr.mxu0 0.0
    %980 = vmatpush1.msra.mxu0 %v955
    %981 = vmatprep.subr.mxu0 0.0
    %982 = vmatpush1.msra.mxu0 %v956
    %983 = vmatprep.subr.mxu0 0.0
    %984 = vmatpush1.msra.mxu0 %v957
    %985 = vmatprep.subr.mxu0 0.0
    %986 = vmatpush1.msra.mxu0 %v958
    %987 = vmatprep.subr.mxu0 0.0
    %988 = vmatpush1.msra.mxu0 %v959
    %989 = vmatprep.subr.mxu0 0.0
    %990 = vmatpush1.msra.mxu0 %v960
    %991 = vmatprep.subr.mxu0 0.0
    %992 = vmatpush1.msra.mxu0 %v961
    %993 = vmatprep.subr.mxu0 0.0
    %994 = vmatpush1.msra.mxu0 %v962
    %995 = vmatprep.subr.mxu0 0.0
    %996 = vmatpush1.msra.mxu0 %v963
    %997 = vmatprep.subr.mxu0 0.0
    %998 = vmatpush1.msra.mxu0 %v964
    %999 = vmatprep.subr.mxu0 0.0
    %1000 = vmatpush1.msra.mxu0 %v965
    %1001 = vmatprep.subr.mxu0 0.0
    %1002 = vmatpush1.msra.mxu0 %v966
    %1003 = vmatprep.subr.mxu0 0.0
    %1004 = vmatpush1.msra.mxu0 %v967
    %1005 = vmatprep.subr.mxu0 0.0
    %1006 = vmatpush1.msra.mxu0 %v968
    %1007 = vmatprep.subr.mxu0 0.0
    %1008 = vmatpush1.msra.mxu0 %v969
    %1009 = vmatprep.subr.mxu0 0.0
    %1010 = vmatpush1.msra.mxu0 0.0
    %1011 = vmatprep.subr.mxu0 0.0
    %1012 = vmatpush1.msra.mxu0 0.0
    %1013 = vmatprep.subr.mxu0 0.0
    %1014 = vmatpush1.msra.mxu0 0.0
    %1015 = vmatprep.subr.mxu0 0.0
    %1016 = vmatpush1.msra.mxu0 0.0
    %1017 = vmatprep.subr.mxu0 0.0
    %1018 = vmatpush1.msra.mxu0 0.0
    %1019 = vmatprep.subr.mxu0 0.0
    %1020 = vmatpush1.msra.mxu0 0.0
    %1021 = vmatprep.subr.mxu0 0.0
    %1022 = vmatpush1.msra.mxu0 0.0
    %1023 = vmatprep.subr.mxu0 0.0
    %1024 = vmatpush1.msra.mxu0 0.0
    %1025 = vmatprep.subr.mxu0 0.0
    %1026 = vmatpush1.msra.mxu0 0.0
    %1027 = vmatprep.subr.mxu0 0.0
    %1028 = vmatpush1.msra.mxu0 0.0
    %1029 = vmatprep.subr.mxu0 0.0
    %1030 = vmatpush1.msra.mxu0 0.0
    %1031 = vmatprep.subr.mxu0 0.0
    %1032 = vmatpush1.msra.mxu0 0.0
    %1033 = vmatprep.subr.mxu0 0.0
    %1034 = vmatpush1.msra.mxu0 0.0
    %1035 = vmatprep.subr.mxu0 0.0
    %1036 = vmatpush1.msra.mxu0 0.0
    %1037 = vmatprep.subr.mxu0 0.0
    %1038 = vmatpush1.msra.mxu0 0.0
    %1039 = vmatprep.subr.mxu0 0.0
    %1040 = vmatpush1.msra.mxu0 0.0
    %1041 = vmatprep.mubr.f32.mxu0 0.0
    %1042 = vmatmul.mubr.f32.gmra.mrb[0].mxu0 %v953
    %v1043 = vpop.f32.mrb[0].mxu0
    %v1044 = vadd.f32 %v975, %v1043
    %v1045 = vpop.f32.mrb[0].mxu0
    %1046 = vdwg.mxu0
    %v1047 = vmax.f32 %v1044, 0.0
    %1048 = vst [vmem:[#allocation2] sm:$0xff] %v1047
    %v1049 = vld [vmem:[#allocation18] sm:$0xff]
    %v1050 = vld [vmem:[#allocation18 + $0x8] sm:$0xff]
    %v1051 = vld [vmem:[#allocation18 + $0x10] sm:$0xff]
    %v1052 = vld [vmem:[#allocation18 + $0x18] sm:$0xff]
    %v1053 = vld [vmem:[#allocation18 + $0x20] sm:$0xff]
    %v1054 = vld [vmem:[#allocation18 + $0x28] sm:$0xff]
    %v1055 = vld [vmem:[#allocation18 + $0x30] sm:$0x3]
    %v1056 = vld [vmem:[%s21] sm:$0xff]
    %v1057 = vld [vmem:[%s21 + $0x8] sm:$0xff]
    %v1058 = vld [vmem:[%s23] sm:$0xff]
    %v1059 = vld [vmem:[%s25] sm:$0xff]
    %v1060 = vlaneseq
    %v1061 = vand.u32 %v1060, 127
    %1062 = vset.pattern.permute.xlu0 0
    %1063 = vperm.xlu0 %1062, %v1056
    %v1064 = vpop.permute.xlu0 %1063
    %1065 = vset.pattern.permute.xlu0 0
    %1066 = vperm.xlu0 %1065, %v1057
    %v1067 = vpop.permute.xlu0 %1066
    %vm1068 = vcmp.eq.s32.totalorder %v1061, %v1064
    %vm1069 = vcmp.eq.s32.totalorder %v1061, %v1067
    %v1070 = vsel %vm1068, 1, 0
    %v1071 = vsel %vm1069, 1, 0
    %v1072 = vcvt.s32.f32 %v1070
    %v1073 = vcvt.s32.f32 %v1071
    %vm1074 = vcmask 408576
    %v1076 = vsel %vm1074, %v1072, 0
    %v1079 = vsel %vm1074, %v1073, 0
    %vm1081 = vcmask 1041408
    %v1083 = vsel %vm1081, %v1055, 0
    %1085 = vmatprep.subr.mxu0 0.0
    %1086 = vmatpush1.msra.mxu0 %v1049
    %1087 = vmatprep.subr.mxu0 0.0
    %1088 = vmatpush1.msra.mxu0 %v1050
    %1089 = vmatprep.subr.mxu0 0.0
    %1090 = vmatpush1.msra.mxu0 %v1051
    %1091 = vmatprep.subr.mxu0 0.0
    %1092 = vmatpush1.msra.mxu0 %v1052
    %1093 = vmatprep.subr.mxu0 0.0
    %1094 = vmatpush1.msra.mxu0 %v1053
    %1095 = vmatprep.subr.mxu0 0.0
    %1096 = vmatpush1.msra.mxu0 %v1054
    %1097 = vmatprep.subr.mxu0 0.0
    %1098 = vmatpush1.msra.mxu0 %v1083
    %1099 = vmatprep.subr.mxu0 0.0
    %1100 = vmatpush1.msra.mxu0 0.0
    %1101 = vmatprep.subr.mxu0 0.0
    %1102 = vmatpush1.msra.mxu0 0.0
    %1103 = vmatprep.subr.mxu0 0.0
    %1104 = vmatpush1.msra.mxu0 0.0
    %1105 = vmatprep.subr.mxu0 0.0
    %1106 = vmatpush1.msra.mxu0 0.0
    %1107 = vmatprep.subr.mxu0 0.0
    %1108 = vmatpush1.msra.mxu0 0.0
    %1109 = vmatprep.subr.mxu0 0.0
    %1110 = vmatpush1.msra.mxu0 0.0
    %1111 = vmatprep.subr.mxu0 0.0
    %1112 = vmatpush1.msra.mxu0 0.0
    %1113 = vmatprep.subr.mxu0 0.0
    %1114 = vmatpush1.msra.mxu0 0.0
    %1115 = vmatprep.subr.mxu0 0.0
    %1116 = vmatpush1.msra.mxu0 0.0
    %1117 = vmatprep.subr.mxu0 0.0
    %1118 = vmatpush1.msra.mxu0 0.0
    %1119 = vmatprep.subr.mxu0 0.0
    %1120 = vmatpush1.msra.mxu0 0.0
    %1121 = vmatprep.subr.mxu0 0.0
    %1122 = vmatpush1.msra.mxu0 0.0
    %1123 = vmatprep.subr.mxu0 0.0
    %1124 = vmatpush1.msra.mxu0 0.0
    %1125 = vmatprep.subr.mxu0 0.0
    %1126 = vmatpush1.msra.mxu0 0.0
    %1127 = vmatprep.subr.mxu0 0.0
    %1128 = vmatpush1.msra.mxu0 0.0
    %1129 = vmatprep.subr.mxu0 0.0
    %1130 = vmatpush1.msra.mxu0 0.0
    %1131 = vmatprep.subr.mxu0 0.0
    %1132 = vmatpush1.msra.mxu0 0.0
    %1133 = vmatprep.subr.mxu0 0.0
    %1134 = vmatpush1.msra.mxu0 0.0
    %1135 = vmatprep.subr.mxu0 0.0
    %1136 = vmatpush1.msra.mxu0 0.0
    %1137 = vmatprep.subr.mxu0 0.0
    %1138 = vmatpush1.msra.mxu0 0.0
    %1139 = vmatprep.subr.mxu0 0.0
    %1140 = vmatpush1.msra.mxu0 0.0
    %1141 = vmatprep.subr.mxu0 0.0
    %1142 = vmatpush1.msra.mxu0 0.0
    %1143 = vmatprep.subr.mxu0 0.0
    %1144 = vmatpush1.msra.mxu0 0.0
    %1145 = vmatprep.subr.mxu0 0.0
    %1146 = vmatpush1.msra.mxu0 0.0
    %1147 = vmatprep.subr.mxu0 0.0
    %1148 = vmatpush1.msra.mxu0 0.0
    %1149 = vmatprep.mubr.f32.mxu0 0.0
    %1150 = vmatmul.mubr.f32.gmra.mrb[0].mxu0 %v1076
    %v1151 = vpop.f32.mrb[0].mxu0
    %v1152 = vadd.f32 0.0, %v1151
    %v1153 = vpop.f32.mrb[0].mxu0
    %1154 = vmatprep.mubr.f32.mxu0 0.0
    %1155 = vmatmul.mubr.f32.gmra.mrb[0].mxu0 %v1079
    %v1156 = vpop.f32.mrb[0].mxu0
    %v1157 = vadd.f32 0.0, %v1156
    %v1158 = vpop.f32.mrb[0].mxu0
    %1159 = vdwg.mxu0
    %1160 = vset.pattern.permute.xlu0 0
    %1161 = vperm.xlu0 %1160, %v1058
    %v1162 = vpop.permute.xlu0 %1161
    %vm1163 = vcmp.ge.s32.totalorder %v1061, %v1162
    %1164 = vset.pattern.permute.xlu0 0
    %1165 = vperm.xlu0 %1164, %v1059
    %v1166 = vpop.permute.xlu0 %1165
    %vm1167 = vcmp.lt.s32.totalorder %v1061, %v1166
    %vm1168 = vmand %vm1163, %vm1167
    %v1169 = vsel %vm1168, 1, 0
    %v1170 = vcvt.s32.f32 %v1169
    %vm1171 = vcmask 130048
    %v1173 = vsel %vm1171, %v1170, 0
    %1175 = vmatprep.subr.mxu0 0.0
    %1176 = vmatpush1.msra.mxu0 %v1152
    %1177 = vmatprep.subr.mxu0 0.0
    %1178 = vmatpush1.msra.mxu0 %v1157
    %1179 = vmatprep.subr.mxu0 0.0
    %1180 = vmatpush1.msra.mxu0 0.0
    %1181 = vmatprep.subr.mxu0 0.0
    %1182 = vmatpush1.msra.mxu0 0.0
    %1183 = vmatprep.subr.mxu0 0.0
    %1184 = vmatpush1.msra.mxu0 0.0
    %1185 = vmatprep.subr.mxu0 0.0
    %1186 = vmatpush1.msra.mxu0 0.0
    %1187 = vmatprep.subr.mxu0 0.0
    %1188 = vmatpush1.msra.mxu0 0.0
    %1189 = vmatprep.subr.mxu0 0.0
    %1190 = vmatpush1.msra.mxu0 0.0
    %1191 = vmatprep.subr.mxu0 0.0
    %1192 = vmatpush1.msra.mxu0 0.0
    %1193 = vmatprep.subr.mxu0 0.0
    %1194 = vmatpush1.msra.mxu0 0.0
    %1195 = vmatprep.subr.mxu0 0.0
    %1196 = vmatpush1.msra.mxu0 0.0
    %1197 = vmatprep.subr.mxu0 0.0
    %1198 = vmatpush1.msra.mxu0 0.0
    %1199 = vmatprep.subr.mxu0 0.0
    %1200 = vmatpush1.msra.mxu0 0.0
    %1201 = vmatprep.subr.mxu0 0.0
    %1202 = vmatpush1.msra.mxu0 0.0
    %1203 = vmatprep.subr.mxu0 0.0
    %1204 = vmatpush1.msra.mxu0 0.0
    %1205 = vmatprep.subr.mxu0 0.0
    %1206 = vmatpush1.msra.mxu0 0.0
    %1207 = vmatprep.subr.mxu0 0.0
    %1208 = vmatpush1.msra.mxu0 0.0
    %1209 = vmatprep.subr.mxu0 0.0
    %1210 = vmatpush1.msra.mxu0 0.0
    %1211 = vmatprep.subr.mxu0 0.0
    %1212 = vmatpush1.msra.mxu0 0.0
    %1213 = vmatprep.subr.mxu0 0.0
    %1214 = vmatpush1.msra.mxu0 0.0
    %1215 = vmatprep.subr.mxu0 0.0
    %1216 = vmatpush1.msra.mxu0 0.0
    %1217 = vmatprep.subr.mxu0 0.0
    %1218 = vmatpush1.msra.mxu0 0.0
    %1219 = vmatprep.subr.mxu0 0.0
    %1220 = vmatpush1.msra.mxu0 0.0
    %1221 = vmatprep.subr.mxu0 0.0
    %1222 = vmatpush1.msra.mxu0 0.0
    %1223 = vmatprep.subr.mxu0 0.0
    %1224 = vmatpush1.msra.mxu0 0.0
    %1225 = vmatprep.subr.mxu0 0.0
    %1226 = vmatpush1.msra.mxu0 0.0
    %1227 = vmatprep.subr.mxu0 0.0
    %1228 = vmatpush1.msra.mxu0 0.0
    %1229 = vmatprep.subr.mxu0 0.0
    %1230 = vmatpush1.msra.mxu0 0.0
    %1231 = vmatprep.subr.mxu0 0.0
    %1232 = vmatpush1.msra.mxu0 0.0
    %1233 = vmatprep.subr.mxu0 0.0
    %1234 = vmatpush1.msra.mxu0 0.0
    %1235 = vmatprep.subr.mxu0 0.0
    %1236 = vmatpush1.msra.mxu0 0.0
    %1237 = vmatprep.subr.mxu0 0.0
    %1238 = vmatpush1.msra.mxu0 0.0
    %1239 = vmatprep.mubr.f32.mxu0 0.0
    %1240 = vmatmul.mubr.f32.gmra.mrb[0].mxu0 %v1173
    %v1241 = vpop.f32.mrb[0].mxu0
    %v1242 = vadd.f32 0.0, %v1241
    %v1243 = vpop.f32.mrb[0].mxu0
    %1244 = vdwg.mxu0
    %1245 = vst [vmem:[#allocation2 + $0x8] sm:$0xff] %v1242
    %v1246 = vld [vmem:[#allocation20] sm:$0xff]
    %v1247 = vld [vmem:[#allocation20 + $0x8] sm:$0xff]
    %v1248 = vld [vmem:[#allocation20 + $0x10] sm:$0xff]
    %v1249 = vld [vmem:[#allocation20 + $0x18] sm:$0xff]
    %v1250 = vld [vmem:[#allocation20 + $0x20] sm:$0xff]
    %v1251 = vld [vmem:[#allocation20 + $0x28] sm:$0xff]
    %v1252 = vld [vmem:[#allocation20 + $0x30] sm:$0xff]
    %v1253 = vld [vmem:[#allocation20 + $0x38] sm:$0xf]
    %v1254 = vld [vmem:[%s29] sm:$0xff]
    %v1255 = vld [vmem:[%s29 + $0x8] sm:$0xff]
    %v1256 = vld [vmem:[%s31] sm:$0xff]
    %v1257 = vld [vmem:[%s33] sm:$0xff]
    %1258 = vset.pattern.permute.xlu0 0
    %1259 = vperm.xlu0 %1258, %v1254
    %v1260 = vpop.permute.xlu0 %1259
    %1261 = vset.pattern.permute.xlu0 0
    %1262 = vperm.xlu0 %1261, %v1255
    %v1263 = vpop.permute.xlu0 %1262
    %vm1264 = vcmp.eq.s32.totalorder %v1061, %v1260
    %vm1265 = vcmp.eq.s32.totalorder %v1061, %v1263
    %v1266 = vsel %vm1264, 1, 0
    %v1267 = vsel %vm1265, 1, 0
    %v1268 = vcvt.s32.f32 %v1266
    %v1269 = vcvt.s32.f32 %v1267
    %vm1270 = vcmask 490496
    %v1272 = vsel %vm1270, %v1268, 0
    %v1275 = vsel %vm1270, %v1269, 0
    %vm1277 = vcmask 1043456
    %v1279 = vsel %vm1277, %v1253, 0
    %1281 = vmatprep.subr.mxu0 0.0
    %1282 = vmatpush1.msra.mxu0 %v1246
    %1283 = vmatprep.subr.mxu0 0.0
    %1284 = vmatpush1.msra.mxu0 %v1247
    %1285 = vmatprep.subr.mxu0 0.0
    %1286 = vmatpush1.msra.mxu0 %v1248
    %1287 = vmatprep.subr.mxu0 0.0
    %1288 = vmatpush1.msra.mxu0 %v1249
    %1289 = vmatprep.subr.mxu0 0.0
    %1290 = vmatpush1.msra.mxu0 %v1250
    %1291 = vmatprep.subr.mxu0 0.0
    %1292 = vmatpush1.msra.mxu0 %v1251
    %1293 = vmatprep.subr.mxu0 0.0
    %1294 = vmatpush1.msra.mxu0 %v1252
    %1295 = vmatprep.subr.mxu0 0.0
    %1296 = vmatpush1.msra.mxu0 %v1279
    %1297 = vmatprep.subr.mxu0 0.0
    %1298 = vmatpush1.msra.mxu0 0.0
    %1299 = vmatprep.subr.mxu0 0.0
    %1300 = vmatpush1.msra.mxu0 0.0
    %1301 = vmatprep.subr.mxu0 0.0
    %1302 = vmatpush1.msra.mxu0 0.0
    %1303 = vmatprep.subr.mxu0 0.0
    %1304 = vmatpush1.msra.mxu0 0.0
    %1305 = vmatprep.subr.mxu0 0.0
    %1306 = vmatpush1.msra.mxu0 0.0
    %1307 = vmatprep.subr.mxu0 0.0
    %1308 = vmatpush1.msra.mxu0 0.0
    %1309 = vmatprep.subr.mxu0 0.0
    %1310 = vmatpush1.msra.mxu0 0.0
    %1311 = vmatprep.subr.mxu0 0.0
    %1312 = vmatpush1.msra.mxu0 0.0
    %1313 = vmatprep.subr.mxu0 0.0
    %1314 = vmatpush1.msra.mxu0 0.0
    %1315 = vmatprep.subr.mxu0 0.0
    %1316 = vmatpush1.msra.mxu0 0.0
    %1317 = vmatprep.subr.mxu0 0.0
    %1318 = vmatpush1.msra.mxu0 0.0
    %1319 = vmatprep.subr.mxu0 0.0
    %1320 = vmatpush1.msra.mxu0 0.0
    %1321 = vmatprep.subr.mxu0 0.0
    %1322 = vmatpush1.msra.mxu0 0.0
    %1323 = vmatprep.subr.mxu0 0.0
    %1324 = vmatpush1.msra.mxu0 0.0
    %1325 = vmatprep.subr.mxu0 0.0
    %1326 = vmatpush1.msra.mxu0 0.0
    %1327 = vmatprep.subr.mxu0 0.0
    %1328 = vmatpush1.msra.mxu0 0.0
    %1329 = vmatprep.subr.mxu0 0.0
    %1330 = vmatpush1.msra.mxu0 0.0
    %1331 = vmatprep.subr.mxu0 0.0
    %1332 = vmatpush1.msra.mxu0 0.0
    %1333 = vmatprep.subr.mxu0 0.0
    %1334 = vmatpush1.msra.mxu0 0.0
    %1335 = vmatprep.subr.mxu0 0.0
    %1336 = vmatpush1.msra.mxu0 0.0
    %1337 = vmatprep.subr.mxu0 0.0
    %1338 = vmatpush1.msra.mxu0 0.0
    %1339 = vmatprep.subr.mxu0 0.0
    %1340 = vmatpush1.msra.mxu0 0.0
    %1341 = vmatprep.subr.mxu0 0.0
    %1342 = vmatpush1.msra.mxu0 0.0
    %1343 = vmatprep.subr.mxu0 0.0
    %1344 = vmatpush1.msra.mxu0 0.0
    %1345 = vmatprep.mubr.f32.mxu0 0.0
    %1346 = vmatmul.mubr.f32.gmra.mrb[0].mxu0 %v1272
    %v1347 = vpop.f32.mrb[0].mxu0
    %v1348 = vadd.f32 0.0, %v1347
    %v1349 = vpop.f32.mrb[0].mxu0
    %1350 = vmatprep.mubr.f32.mxu0 0.0
    %1351 = vmatmul.mubr.f32.gmra.mrb[0].mxu0 %v1275
    %v1352 = vpop.f32.mrb[0].mxu0
    %v1353 = vadd.f32 0.0, %v1352
    %v1354 = vpop.f32.mrb[0].mxu0
    %1355 = vdwg.mxu0
    %1356 = vset.pattern.permute.xlu0 0
    %1357 = vperm.xlu0 %1356, %v1256
    %v1358 = vpop.permute.xlu0 %1357
    %vm1359 = vcmp.ge.s32.totalorder %v1061, %v1358
    %1360 = vset.pattern.permute.xlu0 0
    %1361 = vperm.xlu0 %1360, %v1257
    %v1362 = vpop.permute.xlu0 %1361
    %vm1363 = vcmp.lt.s32.totalorder %v1061, %v1362
    %vm1364 = vmand %vm1359, %vm1363
    %v1365 = vsel %vm1364, 1, 0
    %v1366 = vcvt.s32.f32 %v1365
    %v1368 = vsel %vm1171, %v1366, 0
    %1370 = vmatprep.subr.mxu0 0.0
    %1371 = vmatpush1.msra.mxu0 %v1348
    %1372 = vmatprep.subr.mxu0 0.0
    %1373 = vmatpush1.msra.mxu0 %v1353
    %1374 = vmatprep.subr.mxu0 0.0
    %1375 = vmatpush1.msra.mxu0 0.0
    %1376 = vmatprep.subr.mxu0 0.0
    %1377 = vmatpush1.msra.mxu0 0.0
    %1378 = vmatprep.subr.mxu0 0.0
    %1379 = vmatpush1.msra.mxu0 0.0
    %1380 = vmatprep.subr.mxu0 0.0
    %1381 = vmatpush1.msra.mxu0 0.0
    %1382 = vmatprep.subr.mxu0 0.0
    %1383 = vmatpush1.msra.mxu0 0.0
    %1384 = vmatprep.subr.mxu0 0.0
    %1385 = vmatpush1.msra.mxu0 0.0
    %1386 = vmatprep.subr.mxu0 0.0
    %1387 = vmatpush1.msra.mxu0 0.0
    %1388 = vmatprep.subr.mxu0 0.0
    %1389 = vmatpush1.msra.mxu0 0.0
    %1390 = vmatprep.subr.mxu0 0.0
    %1391 = vmatpush1.msra.mxu0 0.0
    %1392 = vmatprep.subr.mxu0 0.0
    %1393 = vmatpush1.msra.mxu0 0.0
    %1394 = vmatprep.subr.mxu0 0.0
    %1395 = vmatpush1.msra.mxu0 0.0
    %1396 = vmatprep.subr.mxu0 0.0
    %1397 = vmatpush1.msra.mxu0 0.0
    %1398 = vmatprep.subr.mxu0 0.0
    %1399 = vmatpush1.msra.mxu0 0.0
    %1400 = vmatprep.subr.mxu0 0.0
    %1401 = vmatpush1.msra.mxu0 0.0
    %1402 = vmatprep.subr.mxu0 0.0
    %1403 = vmatpush1.msra.mxu0 0.0
    %1404 = vmatprep.subr.mxu0 0.0
    %1405 = vmatpush1.msra.mxu0 0.0
    %1406 = vmatprep.subr.mxu0 0.0
    %1407 = vmatpush1.msra.mxu0 0.0
    %1408 = vmatprep.subr.mxu0 0.0
    %1409 = vmatpush1.msra.mxu0 0.0
    %1410 = vmatprep.subr.mxu0 0.0
    %1411 = vmatpush1.msra.mxu0 0.0
    %1412 = vmatprep.subr.mxu0 0.0
    %1413 = vmatpush1.msra.mxu0 0.0
    %1414 = vmatprep.subr.mxu0 0.0
    %1415 = vmatpush1.msra.mxu0 0.0
    %1416 = vmatprep.subr.mxu0 0.0
    %1417 = vmatpush1.msra.mxu0 0.0
    %1418 = vmatprep.subr.mxu0 0.0
    %1419 = vmatpush1.msra.mxu0 0.0
    %1420 = vmatprep.subr.mxu0 0.0
    %1421 = vmatpush1.msra.mxu0 0.0
    %1422 = vmatprep.subr.mxu0 0.0
    %1423 = vmatpush1.msra.mxu0 0.0
    %1424 = vmatprep.subr.mxu0 0.0
    %1425 = vmatpush1.msra.mxu0 0.0
    %1426 = vmatprep.subr.mxu0 0.0
    %1427 = vmatpush1.msra.mxu0 0.0
    %1428 = vmatprep.subr.mxu0 0.0
    %1429 = vmatpush1.msra.mxu0 0.0
    %1430 = vmatprep.subr.mxu0 0.0
    %1431 = vmatpush1.msra.mxu0 0.0
    %1432 = vmatprep.subr.mxu0 0.0
    %1433 = vmatpush1.msra.mxu0 0.0
    %1434 = vmatprep.mubr.f32.mxu0 0.0
    %1435 = vmatmul.mubr.f32.gmra.mrb[0].mxu0 %v1368
    %v1436 = vpop.f32.mrb[0].mxu0
    %v1437 = vadd.f32 0.0, %v1436
    %v1438 = vpop.f32.mrb[0].mxu0
    %1439 = vdwg.mxu0
    %1440 = vst [vmem:[#allocation2 + $0x10] sm:$0xff] %v1437
    %v1441 = vld [vmem:[#allocation21] sm:$0xff]
    %v1442 = vld [vmem:[#allocation21 + $0x8] sm:$0xff]
    %v1443 = vld [vmem:[#allocation21 + $0x10] sm:$0xff]
    %v1444 = vld [vmem:[#allocation21 + $0x18] sm:$0xff]
    %v1445 = vld [vmem:[#allocation21 + $0x20] sm:$0xff]
    %v1446 = vld [vmem:[#allocation21 + $0x28] sm:$0xff]
    %v1447 = vld [vmem:[#allocation21 + $0x30] sm:$0xff]
    %v1448 = vld [vmem:[#allocation21 + $0x38] sm:$0xff]
    %v1449 = vld [vmem:[#allocation21 + $0x40] sm:$0x3f]
    %v1450 = vld [vmem:[%s37] sm:$0xff]
    %v1451 = vld [vmem:[%s37 + $0x8] sm:$0xff]
    %v1452 = vld [vmem:[%s39] sm:$0xff]
    %v1453 = vld [vmem:[%s41] sm:$0xff]
    %1454 = vset.pattern.permute.xlu0 0
    %1455 = vperm.xlu0 %1454, %v1450
    %v1456 = vpop.permute.xlu0 %1455
    %1457 = vset.pattern.permute.xlu0 0
    %1458 = vperm.xlu0 %1457, %v1451
    %v1459 = vpop.permute.xlu0 %1458
    %vm1460 = vcmp.eq.s32.totalorder %v1061, %v1456
    %vm1461 = vcmp.eq.s32.totalorder %v1061, %v1459
    %v1462 = vsel %vm1460, 1, 0
    %v1463 = vsel %vm1461, 1, 0
    %v1464 = vcvt.s32.f32 %v1462
    %v1465 = vcvt.s32.f32 %v1463
    %vm1466 = vcmask 572416
    %v1468 = vsel %vm1466, %v1464, 0
    %v1471 = vsel %vm1466, %v1465, 0
    %vm1473 = vcmask 1045504
    %v1475 = vsel %vm1473, %v1449, 0
    %1477 = vmatprep.subr.mxu0 0.0
    %1478 = vmatpush1.msra.mxu0 %v1441
    %1479 = vmatprep.subr.mxu0 0.0
    %1480 = vmatpush1.msra.mxu0 %v1442
    %1481 = vmatprep.subr.mxu0 0.0
    %1482 = vmatpush1.msra.mxu0 %v1443
    %1483 = vmatprep.subr.mxu0 0.0
    %1484 = vmatpush1.msra.mxu0 %v1444
    %1485 = vmatprep.subr.mxu0 0.0
    %1486 = vmatpush1.msra.mxu0 %v1445
    %1487 = vmatprep.subr.mxu0 0.0
    %1488 = vmatpush1.msra.mxu0 %v1446
    %1489 = vmatprep.subr.mxu0 0.0
    %1490 = vmatpush1.msra.mxu0 %v1447
    %1491 = vmatprep.subr.mxu0 0.0
    %1492 = vmatpush1.msra.mxu0 %v1448
    %1493 = vmatprep.subr.mxu0 0.0
    %1494 = vmatpush1.msra.mxu0 %v1475
    %1495 = vmatprep.subr.mxu0 0.0
    %1496 = vmatpush1.msra.mxu0 0.0
    %1497 = vmatprep.subr.mxu0 0.0
    %1498 = vmatpush1.msra.mxu0 0.0
    %1499 = vmatprep.subr.mxu0 0.0
    %1500 = vmatpush1.msra.mxu0 0.0
    %1501 = vmatprep.subr.mxu0 0.0
    %1502 = vmatpush1.msra.mxu0 0.0
    %1503 = vmatprep.subr.mxu0 0.0
    %1504 = vmatpush1.msra.mxu0 0.0
    %1505 = vmatprep.subr.mxu0 0.0
    %1506 = vmatpush1.msra.mxu0 0.0
    %1507 = vmatprep.subr.mxu0 0.0
    %1508 = vmatpush1.msra.mxu0 0.0
    %1509 = vmatprep.subr.mxu0 0.0
    %1510 = vmatpush1.msra.mxu0 0.0
    %1511 = vmatprep.subr.mxu0 0.0
    %1512 = vmatpush1.msra.mxu0 0.0
    %1513 = vmatprep.subr.mxu0 0.0
    %1514 = vmatpush1.msra.mxu0 0.0
    %1515 = vmatprep.subr.mxu0 0.0
    %1516 = vmatpush1.msra.mxu0 0.0
    %1517 = vmatprep.subr.mxu0 0.0
    %1518 = vmatpush1.msra.mxu0 0.0
    %1519 = vmatprep.subr.mxu0 0.0
    %1520 = vmatpush1.msra.mxu0 0.0
    %1521 = vmatprep.subr.mxu0 0.0
    %1522 = vmatpush1.msra.mxu0 0.0
    %1523 = vmatprep.subr.mxu0 0.0
    %1524 = vmatpush1.msra.mxu0 0.0
    %1525 = vmatprep.subr.mxu0 0.0
    %1526 = vmatpush1.msra.mxu0 0.0
    %1527 = vmatprep.subr.mxu0 0.0
    %1528 = vmatpush1.msra.mxu0 0.0
    %1529 = vmatprep.subr.mxu0 0.0
    %1530 = vmatpush1.msra.mxu0 0.0
    %1531 = vmatprep.subr.mxu0 0.0
    %1532 = vmatpush1.msra.mxu0 0.0
    %1533 = vmatprep.subr.mxu0 0.0
    %1534 = vmatpush1.msra.mxu0 0.0
    %1535 = vmatprep.subr.mxu0 0.0
    %1536 = vmatpush1.msra.mxu0 0.0
    %1537 = vmatprep.subr.mxu0 0.0
    %1538 = vmatpush1.msra.mxu0 0.0
    %1539 = vmatprep.subr.mxu0 0.0
    %1540 = vmatpush1.msra.mxu0 0.0
    %1541 = vmatprep.mubr.f32.mxu0 0.0
    %1542 = vmatmul.mubr.f32.gmra.mrb[0].mxu0 %v1468
    %v1543 = vpop.f32.mrb[0].mxu0
    %v1544 = vadd.f32 0.0, %v1543
    %v1545 = vpop.f32.mrb[0].mxu0
    %1546 = vmatprep.mubr.f32.mxu0 0.0
    %1547 = vmatmul.mubr.f32.gmra.mrb[0].mxu0 %v1471
    %v1548 = vpop.f32.mrb[0].mxu0
    %v1549 = vadd.f32 0.0, %v1548
    %v1550 = vpop.f32.mrb[0].mxu0
    %1551 = vdwg.mxu0
    %1552 = vset.pattern.permute.xlu0 0
    %1553 = vperm.xlu0 %1552, %v1452
    %v1554 = vpop.permute.xlu0 %1553
    %vm1555 = vcmp.ge.s32.totalorder %v1061, %v1554
    %1556 = vset.pattern.permute.xlu0 0
    %1557 = vperm.xlu0 %1556, %v1453
    %v1558 = vpop.permute.xlu0 %1557
    %vm1559 = vcmp.lt.s32.totalorder %v1061, %v1558
    %vm1560 = vmand %vm1555, %vm1559
    %v1561 = vsel %vm1560, 1, 0
    %v1562 = vcvt.s32.f32 %v1561
    %v1564 = vsel %vm1171, %v1562, 0
    %1566 = vmatprep.subr.mxu0 0.0
    %1567 = vmatpush1.msra.mxu0 %v1544
    %1568 = vmatprep.subr.mxu0 0.0
    %1569 = vmatpush1.msra.mxu0 %v1549
    %1570 = vmatprep.subr.mxu0 0.0
    %1571 = vmatpush1.msra.mxu0 0.0
    %1572 = vmatprep.subr.mxu0 0.0
    %1573 = vmatpush1.msra.mxu0 0.0
    %1574 = vmatprep.subr.mxu0 0.0
    %1575 = vmatpush1.msra.mxu0 0.0
    %1576 = vmatprep.subr.mxu0 0.0
    %1577 = vmatpush1.msra.mxu0 0.0
    %1578 = vmatprep.subr.mxu0 0.0
    %1579 = vmatpush1.msra.mxu0 0.0
    %1580 = vmatprep.subr.mxu0 0.0
    %1581 = vmatpush1.msra.mxu0 0.0
    %1582 = vmatprep.subr.mxu0 0.0
    %1583 = vmatpush1.msra.mxu0 0.0
    %1584 = vmatprep.subr.mxu0 0.0
    %1585 = vmatpush1.msra.mxu0 0.0
    %1586 = vmatprep.subr.mxu0 0.0
    %1587 = vmatpush1.msra.mxu0 0.0
    %1588 = vmatprep.subr.mxu0 0.0
    %1589 = vmatpush1.msra.mxu0 0.0
    %1590 = vmatprep.subr.mxu0 0.0
    %1591 = vmatpush1.msra.mxu0 0.0
    %1592 = vmatprep.subr.mxu0 0.0
    %1593 = vmatpush1.msra.mxu0 0.0
    %1594 = vmatprep.subr.mxu0 0.0
    %1595 = vmatpush1.msra.mxu0 0.0
    %1596 = vmatprep.subr.mxu0 0.0
    %1597 = vmatpush1.msra.mxu0 0.0
    %1598 = vmatprep.subr.mxu0 0.0
    %1599 = vmatpush1.msra.mxu0 0.0
    %1600 = vmatprep.subr.mxu0 0.0
    %1601 = vmatpush1.msra.mxu0 0.0
    %1602 = vmatprep.subr.mxu0 0.0
    %1603 = vmatpush1.msra.mxu0 0.0
    %1604 = vmatprep.subr.mxu0 0.0
    %1605 = vmatpush1.msra.mxu0 0.0
    %1606 = vmatprep.subr.mxu0 0.0
    %1607 = vmatpush1.msra.mxu0 0.0
    %1608 = vmatprep.subr.mxu0 0.0
    %1609 = vmatpush1.msra.mxu0 0.0
    %1610 = vmatprep.subr.mxu0 0.0
    %1611 = vmatpush1.msra.mxu0 0.0
    %1612 = vmatprep.subr.mxu0 0.0
    %1613 = vmatpush1.msra.mxu0 0.0
    %1614 = vmatprep.subr.mxu0 0.0
    %1615 = vmatpush1.msra.mxu0 0.0
    %1616 = vmatprep.subr.mxu0 0.0
    %1617 = vmatpush1.msra.mxu0 0.0
    %1618 = vmatprep.subr.mxu0 0.0
    %1619 = vmatpush1.msra.mxu0 0.0
    %1620 = vmatprep.subr.mxu0 0.0
    %1621 = vmatpush1.msra.mxu0 0.0
    %1622 = vmatprep.subr.mxu0 0.0
    %1623 = vmatpush1.msra.mxu0 0.0
    %1624 = vmatprep.subr.mxu0 0.0
    %1625 = vmatpush1.msra.mxu0 0.0
    %1626 = vmatprep.subr.mxu0 0.0
    %1627 = vmatpush1.msra.mxu0 0.0
    %1628 = vmatprep.subr.mxu0 0.0
    %1629 = vmatpush1.msra.mxu0 0.0
    %1630 = vmatprep.mubr.f32.mxu0 0.0
    %1631 = vmatmul.mubr.f32.gmra.mrb[0].mxu0 %v1564
    %v1632 = vpop.f32.mrb[0].mxu0
    %v1633 = vadd.f32 0.0, %v1632
    %v1634 = vpop.f32.mrb[0].mxu0
    %1635 = vdwg.mxu0
    %1636 = vst [vmem:[#allocation2 + $0x18] sm:$0xff] %v1633
    %v1637 = vld [vmem:[#allocation2] sm:$0xff]
    %v1638 = vld [vmem:[#allocation2 + $0x8] sm:$0xff]
    %v1639 = vld [vmem:[#allocation2 + $0x10] sm:$0xff]
    %v1640 = vld [vmem:[#allocation2 + $0x18] sm:$0xff]
    %v1641 = vld [vmem:[#allocation23] sm:$0xff]
    %v1642 = vld [vmem:[#allocation23 + $0x8] sm:$0xff]
    %v1643 = vld [vmem:[#allocation23 + $0x10] sm:$0xff]
    %v1644 = vld [vmem:[#allocation23 + $0x18] sm:$0xff]
    %v1645 = vld [vmem:[#allocation23 + $0x20] sm:$0xff]
    %v1646 = vld [vmem:[#allocation23 + $0x28] sm:$0xff]
    %v1647 = vld [vmem:[#allocation23 + $0x30] sm:$0xff]
    %v1648 = vld [vmem:[#allocation23 + $0x38] sm:$0xff]
    %v1649 = vld [vmem:[#allocation23 + $0x40] sm:$0xff]
    %v1650 = vld [vmem:[#allocation23 + $0x48] sm:$0xff]
    %v1651 = vld [vmem:[#allocation23 + $0x50] sm:$0xff]
    %v1652 = vld [vmem:[#allocation23 + $0x58] sm:$0xff]
    %v1653 = vld [vmem:[#allocation23 + $0x60] sm:$0xff]
    %v1654 = vld [vmem:[#allocation23 + $0x68] sm:$0xff]
    %v1655 = vld [vmem:[#allocation23 + $0x70] sm:$0xff]
    %v1656 = vld [vmem:[#allocation23 + $0x78] sm:$0xff]
    %v1657 = vld [vmem:[#allocation23 + $0x80] sm:$0xff]
    %v1658 = vld [vmem:[#allocation23 + $0x88] sm:$0xff]
    %v1659 = vld [vmem:[#allocation23 + $0x90] sm:$0xff]
    %v1660 = vld [vmem:[#allocation23 + $0x98] sm:$0xff]
    %v1661 = vld [vmem:[#allocation23 + $0xa0] sm:$0xff]
    %v1662 = vld [vmem:[#allocation23 + $0xa8] sm:$0xff]
    %v1663 = vld [vmem:[#allocation23 + $0xb0] sm:$0xff]
    %v1664 = vld [vmem:[#allocation23 + $0xb8] sm:$0xff]
    %v1665 = vld [vmem:[#allocation23 + $0xc0] sm:$0xff]
    %v1666 = vld [vmem:[#allocation23 + $0xc8] sm:$0xff]
    %v1667 = vld [vmem:[#allocation23 + $0xd0] sm:$0xff]
    %v1668 = vld [vmem:[#allocation23 + $0xd8] sm:$0xff]
    %v1669 = vld [vmem:[#allocation23 + $0xe0] sm:$0xff]
    %v1670 = vld [vmem:[#allocation23 + $0xe8] sm:$0xff]
    %v1671 = vld [vmem:[#allocation23 + $0xf0] sm:$0xff]
    %v1672 = vld [vmem:[#allocation23 + $0xf8] sm:$0xff]
    %v1673 = vld [vmem:[#allocation23 + $0x100] sm:$0xff]
    %v1674 = vld [vmem:[#allocation23 + $0x108] sm:$0xff]
    %v1675 = vld [vmem:[#allocation23 + $0x110] sm:$0xff]
    %v1676 = vld [vmem:[#allocation23 + $0x118] sm:$0xff]
    %v1677 = vld [vmem:[#allocation23 + $0x120] sm:$0xff]
    %v1678 = vld [vmem:[#allocation23 + $0x128] sm:$0xff]
    %v1679 = vld [vmem:[#allocation23 + $0x130] sm:$0xff]
    %v1680 = vld [vmem:[#allocation23 + $0x138] sm:$0xff]
    %v1681 = vld [vmem:[#allocation23 + $0x140] sm:$0xff]
    %v1682 = vld [vmem:[#allocation23 + $0x148] sm:$0xff]
    %v1683 = vld [vmem:[#allocation23 + $0x150] sm:$0xff]
    %v1684 = vld [vmem:[#allocation23 + $0x158] sm:$0xff]
    %v1685 = vld [vmem:[#allocation23 + $0x160] sm:$0xff]
    %v1686 = vld [vmem:[#allocation23 + $0x168] sm:$0xff]
    %v1687 = vld [vmem:[#allocation23 + $0x170] sm:$0xff]
    %v1688 = vld [vmem:[#allocation23 + $0x178] sm:$0xff]
    %v1689 = vld [vmem:[#allocation23 + $0x180] sm:$0xff]
    %v1690 = vld [vmem:[#allocation23 + $0x188] sm:$0xff]
    %v1691 = vld [vmem:[#allocation23 + $0x190] sm:$0xff]
    %v1692 = vld [vmem:[#allocation23 + $0x198] sm:$0xff]
    %v1693 = vld [vmem:[#allocation23 + $0x1a0] sm:$0xff]
    %v1694 = vld [vmem:[#allocation23 + $0x1a8] sm:$0xff]
    %v1695 = vld [vmem:[#allocation23 + $0x1b0] sm:$0xff]
    %v1696 = vld [vmem:[#allocation23 + $0x1b8] sm:$0xff]
    %v1697 = vld [vmem:[#allocation23 + $0x1c0] sm:$0xff]
    %v1698 = vld [vmem:[#allocation23 + $0x1c8] sm:$0xff]
    %v1699 = vld [vmem:[#allocation23 + $0x1d0] sm:$0xff]
    %v1700 = vld [vmem:[#allocation23 + $0x1d8] sm:$0xff]
    %v1701 = vld [vmem:[#allocation23 + $0x1e0] sm:$0xff]
    %v1702 = vld [vmem:[#allocation23 + $0x1e8] sm:$0xff]
    %v1703 = vld [vmem:[#allocation23 + $0x1f0] sm:$0xff]
    %v1704 = vld [vmem:[#allocation23 + $0x1f8] sm:$0xff]
    %v1705 = vld [vmem:[#allocation23 + $0x200] sm:$0xff]
    %v1706 = vld [vmem:[#allocation23 + $0x208] sm:$0xff]
    %v1707 = vld [vmem:[#allocation23 + $0x210] sm:$0xff]
    %v1708 = vld [vmem:[#allocation23 + $0x218] sm:$0xff]
    %v1709 = vld [vmem:[#allocation23 + $0x220] sm:$0xff]
    %v1710 = vld [vmem:[#allocation23 + $0x228] sm:$0xff]
    %v1711 = vld [vmem:[#allocation23 + $0x230] sm:$0xff]
    %v1712 = vld [vmem:[#allocation23 + $0x238] sm:$0xff]
    %v1713 = vld [vmem:[#allocation23 + $0x240] sm:$0xff]
    %v1714 = vld [vmem:[#allocation23 + $0x248] sm:$0xff]
    %v1715 = vld [vmem:[#allocation23 + $0x250] sm:$0xff]
    %v1716 = vld [vmem:[#allocation23 + $0x258] sm:$0xff]
    %v1717 = vld [vmem:[#allocation23 + $0x260] sm:$0xff]
    %v1718 = vld [vmem:[#allocation23 + $0x268] sm:$0xff]
    %v1719 = vld [vmem:[#allocation23 + $0x270] sm:$0xff]
    %v1720 = vld [vmem:[#allocation23 + $0x278] sm:$0xff]
    %v1721 = vld [vmem:[#allocation23 + $0x280] sm:$0xff]
    %v1722 = vld [vmem:[#allocation23 + $0x288] sm:$0xff]
    %v1723 = vld [vmem:[#allocation23 + $0x290] sm:$0xff]
    %v1724 = vld [vmem:[#allocation23 + $0x298] sm:$0xff]
    %v1725 = vld [vmem:[#allocation23 + $0x2a0] sm:$0xff]
    %v1726 = vld [vmem:[#allocation23 + $0x2a8] sm:$0xff]
    %v1727 = vld [vmem:[#allocation23 + $0x2b0] sm:$0xff]
    %v1728 = vld [vmem:[#allocation23 + $0x2b8] sm:$0xff]
    %v1729 = vld [vmem:[#allocation23 + $0x2c0] sm:$0xff]
    %v1730 = vld [vmem:[#allocation23 + $0x2c8] sm:$0xff]
    %v1731 = vld [vmem:[#allocation23 + $0x2d0] sm:$0xff]
    %v1732 = vld [vmem:[#allocation23 + $0x2d8] sm:$0xff]
    %v1733 = vld [vmem:[#allocation23 + $0x2e0] sm:$0xff]
    %v1734 = vld [vmem:[#allocation23 + $0x2e8] sm:$0xff]
    %v1735 = vld [vmem:[#allocation23 + $0x2f0] sm:$0xff]
    %v1736 = vld [vmem:[#allocation23 + $0x2f8] sm:$0xff]
    %v1737 = vld [vmem:[#allocation23 + $0x300] sm:$0xff]
    %v1738 = vld [vmem:[#allocation23 + $0x308] sm:$0xff]
    %v1739 = vld [vmem:[#allocation23 + $0x310] sm:$0xff]
    %v1740 = vld [vmem:[#allocation23 + $0x318] sm:$0xff]
    %v1741 = vld [vmem:[#allocation23 + $0x320] sm:$0xff]
    %v1742 = vld [vmem:[#allocation23 + $0x328] sm:$0xff]
    %v1743 = vld [vmem:[#allocation23 + $0x330] sm:$0xff]
    %v1744 = vld [vmem:[#allocation23 + $0x338] sm:$0xff]
    %v1745 = vld [vmem:[#allocation23 + $0x340] sm:$0xff]
    %v1746 = vld [vmem:[#allocation23 + $0x348] sm:$0xff]
    %v1747 = vld [vmem:[#allocation23 + $0x350] sm:$0xff]
    %v1748 = vld [vmem:[#allocation23 + $0x358] sm:$0xff]
    %v1749 = vld [vmem:[#allocation23 + $0x360] sm:$0xff]
    %v1750 = vld [vmem:[#allocation23 + $0x368] sm:$0xff]
    %v1751 = vld [vmem:[#allocation23 + $0x370] sm:$0xff]
    %v1752 = vld [vmem:[#allocation23 + $0x378] sm:$0xff]
    %v1753 = vld [vmem:[#allocation23 + $0x380] sm:$0xff]
    %v1754 = vld [vmem:[#allocation23 + $0x388] sm:$0xff]
    %v1755 = vld [vmem:[#allocation23 + $0x390] sm:$0xff]
    %v1756 = vld [vmem:[#allocation23 + $0x398] sm:$0xff]
    %v1757 = vld [vmem:[#allocation23 + $0x3a0] sm:$0xff]
    %v1758 = vld [vmem:[#allocation23 + $0x3a8] sm:$0xff]
    %v1759 = vld [vmem:[#allocation23 + $0x3b0] sm:$0xff]
    %v1760 = vld [vmem:[#allocation23 + $0x3b8] sm:$0xff]
    %v1761 = vld [vmem:[#allocation23 + $0x3c0] sm:$0xff]
    %v1762 = vld [vmem:[#allocation23 + $0x3c8] sm:$0xff]
    %v1763 = vld [vmem:[#allocation23 + $0x3d0] sm:$0xff]
    %v1764 = vld [vmem:[#allocation23 + $0x3d8] sm:$0xff]
    %v1765 = vld [vmem:[#allocation23 + $0x3e0] sm:$0xff]
    %v1766 = vld [vmem:[#allocation23 + $0x3e8] sm:$0xff]
    %v1767 = vld [vmem:[#allocation23 + $0x3f0] sm:$0xff]
    %v1768 = vld [vmem:[#allocation23 + $0x3f8] sm:$0xff]
    %v1769 = vld [vmem:[#allocation23 + $0x400] sm:$0xff]
    %v1770 = vld [vmem:[#allocation23 + $0x408] sm:$0xff]
    %v1771 = vld [vmem:[#allocation23 + $0x410] sm:$0xff]
    %v1772 = vld [vmem:[#allocation23 + $0x418] sm:$0xff]
    %v1773 = vld [vmem:[#allocation23 + $0x420] sm:$0xff]
    %v1774 = vld [vmem:[#allocation23 + $0x428] sm:$0xff]
    %v1775 = vld [vmem:[#allocation23 + $0x430] sm:$0xff]
    %v1776 = vld [vmem:[#allocation23 + $0x438] sm:$0xff]
    %v1777 = vld [vmem:[#allocation23 + $0x440] sm:$0xff]
    %v1778 = vld [vmem:[#allocation23 + $0x448] sm:$0xff]
    %v1779 = vld [vmem:[#allocation23 + $0x450] sm:$0xff]
    %v1780 = vld [vmem:[#allocation23 + $0x458] sm:$0xff]
    %v1781 = vld [vmem:[#allocation23 + $0x460] sm:$0xff]
    %v1782 = vld [vmem:[#allocation23 + $0x468] sm:$0xff]
    %v1783 = vld [vmem:[#allocation23 + $0x470] sm:$0xff]
    %v1784 = vld [vmem:[#allocation23 + $0x478] sm:$0xff]
    %v1785 = vld [vmem:[#allocation23 + $0x480] sm:$0xff]
    %v1786 = vld [vmem:[#allocation23 + $0x488] sm:$0xff]
    %v1787 = vld [vmem:[#allocation23 + $0x490] sm:$0xff]
    %v1788 = vld [vmem:[#allocation23 + $0x498] sm:$0xff]
    %v1789 = vld [vmem:[#allocation23 + $0x4a0] sm:$0xff]
    %v1790 = vld [vmem:[#allocation23 + $0x4a8] sm:$0xff]
    %v1791 = vld [vmem:[#allocation23 + $0x4b0] sm:$0xff]
    %v1792 = vld [vmem:[#allocation23 + $0x4b8] sm:$0xff]
    %v1793 = vld [vmem:[#allocation23 + $0x4c0] sm:$0xff]
    %v1794 = vld [vmem:[#allocation23 + $0x4c8] sm:$0xff]
    %v1795 = vld [vmem:[#allocation23 + $0x4d0] sm:$0xff]
    %v1796 = vld [vmem:[#allocation23 + $0x4d8] sm:$0xff]
    %v1797 = vld [vmem:[#allocation23 + $0x4e0] sm:$0xff]
    %v1798 = vld [vmem:[#allocation23 + $0x4e8] sm:$0xff]
    %v1799 = vld [vmem:[#allocation23 + $0x4f0] sm:$0xff]
    %v1800 = vld [vmem:[#allocation23 + $0x4f8] sm:$0xff]
    %v1801 = vld [vmem:[#allocation23 + $0x500] sm:$0xff]
    %v1802 = vld [vmem:[#allocation23 + $0x508] sm:$0xff]
    %v1803 = vld [vmem:[#allocation23 + $0x510] sm:$0xff]
    %v1804 = vld [vmem:[#allocation23 + $0x518] sm:$0xff]
    %v1805 = vld [vmem:[#allocation23 + $0x520] sm:$0xff]
    %v1806 = vld [vmem:[#allocation23 + $0x528] sm:$0xff]
    %v1807 = vld [vmem:[#allocation23 + $0x530] sm:$0xff]
    %v1808 = vld [vmem:[#allocation23 + $0x538] sm:$0xff]
    %v1809 = vld [vmem:[#allocation23 + $0x540] sm:$0xff]
    %v1810 = vld [vmem:[#allocation23 + $0x548] sm:$0xff]
    %v1811 = vld [vmem:[#allocation23 + $0x550] sm:$0xff]
    %v1812 = vld [vmem:[#allocation23 + $0x558] sm:$0xff]
    %v1813 = vld [vmem:[#allocation23 + $0x560] sm:$0xff]
    %v1814 = vld [vmem:[#allocation23 + $0x568] sm:$0xff]
    %v1815 = vld [vmem:[#allocation23 + $0x570] sm:$0xff]
    %v1816 = vld [vmem:[#allocation23 + $0x578] sm:$0xff]
    %v1817 = vld [vmem:[#allocation23 + $0x580] sm:$0xff]
    %v1818 = vld [vmem:[#allocation23 + $0x588] sm:$0xff]
    %v1819 = vld [vmem:[#allocation23 + $0x590] sm:$0xff]
    %v1820 = vld [vmem:[#allocation23 + $0x598] sm:$0xff]
    %v1821 = vld [vmem:[#allocation23 + $0x5a0] sm:$0xff]
    %v1822 = vld [vmem:[#allocation23 + $0x5a8] sm:$0xff]
    %v1823 = vld [vmem:[#allocation23 + $0x5b0] sm:$0xff]
    %v1824 = vld [vmem:[#allocation23 + $0x5b8] sm:$0xff]
    %v1825 = vld [vmem:[#allocation23 + $0x5c0] sm:$0xff]
    %v1826 = vld [vmem:[#allocation23 + $0x5c8] sm:$0xff]
    %v1827 = vld [vmem:[#allocation23 + $0x5d0] sm:$0xff]
    %v1828 = vld [vmem:[#allocation23 + $0x5d8] sm:$0xff]
    %v1829 = vld [vmem:[#allocation23 + $0x5e0] sm:$0xff]
    %v1830 = vld [vmem:[#allocation23 + $0x5e8] sm:$0xff]
    %v1831 = vld [vmem:[#allocation23 + $0x5f0] sm:$0xff]
    %v1832 = vld [vmem:[#allocation23 + $0x5f8] sm:$0xff]
    %v1833 = vld [vmem:[#allocation23 + $0x600] sm:$0xff]
    %v1834 = vld [vmem:[#allocation23 + $0x608] sm:$0xff]
    %v1835 = vld [vmem:[#allocation23 + $0x610] sm:$0xff]
    %v1836 = vld [vmem:[#allocation23 + $0x618] sm:$0xff]
    %v1837 = vld [vmem:[#allocation23 + $0x620] sm:$0xff]
    %v1838 = vld [vmem:[#allocation23 + $0x628] sm:$0xff]
    %v1839 = vld [vmem:[#allocation23 + $0x630] sm:$0xff]
    %v1840 = vld [vmem:[#allocation23 + $0x638] sm:$0xff]
    %v1841 = vld [vmem:[#allocation23 + $0x640] sm:$0xff]
    %v1842 = vld [vmem:[#allocation23 + $0x648] sm:$0xff]
    %v1843 = vld [vmem:[#allocation23 + $0x650] sm:$0xff]
    %v1844 = vld [vmem:[#allocation23 + $0x658] sm:$0xff]
    %v1845 = vld [vmem:[#allocation23 + $0x660] sm:$0xff]
    %v1846 = vld [vmem:[#allocation23 + $0x668] sm:$0xff]
    %v1847 = vld [vmem:[#allocation23 + $0x670] sm:$0xff]
    %v1848 = vld [vmem:[#allocation23 + $0x678] sm:$0xff]
    %v1849 = vld [vmem:[#allocation23 + $0x680] sm:$0xff]
    %v1850 = vld [vmem:[#allocation23 + $0x688] sm:$0xff]
    %v1851 = vld [vmem:[#allocation23 + $0x690] sm:$0xff]
    %v1852 = vld [vmem:[#allocation23 + $0x698] sm:$0xff]
    %v1853 = vld [vmem:[#allocation23 + $0x6a0] sm:$0xff]
    %v1854 = vld [vmem:[#allocation23 + $0x6a8] sm:$0xff]
    %v1855 = vld [vmem:[#allocation23 + $0x6b0] sm:$0xff]
    %v1856 = vld [vmem:[#allocation23 + $0x6b8] sm:$0xff]
    %v1857 = vld [vmem:[#allocation23 + $0x6c0] sm:$0xff]
    %v1858 = vld [vmem:[#allocation23 + $0x6c8] sm:$0xff]
    %v1859 = vld [vmem:[#allocation23 + $0x6d0] sm:$0xff]
    %v1860 = vld [vmem:[#allocation23 + $0x6d8] sm:$0xff]
    %v1861 = vld [vmem:[#allocation23 + $0x6e0] sm:$0xff]
    %v1862 = vld [vmem:[#allocation23 + $0x6e8] sm:$0xff]
    %v1863 = vld [vmem:[#allocation23 + $0x6f0] sm:$0xff]
    %v1864 = vld [vmem:[#allocation23 + $0x6f8] sm:$0xff]
    %v1865 = vld [vmem:[#allocation23 + $0x700] sm:$0xff]
    %v1866 = vld [vmem:[#allocation23 + $0x708] sm:$0xff]
    %v1867 = vld [vmem:[#allocation23 + $0x710] sm:$0xff]
    %v1868 = vld [vmem:[#allocation23 + $0x718] sm:$0xff]
    %v1869 = vld [vmem:[#allocation23 + $0x720] sm:$0xff]
    %v1870 = vld [vmem:[#allocation23 + $0x728] sm:$0xff]
    %v1871 = vld [vmem:[#allocation23 + $0x730] sm:$0xff]
    %v1872 = vld [vmem:[#allocation23 + $0x738] sm:$0xff]
    %v1873 = vld [vmem:[#allocation23 + $0x740] sm:$0xff]
    %v1874 = vld [vmem:[#allocation23 + $0x748] sm:$0xff]
    %v1875 = vld [vmem:[#allocation23 + $0x750] sm:$0xff]
    %v1876 = vld [vmem:[#allocation23 + $0x758] sm:$0xff]
    %v1877 = vld [vmem:[#allocation23 + $0x760] sm:$0xff]
    %v1878 = vld [vmem:[#allocation23 + $0x768] sm:$0xff]
    %v1879 = vld [vmem:[#allocation23 + $0x770] sm:$0xff]
    %v1880 = vld [vmem:[#allocation23 + $0x778] sm:$0xff]
    %v1881 = vld [vmem:[#allocation23 + $0x780] sm:$0xff]
    %v1882 = vld [vmem:[#allocation23 + $0x788] sm:$0xff]
    %v1883 = vld [vmem:[#allocation23 + $0x790] sm:$0xff]
    %v1884 = vld [vmem:[#allocation23 + $0x798] sm:$0xff]
    %v1885 = vld [vmem:[#allocation23 + $0x7a0] sm:$0xff]
    %v1886 = vld [vmem:[#allocation23 + $0x7a8] sm:$0xff]
    %v1887 = vld [vmem:[#allocation23 + $0x7b0] sm:$0xff]
    %v1888 = vld [vmem:[#allocation23 + $0x7b8] sm:$0xff]
    %v1889 = vld [vmem:[#allocation23 + $0x7c0] sm:$0xff]
    %v1890 = vld [vmem:[#allocation23 + $0x7c8] sm:$0xff]
    %v1891 = vld [vmem:[#allocation23 + $0x7d0] sm:$0xff]
    %v1892 = vld [vmem:[#allocation23 + $0x7d8] sm:$0xff]
    %v1893 = vld [vmem:[#allocation23 + $0x7e0] sm:$0xff]
    %v1894 = vld [vmem:[#allocation23 + $0x7e8] sm:$0xff]
    %v1895 = vld [vmem:[#allocation23 + $0x7f0] sm:$0xff]
    %v1896 = vld [vmem:[#allocation23 + $0x7f8] sm:$0xff]
    %v1897 = vld [vmem:[#allocation23 + $0x800] sm:$0xff]
    %v1898 = vld [vmem:[#allocation23 + $0x808] sm:$0xff]
    %v1899 = vld [vmem:[#allocation23 + $0x810] sm:$0xff]
    %v1900 = vld [vmem:[#allocation23 + $0x818] sm:$0xff]
    %v1901 = vld [vmem:[#allocation23 + $0x820] sm:$0xff]
    %v1902 = vld [vmem:[#allocation23 + $0x828] sm:$0xff]
    %v1903 = vld [vmem:[#allocation23 + $0x830] sm:$0xff]
    %v1904 = vld [vmem:[#allocation23 + $0x838] sm:$0xff]
    %v1905 = vld [vmem:[#allocation23 + $0x840] sm:$0xff]
    %v1906 = vld [vmem:[#allocation23 + $0x848] sm:$0xff]
    %v1907 = vld [vmem:[#allocation23 + $0x850] sm:$0xff]
    %v1908 = vld [vmem:[#allocation23 + $0x858] sm:$0xff]
    %v1909 = vld [vmem:[#allocation23 + $0x860] sm:$0xff]
    %v1910 = vld [vmem:[#allocation23 + $0x868] sm:$0xff]
    %v1911 = vld [vmem:[#allocation23 + $0x870] sm:$0xff]
    %v1912 = vld [vmem:[#allocation23 + $0x878] sm:$0xff]
    %v1913 = vld [vmem:[#allocation23 + $0x880] sm:$0xff]
    %v1914 = vld [vmem:[#allocation23 + $0x888] sm:$0xff]
    %v1915 = vld [vmem:[#allocation23 + $0x890] sm:$0xff]
    %v1916 = vld [vmem:[#allocation23 + $0x898] sm:$0xff]
    %v1917 = vld [vmem:[#allocation23 + $0x8a0] sm:$0xff]
    %v1918 = vld [vmem:[#allocation23 + $0x8a8] sm:$0xff]
    %v1919 = vld [vmem:[#allocation23 + $0x8b0] sm:$0xff]
    %v1920 = vld [vmem:[#allocation23 + $0x8b8] sm:$0xff]
    %v1921 = vld [vmem:[#allocation23 + $0x8c0] sm:$0xff]
    %v1922 = vld [vmem:[#allocation23 + $0x8c8] sm:$0xff]
    %v1923 = vld [vmem:[#allocation23 + $0x8d0] sm:$0xff]
    %v1924 = vld [vmem:[#allocation23 + $0x8d8] sm:$0xff]
    %v1925 = vld [vmem:[#allocation23 + $0x8e0] sm:$0xff]
    %v1926 = vld [vmem:[#allocation23 + $0x8e8] sm:$0xff]
    %v1927 = vld [vmem:[#allocation23 + $0x8f0] sm:$0xff]
    %v1928 = vld [vmem:[#allocation23 + $0x8f8] sm:$0xff]
    %v1929 = vld [vmem:[#allocation23 + $0x900] sm:$0xff]
    %v1930 = vld [vmem:[#allocation23 + $0x908] sm:$0xff]
    %v1931 = vld [vmem:[#allocation23 + $0x910] sm:$0xff]
    %v1932 = vld [vmem:[#allocation23 + $0x918] sm:$0xff]
    %v1933 = vld [vmem:[#allocation23 + $0x920] sm:$0xff]
    %v1934 = vld [vmem:[#allocation23 + $0x928] sm:$0xff]
    %v1935 = vld [vmem:[#allocation23 + $0x930] sm:$0xff]
    %v1936 = vld [vmem:[#allocation23 + $0x938] sm:$0xff]
    %v1937 = vld [vmem:[#allocation23 + $0x940] sm:$0xff]
    %v1938 = vld [vmem:[#allocation23 + $0x948] sm:$0xff]
    %v1939 = vld [vmem:[#allocation23 + $0x950] sm:$0xff]
    %v1940 = vld [vmem:[#allocation23 + $0x958] sm:$0xff]
    %v1941 = vld [vmem:[#allocation23 + $0x960] sm:$0xff]
    %v1942 = vld [vmem:[#allocation23 + $0x968] sm:$0xff]
    %v1943 = vld [vmem:[#allocation23 + $0x970] sm:$0xff]
    %v1944 = vld [vmem:[#allocation23 + $0x978] sm:$0xff]
    %v1945 = vld [vmem:[#allocation23 + $0x980] sm:$0xff]
    %v1946 = vld [vmem:[#allocation23 + $0x988] sm:$0xff]
    %v1947 = vld [vmem:[#allocation23 + $0x990] sm:$0xff]
    %v1948 = vld [vmem:[#allocation23 + $0x998] sm:$0xff]
    %v1949 = vld [vmem:[#allocation23 + $0x9a0] sm:$0xff]
    %v1950 = vld [vmem:[#allocation23 + $0x9a8] sm:$0xff]
    %v1951 = vld [vmem:[#allocation23 + $0x9b0] sm:$0xff]
    %v1952 = vld [vmem:[#allocation23 + $0x9b8] sm:$0xff]
    %v1953 = vld [vmem:[#allocation23 + $0x9c0] sm:$0xff]
    %v1954 = vld [vmem:[#allocation23 + $0x9c8] sm:$0xff]
    %v1955 = vld [vmem:[#allocation23 + $0x9d0] sm:$0xff]
    %v1956 = vld [vmem:[#allocation23 + $0x9d8] sm:$0xff]
    %v1957 = vld [vmem:[#allocation23 + $0x9e0] sm:$0xff]
    %v1958 = vld [vmem:[#allocation23 + $0x9e8] sm:$0xff]
    %v1959 = vld [vmem:[#allocation23 + $0x9f0] sm:$0xff]
    %v1960 = vld [vmem:[#allocation23 + $0x9f8] sm:$0xff]
    %v1961 = vld [vmem:[#allocation23 + $0xa00] sm:$0xff]
    %v1962 = vld [vmem:[#allocation23 + $0xa08] sm:$0xff]
    %v1963 = vld [vmem:[#allocation23 + $0xa10] sm:$0xff]
    %v1964 = vld [vmem:[#allocation23 + $0xa18] sm:$0xff]
    %v1965 = vld [vmem:[#allocation23 + $0xa20] sm:$0xff]
    %v1966 = vld [vmem:[#allocation23 + $0xa28] sm:$0xff]
    %v1967 = vld [vmem:[#allocation23 + $0xa30] sm:$0xff]
    %v1968 = vld [vmem:[#allocation23 + $0xa38] sm:$0xff]
    %v1969 = vld [vmem:[#allocation23 + $0xa40] sm:$0xff]
    %v1970 = vld [vmem:[#allocation23 + $0xa48] sm:$0xff]
    %v1971 = vld [vmem:[#allocation23 + $0xa50] sm:$0xff]
    %v1972 = vld [vmem:[#allocation23 + $0xa58] sm:$0xff]
    %v1973 = vld [vmem:[#allocation23 + $0xa60] sm:$0xff]
    %v1974 = vld [vmem:[#allocation23 + $0xa68] sm:$0xff]
    %v1975 = vld [vmem:[#allocation23 + $0xa70] sm:$0xff]
    %v1976 = vld [vmem:[#allocation23 + $0xa78] sm:$0xff]
    %v1977 = vld [vmem:[#allocation23 + $0xa80] sm:$0xff]
    %v1978 = vld [vmem:[#allocation23 + $0xa88] sm:$0xff]
    %v1979 = vld [vmem:[#allocation23 + $0xa90] sm:$0xff]
    %v1980 = vld [vmem:[#allocation23 + $0xa98] sm:$0xff]
    %v1981 = vld [vmem:[#allocation23 + $0xaa0] sm:$0xff]
    %v1982 = vld [vmem:[#allocation23 + $0xaa8] sm:$0xff]
    %v1983 = vld [vmem:[#allocation23 + $0xab0] sm:$0xff]
    %v1984 = vld [vmem:[#allocation23 + $0xab8] sm:$0xff]
    %v1985 = vld [vmem:[#allocation23 + $0xac0] sm:$0xff]
    %v1986 = vld [vmem:[#allocation23 + $0xac8] sm:$0xff]
    %v1987 = vld [vmem:[#allocation23 + $0xad0] sm:$0xff]
    %v1988 = vld [vmem:[#allocation23 + $0xad8] sm:$0xff]
    %v1989 = vld [vmem:[#allocation23 + $0xae0] sm:$0xff]
    %v1990 = vld [vmem:[#allocation23 + $0xae8] sm:$0xff]
    %v1991 = vld [vmem:[#allocation23 + $0xaf0] sm:$0xff]
    %v1992 = vld [vmem:[#allocation23 + $0xaf8] sm:$0xff]
    %v1993 = vld [vmem:[#allocation23 + $0xb00] sm:$0xff]
    %v1994 = vld [vmem:[#allocation23 + $0xb08] sm:$0xff]
    %v1995 = vld [vmem:[#allocation23 + $0xb10] sm:$0xff]
    %v1996 = vld [vmem:[#allocation23 + $0xb18] sm:$0xff]
    %v1997 = vld [vmem:[#allocation23 + $0xb20] sm:$0xff]
    %v1998 = vld [vmem:[#allocation23 + $0xb28] sm:$0xff]
    %v1999 = vld [vmem:[#allocation23 + $0xb30] sm:$0xff]
    %v2000 = vld [vmem:[#allocation23 + $0xb38] sm:$0xff]
    %v2001 = vld [vmem:[#allocation23 + $0xb40] sm:$0xff]
    %v2002 = vld [vmem:[#allocation23 + $0xb48] sm:$0xff]
    %v2003 = vld [vmem:[#allocation23 + $0xb50] sm:$0xff]
    %v2004 = vld [vmem:[#allocation23 + $0xb58] sm:$0xff]
    %v2005 = vld [vmem:[#allocation23 + $0xb60] sm:$0xff]
    %v2006 = vld [vmem:[#allocation23 + $0xb68] sm:$0xff]
    %v2007 = vld [vmem:[#allocation23 + $0xb70] sm:$0xff]
    %v2008 = vld [vmem:[#allocation23 + $0xb78] sm:$0xff]
    %v2009 = vld [vmem:[#allocation23 + $0xb80] sm:$0xff]
    %v2010 = vld [vmem:[#allocation23 + $0xb88] sm:$0xff]
    %v2011 = vld [vmem:[#allocation23 + $0xb90] sm:$0xff]
    %v2012 = vld [vmem:[#allocation23 + $0xb98] sm:$0xff]
    %v2013 = vld [vmem:[#allocation23 + $0xba0] sm:$0xff]
    %v2014 = vld [vmem:[#allocation23 + $0xba8] sm:$0xff]
    %v2015 = vld [vmem:[#allocation23 + $0xbb0] sm:$0xff]
    %v2016 = vld [vmem:[#allocation23 + $0xbb8] sm:$0xff]
    %v2017 = vld [vmem:[#allocation23 + $0xbc0] sm:$0xff]
    %v2018 = vld [vmem:[#allocation23 + $0xbc8] sm:$0xff]
    %v2019 = vld [vmem:[#allocation23 + $0xbd0] sm:$0xff]
    %v2020 = vld [vmem:[#allocation23 + $0xbd8] sm:$0xff]
    %v2021 = vld [vmem:[#allocation23 + $0xbe0] sm:$0xff]
    %v2022 = vld [vmem:[#allocation23 + $0xbe8] sm:$0xff]
    %v2023 = vld [vmem:[#allocation23 + $0xbf0] sm:$0xff]
    %v2024 = vld [vmem:[#allocation23 + $0xbf8] sm:$0xff]
    %v2025 = vld [vmem:[#allocation23 + $0xc00] sm:$0xff]
    %v2026 = vld [vmem:[#allocation23 + $0xc08] sm:$0xff]
    %v2027 = vld [vmem:[#allocation23 + $0xc10] sm:$0xff]
    %v2028 = vld [vmem:[#allocation23 + $0xc18] sm:$0xff]
    %v2029 = vld [vmem:[#allocation23 + $0xc20] sm:$0xff]
    %v2030 = vld [vmem:[#allocation23 + $0xc28] sm:$0xff]
    %v2031 = vld [vmem:[#allocation23 + $0xc30] sm:$0xff]
    %v2032 = vld [vmem:[#allocation23 + $0xc38] sm:$0xff]
    %v2033 = vld [vmem:[#allocation23 + $0xc40] sm:$0xff]
    %v2034 = vld [vmem:[#allocation23 + $0xc48] sm:$0xff]
    %v2035 = vld [vmem:[#allocation23 + $0xc50] sm:$0xff]
    %v2036 = vld [vmem:[#allocation23 + $0xc58] sm:$0xff]
    %v2037 = vld [vmem:[#allocation23 + $0xc60] sm:$0xff]
    %v2038 = vld [vmem:[#allocation23 + $0xc68] sm:$0xff]
    %v2039 = vld [vmem:[#allocation23 + $0xc70] sm:$0xff]
    %v2040 = vld [vmem:[#allocation23 + $0xc78] sm:$0xff]
    %v2041 = vld [vmem:[#allocation23 + $0xc80] sm:$0xff]
    %v2042 = vld [vmem:[#allocation23 + $0xc88] sm:$0xff]
    %v2043 = vld [vmem:[#allocation23 + $0xc90] sm:$0xff]
    %v2044 = vld [vmem:[#allocation23 + $0xc98] sm:$0xff]
    %v2045 = vld [vmem:[#allocation23 + $0xca0] sm:$0xff]
    %v2046 = vld [vmem:[#allocation23 + $0xca8] sm:$0xff]
    %v2047 = vld [vmem:[#allocation23 + $0xcb0] sm:$0xff]
    %v2048 = vld [vmem:[#allocation23 + $0xcb8] sm:$0xff]
    %v2049 = vld [vmem:[#allocation23 + $0xcc0] sm:$0xff]
    %v2050 = vld [vmem:[#allocation23 + $0xcc8] sm:$0xff]
    %v2051 = vld [vmem:[#allocation23 + $0xcd0] sm:$0xff]
    %v2052 = vld [vmem:[#allocation23 + $0xcd8] sm:$0xff]
    %v2053 = vld [vmem:[#allocation23 + $0xce0] sm:$0xff]
    %v2054 = vld [vmem:[#allocation23 + $0xce8] sm:$0xff]
    %v2055 = vld [vmem:[#allocation23 + $0xcf0] sm:$0xff]
    %v2056 = vld [vmem:[#allocation23 + $0xcf8] sm:$0xff]
    %v2057 = vld [vmem:[#allocation23 + $0xd00] sm:$0xff]
    %v2058 = vld [vmem:[#allocation23 + $0xd08] sm:$0xff]
    %v2059 = vld [vmem:[#allocation23 + $0xd10] sm:$0xff]
    %v2060 = vld [vmem:[#allocation23 + $0xd18] sm:$0xff]
    %v2061 = vld [vmem:[#allocation23 + $0xd20] sm:$0xff]
    %v2062 = vld [vmem:[#allocation23 + $0xd28] sm:$0xff]
    %v2063 = vld [vmem:[#allocation23 + $0xd30] sm:$0xff]
    %v2064 = vld [vmem:[#allocation23 + $0xd38] sm:$0xff]
    %v2065 = vld [vmem:[#allocation23 + $0xd40] sm:$0xff]
    %v2066 = vld [vmem:[#allocation23 + $0xd48] sm:$0xff]
    %v2067 = vld [vmem:[#allocation23 + $0xd50] sm:$0xff]
    %v2068 = vld [vmem:[#allocation23 + $0xd58] sm:$0xff]
    %v2069 = vld [vmem:[#allocation23 + $0xd60] sm:$0xff]
    %v2070 = vld [vmem:[#allocation23 + $0xd68] sm:$0xff]
    %v2071 = vld [vmem:[#allocation23 + $0xd70] sm:$0xff]
    %v2072 = vld [vmem:[#allocation23 + $0xd78] sm:$0xff]
    %v2073 = vld [vmem:[#allocation23 + $0xd80] sm:$0xff]
    %v2074 = vld [vmem:[#allocation23 + $0xd88] sm:$0xff]
    %v2075 = vld [vmem:[#allocation23 + $0xd90] sm:$0xff]
    %v2076 = vld [vmem:[#allocation23 + $0xd98] sm:$0xff]
    %v2077 = vld [vmem:[#allocation23 + $0xda0] sm:$0xff]
    %v2078 = vld [vmem:[#allocation23 + $0xda8] sm:$0xff]
    %v2079 = vld [vmem:[#allocation23 + $0xdb0] sm:$0xff]
    %v2080 = vld [vmem:[#allocation23 + $0xdb8] sm:$0xff]
    %v2081 = vld [vmem:[#allocation23 + $0xdc0] sm:$0xff]
    %v2082 = vld [vmem:[#allocation23 + $0xdc8] sm:$0xff]
    %v2083 = vld [vmem:[#allocation23 + $0xdd0] sm:$0xff]
    %v2084 = vld [vmem:[#allocation23 + $0xdd8] sm:$0xff]
    %v2085 = vld [vmem:[#allocation23 + $0xde0] sm:$0xff]
    %v2086 = vld [vmem:[#allocation23 + $0xde8] sm:$0xff]
    %v2087 = vld [vmem:[#allocation23 + $0xdf0] sm:$0xff]
    %v2088 = vld [vmem:[#allocation23 + $0xdf8] sm:$0xff]
    %v2089 = vld [vmem:[#allocation23 + $0xe00] sm:$0xff]
    %v2090 = vld [vmem:[#allocation23 + $0xe08] sm:$0xff]
    %v2091 = vld [vmem:[#allocation23 + $0xe10] sm:$0xff]
    %v2092 = vld [vmem:[#allocation23 + $0xe18] sm:$0xff]
    %v2093 = vld [vmem:[#allocation23 + $0xe20] sm:$0xff]
    %v2094 = vld [vmem:[#allocation23 + $0xe28] sm:$0xff]
    %v2095 = vld [vmem:[#allocation23 + $0xe30] sm:$0xff]
    %v2096 = vld [vmem:[#allocation23 + $0xe38] sm:$0xff]
    %v2097 = vld [vmem:[#allocation23 + $0xe40] sm:$0xff]
    %v2098 = vld [vmem:[#allocation23 + $0xe48] sm:$0xff]
    %v2099 = vld [vmem:[#allocation23 + $0xe50] sm:$0xff]
    %v2100 = vld [vmem:[#allocation23 + $0xe58] sm:$0xff]
    %v2101 = vld [vmem:[#allocation23 + $0xe60] sm:$0xff]
    %v2102 = vld [vmem:[#allocation23 + $0xe68] sm:$0xff]
    %v2103 = vld [vmem:[#allocation23 + $0xe70] sm:$0xff]
    %v2104 = vld [vmem:[#allocation23 + $0xe78] sm:$0xff]
    %v2105 = vld [vmem:[#allocation23 + $0xe80] sm:$0xff]
    %v2106 = vld [vmem:[#allocation23 + $0xe88] sm:$0xff]
    %v2107 = vld [vmem:[#allocation23 + $0xe90] sm:$0xff]
    %v2108 = vld [vmem:[#allocation23 + $0xe98] sm:$0xff]
    %v2109 = vld [vmem:[#allocation23 + $0xea0] sm:$0xff]
    %v2110 = vld [vmem:[#allocation23 + $0xea8] sm:$0xff]
    %v2111 = vld [vmem:[#allocation23 + $0xeb0] sm:$0xff]
    %v2112 = vld [vmem:[#allocation23 + $0xeb8] sm:$0xff]
    %v2113 = vld [vmem:[#allocation23 + $0xec0] sm:$0xff]
    %v2114 = vld [vmem:[#allocation23 + $0xec8] sm:$0xff]
    %v2115 = vld [vmem:[#allocation23 + $0xed0] sm:$0xff]
    %v2116 = vld [vmem:[#allocation23 + $0xed8] sm:$0xff]
    %v2117 = vld [vmem:[#allocation23 + $0xee0] sm:$0xff]
    %v2118 = vld [vmem:[#allocation23 + $0xee8] sm:$0xff]
    %v2119 = vld [vmem:[#allocation23 + $0xef0] sm:$0xff]
    %v2120 = vld [vmem:[#allocation23 + $0xef8] sm:$0xff]
    %v2121 = vld [vmem:[#allocation23 + $0xf00] sm:$0xff]
    %v2122 = vld [vmem:[#allocation23 + $0xf08] sm:$0xff]
    %v2123 = vld [vmem:[#allocation23 + $0xf10] sm:$0xff]
    %v2124 = vld [vmem:[#allocation23 + $0xf18] sm:$0xff]
    %v2125 = vld [vmem:[#allocation23 + $0xf20] sm:$0xff]
    %v2126 = vld [vmem:[#allocation23 + $0xf28] sm:$0xff]
    %v2127 = vld [vmem:[#allocation23 + $0xf30] sm:$0xff]
    %v2128 = vld [vmem:[#allocation23 + $0xf38] sm:$0xff]
    %v2129 = vld [vmem:[#allocation23 + $0xf40] sm:$0xff]
    %v2130 = vld [vmem:[#allocation23 + $0xf48] sm:$0xff]
    %v2131 = vld [vmem:[#allocation23 + $0xf50] sm:$0xff]
    %v2132 = vld [vmem:[#allocation23 + $0xf58] sm:$0xff]
    %v2133 = vld [vmem:[#allocation23 + $0xf60] sm:$0xff]
    %v2134 = vld [vmem:[#allocation23 + $0xf68] sm:$0xff]
    %v2135 = vld [vmem:[#allocation23 + $0xf70] sm:$0xff]
    %v2136 = vld [vmem:[#allocation23 + $0xf78] sm:$0xff]
    %v2137 = vld [vmem:[#allocation23 + $0xf80] sm:$0xff]
    %v2138 = vld [vmem:[#allocation23 + $0xf88] sm:$0xff]
    %v2139 = vld [vmem:[#allocation23 + $0xf90] sm:$0xff]
    %v2140 = vld [vmem:[#allocation23 + $0xf98] sm:$0xff]
    %v2141 = vld [vmem:[#allocation23 + $0xfa0] sm:$0xff]
    %v2142 = vld [vmem:[#allocation23 + $0xfa8] sm:$0xff]
    %v2143 = vld [vmem:[#allocation23 + $0xfb0] sm:$0xff]
    %v2144 = vld [vmem:[#allocation23 + $0xfb8] sm:$0xff]
    %v2145 = vld [vmem:[#allocation23 + $0xfc0] sm:$0xff]
    %v2146 = vld [vmem:[#allocation23 + $0xfc8] sm:$0xff]
    %v2147 = vld [vmem:[#allocation23 + $0xfd0] sm:$0xff]
    %v2148 = vld [vmem:[#allocation23 + $0xfd8] sm:$0xff]
    %v2149 = vld [vmem:[#allocation23 + $0xfe0] sm:$0xff]
    %v2150 = vld [vmem:[#allocation23 + $0xfe8] sm:$0xff]
    %v2151 = vld [vmem:[#allocation23 + $0xff0] sm:$0xff]
    %v2152 = vld [vmem:[#allocation23 + $0xff8] sm:$0xff]
    %v2153 = vld [vmem:[#allocation24] sm:$0xff]
    %v2155 = vlaneseq
    %v2156 = vshrl.u32 %v2155, 7
    %v2157 = vsub.s32 0, %v2156
    %v2158 = vrot.slane %v2153, %v2157
    %v2159 = vlaneseq
    %v2160 = vshrl.u32 %v2159, 7
    %v2161 = vsub.s32 1, %v2160
    %v2162 = vrot.slane %v2153, %v2161
    %v2163 = vlaneseq
    %v2164 = vshrl.u32 %v2163, 7
    %v2165 = vsub.s32 2, %v2164
    %v2166 = vrot.slane %v2153, %v2165
    %v2167 = vlaneseq
    %v2168 = vshrl.u32 %v2167, 7
    %v2169 = vsub.s32 3, %v2168
    %v2170 = vrot.slane %v2153, %v2169
    %v2171 = vlaneseq
    %v2172 = vshrl.u32 %v2171, 7
    %v2173 = vsub.s32 4, %v2172
    %v2174 = vrot.slane %v2153, %v2173
    %v2175 = vlaneseq
    %v2176 = vshrl.u32 %v2175, 7
    %v2177 = vsub.s32 5, %v2176
    %v2178 = vrot.slane %v2153, %v2177
    %v2179 = vlaneseq
    %v2180 = vshrl.u32 %v2179, 7
    %v2181 = vsub.s32 6, %v2180
    %v2182 = vrot.slane %v2153, %v2181
    %v2183 = vlaneseq
    %v2184 = vshrl.u32 %v2183, 7
    %v2185 = vsub.s32 7, %v2184
    %v2186 = vrot.slane %v2153, %v2185
    %2195 = vmatprep.subr.mxu0 %v1642
    %2196 = vmatpush1.msra.mxu0 %v1641
    %2197 = vmatprep.subr.mxu0 %v1650
    %2198 = vmatpush1.msra.mxu0 %v1649
    %2199 = vmatprep.subr.mxu0 %v1658
    %2200 = vmatpush1.msra.mxu0 %v1657
    %2201 = vmatprep.subr.mxu0 %v1666
    %2202 = vmatpush1.msra.mxu0 %v1665
    %2203 = vmatprep.subr.mxu0 %v1674
    %2204 = vmatpush1.msra.mxu0 %v1673
    %2205 = vmatprep.subr.mxu0 %v1682
    %2206 = vmatpush1.msra.mxu0 %v1681
    %2207 = vmatprep.subr.mxu0 %v1690
    %2208 = vmatpush1.msra.mxu0 %v1689
    %2209 = vmatprep.subr.mxu0 %v1698
    %2210 = vmatpush1.msra.mxu0 %v1697
    %2211 = vmatprep.subr.mxu0 %v1706
    %2212 = vmatpush1.msra.mxu0 %v1705
    %2213 = vmatprep.subr.mxu0 %v1714
    %2214 = vmatpush1.msra.mxu0 %v1713
    %2215 = vmatprep.subr.mxu0 %v1722
    %2216 = vmatpush1.msra.mxu0 %v1721
    %2217 = vmatprep.subr.mxu0 %v1730
    %2218 = vmatpush1.msra.mxu0 %v1729
    %2219 = vmatprep.subr.mxu0 %v1738
    %2220 = vmatpush1.msra.mxu0 %v1737
    %2221 = vmatprep.subr.mxu0 %v1746
    %2222 = vmatpush1.msra.mxu0 %v1745
    %2223 = vmatprep.subr.mxu0 %v1754
    %2224 = vmatpush1.msra.mxu0 %v1753
    %2225 = vmatprep.subr.mxu0 %v1762
    %2226 = vmatpush1.msra.mxu0 %v1761
    %2227 = vmatprep.subr.mxu0 %v1770
    %2228 = vmatpush1.msra.mxu0 %v1769
    %2229 = vmatprep.subr.mxu0 %v1778
    %2230 = vmatpush1.msra.mxu0 %v1777
    %2231 = vmatprep.subr.mxu0 %v1786
    %2232 = vmatpush1.msra.mxu0 %v1785
    %2233 = vmatprep.subr.mxu0 %v1794
    %2234 = vmatpush1.msra.mxu0 %v1793
    %2235 = vmatprep.subr.mxu0 %v1802
    %2236 = vmatpush1.msra.mxu0 %v1801
    %2237 = vmatprep.subr.mxu0 %v1810
    %2238 = vmatpush1.msra.mxu0 %v1809
    %2239 = vmatprep.subr.mxu0 %v1818
    %2240 = vmatpush1.msra.mxu0 %v1817
    %2241 = vmatprep.subr.mxu0 %v1826
    %2242 = vmatpush1.msra.mxu0 %v1825
    %2243 = vmatprep.subr.mxu0 %v1834
    %2244 = vmatpush1.msra.mxu0 %v1833
    %2245 = vmatprep.subr.mxu0 %v1842
    %2246 = vmatpush1.msra.mxu0 %v1841
    %2247 = vmatprep.subr.mxu0 %v1850
    %2248 = vmatpush1.msra.mxu0 %v1849
    %2249 = vmatprep.subr.mxu0 %v1858
    %2250 = vmatpush1.msra.mxu0 %v1857
    %2251 = vmatprep.subr.mxu0 %v1866
    %2252 = vmatpush1.msra.mxu0 %v1865
    %2253 = vmatprep.subr.mxu0 %v1874
    %2254 = vmatpush1.msra.mxu0 %v1873
    %2255 = vmatprep.subr.mxu0 %v1882
    %2256 = vmatpush1.msra.mxu0 %v1881
    %2257 = vmatprep.subr.mxu0 %v1890
    %2258 = vmatpush1.msra.mxu0 %v1889
    %2259 = vmatprep.mubr.f32.mxu0 %v1638
    %2260 = vmatmul.mubr.f32.gmra.mrb[0].mxu0 %v1637
    %v2261 = vpop.f32.mrb[0].mxu0
    %v2262 = vadd.f32 %v2158, %v2261
    %v2263 = vpop.f32.mrb[0].mxu0
    %v2264 = vadd.f32 %v2162, %v2263
    %2265 = vdwg.mxu0
    %2266 = vmatprep.subr.mxu0 %v1898
    %2267 = vmatpush1.msra.mxu0 %v1897
    %2268 = vmatprep.subr.mxu0 %v1906
    %2269 = vmatpush1.msra.mxu0 %v1905
    %2270 = vmatprep.subr.mxu0 %v1914
    %2271 = vmatpush1.msra.mxu0 %v1913
    %2272 = vmatprep.subr.mxu0 %v1922
    %2273 = vmatpush1.msra.mxu0 %v1921
    %2274 = vmatprep.subr.mxu0 %v1930
    %2275 = vmatpush1.msra.mxu0 %v1929
    %2276 = vmatprep.subr.mxu0 %v1938
    %2277 = vmatpush1.msra.mxu0 %v1937
    %2278 = vmatprep.subr.mxu0 %v1946
    %2279 = vmatpush1.msra.mxu0 %v1945
    %2280 = vmatprep.subr.mxu0 %v1954
    %2281 = vmatpush1.msra.mxu0 %v1953
    %2282 = vmatprep.subr.mxu0 %v1962
    %2283 = vmatpush1.msra.mxu0 %v1961
    %2284 = vmatprep.subr.mxu0 %v1970
    %2285 = vmatpush1.msra.mxu0 %v1969
    %2286 = vmatprep.subr.mxu0 %v1978
    %2287 = vmatpush1.msra.mxu0 %v1977
    %2288 = vmatprep.subr.mxu0 %v1986
    %2289 = vmatpush1.msra.mxu0 %v1985
    %2290 = vmatprep.subr.mxu0 %v1994
    %2291 = vmatpush1.msra.mxu0 %v1993
    %2292 = vmatprep.subr.mxu0 %v2002
    %2293 = vmatpush1.msra.mxu0 %v2001
    %2294 = vmatprep.subr.mxu0 %v2010
    %2295 = vmatpush1.msra.mxu0 %v2009
    %2296 = vmatprep.subr.mxu0 %v2018
    %2297 = vmatpush1.msra.mxu0 %v2017
    %2298 = vmatprep.subr.mxu0 %v2026
    %2299 = vmatpush1.msra.mxu0 %v2025
    %2300 = vmatprep.subr.mxu0 %v2034
    %2301 = vmatpush1.msra.mxu0 %v2033
    %2302 = vmatprep.subr.mxu0 %v2042
    %2303 = vmatpush1.msra.mxu0 %v2041
    %2304 = vmatprep.subr.mxu0 %v2050
    %2305 = vmatpush1.msra.mxu0 %v2049
    %2306 = vmatprep.subr.mxu0 %v2058
    %2307 = vmatpush1.msra.mxu0 %v2057
    %2308 = vmatprep.subr.mxu0 %v2066
    %2309 = vmatpush1.msra.mxu0 %v2065
    %2310 = vmatprep.subr.mxu0 %v2074
    %2311 = vmatpush1.msra.mxu0 %v2073
    %2312 = vmatprep.subr.mxu0 %v2082
    %2313 = vmatpush1.msra.mxu0 %v2081
    %2314 = vmatprep.subr.mxu0 %v2090
    %2315 = vmatpush1.msra.mxu0 %v2089
    %2316 = vmatprep.subr.mxu0 %v2098
    %2317 = vmatpush1.msra.mxu0 %v2097
    %2318 = vmatprep.subr.mxu0 %v2106
    %2319 = vmatpush1.msra.mxu0 %v2105
    %2320 = vmatprep.subr.mxu0 %v2114
    %2321 = vmatpush1.msra.mxu0 %v2113
    %2322 = vmatprep.subr.mxu0 %v2122
    %2323 = vmatpush1.msra.mxu0 %v2121
    %2324 = vmatprep.subr.mxu0 %v2130
    %2325 = vmatpush1.msra.mxu0 %v2129
    %2326 = vmatprep.subr.mxu0 %v2138
    %2327 = vmatpush1.msra.mxu0 %v2137
    %2328 = vmatprep.subr.mxu0 %v2146
    %2329 = vmatpush1.msra.mxu0 %v2145
    %2330 = vmatprep.mubr.f32.mxu0 %v1640
    %2331 = vmatmul.mubr.f32.gmra.mrb[0].mxu0 %v1639
    %v2332 = vpop.f32.mrb[0].mxu0
    %v2333 = vadd.f32 %v2262, %v2332
    %v2334 = vpop.f32.mrb[0].mxu0
    %v2335 = vadd.f32 %v2264, %v2334
    %2336 = vdwg.mxu0
    %2337 = vmatprep.subr.mxu0 %v1644
    %2338 = vmatpush1.msra.mxu0 %v1643
    %2339 = vmatprep.subr.mxu0 %v1652
    %2340 = vmatpush1.msra.mxu0 %v1651
    %2341 = vmatprep.subr.mxu0 %v1660
    %2342 = vmatpush1.msra.mxu0 %v1659
    %2343 = vmatprep.subr.mxu0 %v1668
    %2344 = vmatpush1.msra.mxu0 %v1667
    %2345 = vmatprep.subr.mxu0 %v1676
    %2346 = vmatpush1.msra.mxu0 %v1675
    %2347 = vmatprep.subr.mxu0 %v1684
    %2348 = vmatpush1.msra.mxu0 %v1683
    %2349 = vmatprep.subr.mxu0 %v1692
    %2350 = vmatpush1.msra.mxu0 %v1691
    %2351 = vmatprep.subr.mxu0 %v1700
    %2352 = vmatpush1.msra.mxu0 %v1699
    %2353 = vmatprep.subr.mxu0 %v1708
    %2354 = vmatpush1.msra.mxu0 %v1707
    %2355 = vmatprep.subr.mxu0 %v1716
    %2356 = vmatpush1.msra.mxu0 %v1715
    %2357 = vmatprep.subr.mxu0 %v1724
    %2358 = vmatpush1.msra.mxu0 %v1723
    %2359 = vmatprep.subr.mxu0 %v1732
    %2360 = vmatpush1.msra.mxu0 %v1731
    %2361 = vmatprep.subr.mxu0 %v1740
    %2362 = vmatpush1.msra.mxu0 %v1739
    %2363 = vmatprep.subr.mxu0 %v1748
    %2364 = vmatpush1.msra.mxu0 %v1747
    %2365 = vmatprep.subr.mxu0 %v1756
    %2366 = vmatpush1.msra.mxu0 %v1755
    %2367 = vmatprep.subr.mxu0 %v1764
    %2368 = vmatpush1.msra.mxu0 %v1763
    %2369 = vmatprep.subr.mxu0 %v1772
    %2370 = vmatpush1.msra.mxu0 %v1771
    %2371 = vmatprep.subr.mxu0 %v1780
    %2372 = vmatpush1.msra.mxu0 %v1779
    %2373 = vmatprep.subr.mxu0 %v1788
    %2374 = vmatpush1.msra.mxu0 %v1787
    %2375 = vmatprep.subr.mxu0 %v1796
    %2376 = vmatpush1.msra.mxu0 %v1795
    %2377 = vmatprep.subr.mxu0 %v1804
    %2378 = vmatpush1.msra.mxu0 %v1803
    %2379 = vmatprep.subr.mxu0 %v1812
    %2380 = vmatpush1.msra.mxu0 %v1811
    %2381 = vmatprep.subr.mxu0 %v1820
    %2382 = vmatpush1.msra.mxu0 %v1819
    %2383 = vmatprep.subr.mxu0 %v1828
    %2384 = vmatpush1.msra.mxu0 %v1827
    %2385 = vmatprep.subr.mxu0 %v1836
    %2386 = vmatpush1.msra.mxu0 %v1835
    %2387 = vmatprep.subr.mxu0 %v1844
    %2388 = vmatpush1.msra.mxu0 %v1843
    %2389 = vmatprep.subr.mxu0 %v1852
    %2390 = vmatpush1.msra.mxu0 %v1851
    %2391 = vmatprep.subr.mxu0 %v1860
    %2392 = vmatpush1.msra.mxu0 %v1859
    %2393 = vmatprep.subr.mxu0 %v1868
    %2394 = vmatpush1.msra.mxu0 %v1867
    %2395 = vmatprep.subr.mxu0 %v1876
    %2396 = vmatpush1.msra.mxu0 %v1875
    %2397 = vmatprep.subr.mxu0 %v1884
    %2398 = vmatpush1.msra.mxu0 %v1883
    %2399 = vmatprep.subr.mxu0 %v1892
    %2400 = vmatpush1.msra.mxu0 %v1891
    %2401 = vmatprep.mubr.f32.mxu0 %v1638
    %2402 = vmatmul.mubr.f32.gmra.mrb[0].mxu0 %v1637
    %v2403 = vpop.f32.mrb[0].mxu0
    %v2404 = vadd.f32 %v2166, %v2403
    %v2405 = vpop.f32.mrb[0].mxu0
    %v2406 = vadd.f32 %v2170, %v2405
    %2407 = vdwg.mxu0
    %2408 = vmatprep.subr.mxu0 %v1900
    %2409 = vmatpush1.msra.mxu0 %v1899
    %2410 = vmatprep.subr.mxu0 %v1908
    %2411 = vmatpush1.msra.mxu0 %v1907
    %2412 = vmatprep.subr.mxu0 %v1916
    %2413 = vmatpush1.msra.mxu0 %v1915
    %2414 = vmatprep.subr.mxu0 %v1924
    %2415 = vmatpush1.msra.mxu0 %v1923
    %2416 = vmatprep.subr.mxu0 %v1932
    %2417 = vmatpush1.msra.mxu0 %v1931
    %2418 = vmatprep.subr.mxu0 %v1940
    %2419 = vmatpush1.msra.mxu0 %v1939
    %2420 = vmatprep.subr.mxu0 %v1948
    %2421 = vmatpush1.msra.mxu0 %v1947
    %2422 = vmatprep.subr.mxu0 %v1956
    %2423 = vmatpush1.msra.mxu0 %v1955
    %2424 = vmatprep.subr.mxu0 %v1964
    %2425 = vmatpush1.msra.mxu0 %v1963
    %2426 = vmatprep.subr.mxu0 %v1972
    %2427 = vmatpush1.msra.mxu0 %v1971
    %2428 = vmatprep.subr.mxu0 %v1980
    %2429 = vmatpush1.msra.mxu0 %v1979
    %2430 = vmatprep.subr.mxu0 %v1988
    %2431 = vmatpush1.msra.mxu0 %v1987
    %2432 = vmatprep.subr.mxu0 %v1996
    %2433 = vmatpush1.msra.mxu0 %v1995
    %2434 = vmatprep.subr.mxu0 %v2004
    %2435 = vmatpush1.msra.mxu0 %v2003
    %2436 = vmatprep.subr.mxu0 %v2012
    %2437 = vmatpush1.msra.mxu0 %v2011
    %2438 = vmatprep.subr.mxu0 %v2020
    %2439 = vmatpush1.msra.mxu0 %v2019
    %2440 = vmatprep.subr.mxu0 %v2028
    %2441 = vmatpush1.msra.mxu0 %v2027
    %2442 = vmatprep.subr.mxu0 %v2036
    %2443 = vmatpush1.msra.mxu0 %v2035
    %2444 = vmatprep.subr.mxu0 %v2044
    %2445 = vmatpush1.msra.mxu0 %v2043
    %2446 = vmatprep.subr.mxu0 %v2052
    %2447 = vmatpush1.msra.mxu0 %v2051
    %2448 = vmatprep.subr.mxu0 %v2060
    %2449 = vmatpush1.msra.mxu0 %v2059
    %2450 = vmatprep.subr.mxu0 %v2068
    %2451 = vmatpush1.msra.mxu0 %v2067
    %2452 = vmatprep.subr.mxu0 %v2076
    %2453 = vmatpush1.msra.mxu0 %v2075
    %2454 = vmatprep.subr.mxu0 %v2084
    %2455 = vmatpush1.msra.mxu0 %v2083
    %2456 = vmatprep.subr.mxu0 %v2092
    %2457 = vmatpush1.msra.mxu0 %v2091
    %2458 = vmatprep.subr.mxu0 %v2100
    %2459 = vmatpush1.msra.mxu0 %v2099
    %2460 = vmatprep.subr.mxu0 %v2108
    %2461 = vmatpush1.msra.mxu0 %v2107
    %2462 = vmatprep.subr.mxu0 %v2116
    %2463 = vmatpush1.msra.mxu0 %v2115
    %2464 = vmatprep.subr.mxu0 %v2124
    %2465 = vmatpush1.msra.mxu0 %v2123
    %2466 = vmatprep.subr.mxu0 %v2132
    %2467 = vmatpush1.msra.mxu0 %v2131
    %2468 = vmatprep.subr.mxu0 %v2140
    %2469 = vmatpush1.msra.mxu0 %v2139
    %2470 = vmatprep.subr.mxu0 %v2148
    %2471 = vmatpush1.msra.mxu0 %v2147
    %2472 = vmatprep.mubr.f32.mxu0 %v1640
    %2473 = vmatmul.mubr.f32.gmra.mrb[0].mxu0 %v1639
    %v2474 = vpop.f32.mrb[0].mxu0
    %v2475 = vadd.f32 %v2404, %v2474
    %v2476 = vpop.f32.mrb[0].mxu0
    %v2477 = vadd.f32 %v2406, %v2476
    %2478 = vdwg.mxu0
    %2479 = vmatprep.subr.mxu0 %v1646
    %2480 = vmatpush1.msra.mxu0 %v1645
    %2481 = vmatprep.subr.mxu0 %v1654
    %2482 = vmatpush1.msra.mxu0 %v1653
    %2483 = vmatprep.subr.mxu0 %v1662
    %2484 = vmatpush1.msra.mxu0 %v1661
    %2485 = vmatprep.subr.mxu0 %v1670
    %2486 = vmatpush1.msra.mxu0 %v1669
    %2487 = vmatprep.subr.mxu0 %v1678
    %2488 = vmatpush1.msra.mxu0 %v1677
    %2489 = vmatprep.subr.mxu0 %v1686
    %2490 = vmatpush1.msra.mxu0 %v1685
    %2491 = vmatprep.subr.mxu0 %v1694
    %2492 = vmatpush1.msra.mxu0 %v1693
    %2493 = vmatprep.subr.mxu0 %v1702
    %2494 = vmatpush1.msra.mxu0 %v1701
    %2495 = vmatprep.subr.mxu0 %v1710
    %2496 = vmatpush1.msra.mxu0 %v1709
    %2497 = vmatprep.subr.mxu0 %v1718
    %2498 = vmatpush1.msra.mxu0 %v1717
    %2499 = vmatprep.subr.mxu0 %v1726
    %2500 = vmatpush1.msra.mxu0 %v1725
    %2501 = vmatprep.subr.mxu0 %v1734
    %2502 = vmatpush1.msra.mxu0 %v1733
    %2503 = vmatprep.subr.mxu0 %v1742
    %2504 = vmatpush1.msra.mxu0 %v1741
    %2505 = vmatprep.subr.mxu0 %v1750
    %2506 = vmatpush1.msra.mxu0 %v1749
    %2507 = vmatprep.subr.mxu0 %v1758
    %2508 = vmatpush1.msra.mxu0 %v1757
    %2509 = vmatprep.subr.mxu0 %v1766
    %2510 = vmatpush1.msra.mxu0 %v1765
    %2511 = vmatprep.subr.mxu0 %v1774
    %2512 = vmatpush1.msra.mxu0 %v1773
    %2513 = vmatprep.subr.mxu0 %v1782
    %2514 = vmatpush1.msra.mxu0 %v1781
    %2515 = vmatprep.subr.mxu0 %v1790
    %2516 = vmatpush1.msra.mxu0 %v1789
    %2517 = vmatprep.subr.mxu0 %v1798
    %2518 = vmatpush1.msra.mxu0 %v1797
    %2519 = vmatprep.subr.mxu0 %v1806
    %2520 = vmatpush1.msra.mxu0 %v1805
    %2521 = vmatprep.subr.mxu0 %v1814
    %2522 = vmatpush1.msra.mxu0 %v1813
    %2523 = vmatprep.subr.mxu0 %v1822
    %2524 = vmatpush1.msra.mxu0 %v1821
    %2525 = vmatprep.subr.mxu0 %v1830
    %2526 = vmatpush1.msra.mxu0 %v1829
    %2527 = vmatprep.subr.mxu0 %v1838
    %2528 = vmatpush1.msra.mxu0 %v1837
    %2529 = vmatprep.subr.mxu0 %v1846
    %2530 = vmatpush1.msra.mxu0 %v1845
    %2531 = vmatprep.subr.mxu0 %v1854
    %2532 = vmatpush1.msra.mxu0 %v1853
    %2533 = vmatprep.subr.mxu0 %v1862
    %2534 = vmatpush1.msra.mxu0 %v1861
    %2535 = vmatprep.subr.mxu0 %v1870
    %2536 = vmatpush1.msra.mxu0 %v1869
    %2537 = vmatprep.subr.mxu0 %v1878
    %2538 = vmatpush1.msra.mxu0 %v1877
    %2539 = vmatprep.subr.mxu0 %v1886
    %2540 = vmatpush1.msra.mxu0 %v1885
    %2541 = vmatprep.subr.mxu0 %v1894
    %2542 = vmatpush1.msra.mxu0 %v1893
    %2543 = vmatprep.mubr.f32.mxu0 %v1638
    %2544 = vmatmul.mubr.f32.gmra.mrb[0].mxu0 %v1637
    %v2545 = vpop.f32.mrb[0].mxu0
    %v2546 = vadd.f32 %v2174, %v2545
    %v2547 = vpop.f32.mrb[0].mxu0
    %v2548 = vadd.f32 %v2178, %v2547
    %2549 = vdwg.mxu0
    %2550 = vmatprep.subr.mxu0 %v1902
    %2551 = vmatpush1.msra.mxu0 %v1901
    %2552 = vmatprep.subr.mxu0 %v1910
    %2553 = vmatpush1.msra.mxu0 %v1909
    %2554 = vmatprep.subr.mxu0 %v1918
    %2555 = vmatpush1.msra.mxu0 %v1917
    %2556 = vmatprep.subr.mxu0 %v1926
    %2557 = vmatpush1.msra.mxu0 %v1925
    %2558 = vmatprep.subr.mxu0 %v1934
    %2559 = vmatpush1.msra.mxu0 %v1933
    %2560 = vmatprep.subr.mxu0 %v1942
    %2561 = vmatpush1.msra.mxu0 %v1941
    %2562 = vmatprep.subr.mxu0 %v1950
    %2563 = vmatpush1.msra.mxu0 %v1949
    %2564 = vmatprep.subr.mxu0 %v1958
    %2565 = vmatpush1.msra.mxu0 %v1957
    %2566 = vmatprep.subr.mxu0 %v1966
    %2567 = vmatpush1.msra.mxu0 %v1965
    %2568 = vmatprep.subr.mxu0 %v1974
    %2569 = vmatpush1.msra.mxu0 %v1973
    %2570 = vmatprep.subr.mxu0 %v1982
    %2571 = vmatpush1.msra.mxu0 %v1981
    %2572 = vmatprep.subr.mxu0 %v1990
    %2573 = vmatpush1.msra.mxu0 %v1989
    %2574 = vmatprep.subr.mxu0 %v1998
    %2575 = vmatpush1.msra.mxu0 %v1997
    %2576 = vmatprep.subr.mxu0 %v2006
    %2577 = vmatpush1.msra.mxu0 %v2005
    %2578 = vmatprep.subr.mxu0 %v2014
    %2579 = vmatpush1.msra.mxu0 %v2013
    %2580 = vmatprep.subr.mxu0 %v2022
    %2581 = vmatpush1.msra.mxu0 %v2021
    %2582 = vmatprep.subr.mxu0 %v2030
    %2583 = vmatpush1.msra.mxu0 %v2029
    %2584 = vmatprep.subr.mxu0 %v2038
    %2585 = vmatpush1.msra.mxu0 %v2037
    %2586 = vmatprep.subr.mxu0 %v2046
    %2587 = vmatpush1.msra.mxu0 %v2045
    %2588 = vmatprep.subr.mxu0 %v2054
    %2589 = vmatpush1.msra.mxu0 %v2053
    %2590 = vmatprep.subr.mxu0 %v2062
    %2591 = vmatpush1.msra.mxu0 %v2061
    %2592 = vmatprep.subr.mxu0 %v2070
    %2593 = vmatpush1.msra.mxu0 %v2069
    %2594 = vmatprep.subr.mxu0 %v2078
    %2595 = vmatpush1.msra.mxu0 %v2077
    %2596 = vmatprep.subr.mxu0 %v2086
    %2597 = vmatpush1.msra.mxu0 %v2085
    %2598 = vmatprep.subr.mxu0 %v2094
    %2599 = vmatpush1.msra.mxu0 %v2093
    %2600 = vmatprep.subr.mxu0 %v2102
    %2601 = vmatpush1.msra.mxu0 %v2101
    %2602 = vmatprep.subr.mxu0 %v2110
    %2603 = vmatpush1.msra.mxu0 %v2109
    %2604 = vmatprep.subr.mxu0 %v2118
    %2605 = vmatpush1.msra.mxu0 %v2117
    %2606 = vmatprep.subr.mxu0 %v2126
    %2607 = vmatpush1.msra.mxu0 %v2125
    %2608 = vmatprep.subr.mxu0 %v2134
    %2609 = vmatpush1.msra.mxu0 %v2133
    %2610 = vmatprep.subr.mxu0 %v2142
    %2611 = vmatpush1.msra.mxu0 %v2141
    %2612 = vmatprep.subr.mxu0 %v2150
    %2613 = vmatpush1.msra.mxu0 %v2149
    %2614 = vmatprep.mubr.f32.mxu0 %v1640
    %2615 = vmatmul.mubr.f32.gmra.mrb[0].mxu0 %v1639
    %v2616 = vpop.f32.mrb[0].mxu0
    %v2617 = vadd.f32 %v2546, %v2616
    %v2618 = vpop.f32.mrb[0].mxu0
    %v2619 = vadd.f32 %v2548, %v2618
    %2620 = vdwg.mxu0
    %2621 = vmatprep.subr.mxu0 %v1648
    %2622 = vmatpush1.msra.mxu0 %v1647
    %2623 = vmatprep.subr.mxu0 %v1656
    %2624 = vmatpush1.msra.mxu0 %v1655
    %2625 = vmatprep.subr.mxu0 %v1664
    %2626 = vmatpush1.msra.mxu0 %v1663
    %2627 = vmatprep.subr.mxu0 %v1672
    %2628 = vmatpush1.msra.mxu0 %v1671
    %2629 = vmatprep.subr.mxu0 %v1680
    %2630 = vmatpush1.msra.mxu0 %v1679
    %2631 = vmatprep.subr.mxu0 %v1688
    %2632 = vmatpush1.msra.mxu0 %v1687
    %2633 = vmatprep.subr.mxu0 %v1696
    %2634 = vmatpush1.msra.mxu0 %v1695
    %2635 = vmatprep.subr.mxu0 %v1704
    %2636 = vmatpush1.msra.mxu0 %v1703
    %2637 = vmatprep.subr.mxu0 %v1712
    %2638 = vmatpush1.msra.mxu0 %v1711
    %2639 = vmatprep.subr.mxu0 %v1720
    %2640 = vmatpush1.msra.mxu0 %v1719
    %2641 = vmatprep.subr.mxu0 %v1728
    %2642 = vmatpush1.msra.mxu0 %v1727
    %2643 = vmatprep.subr.mxu0 %v1736
    %2644 = vmatpush1.msra.mxu0 %v1735
    %2645 = vmatprep.subr.mxu0 %v1744
    %2646 = vmatpush1.msra.mxu0 %v1743
    %2647 = vmatprep.subr.mxu0 %v1752
    %2648 = vmatpush1.msra.mxu0 %v1751
    %2649 = vmatprep.subr.mxu0 %v1760
    %2650 = vmatpush1.msra.mxu0 %v1759
    %2651 = vmatprep.subr.mxu0 %v1768
    %2652 = vmatpush1.msra.mxu0 %v1767
    %2653 = vmatprep.subr.mxu0 %v1776
    %2654 = vmatpush1.msra.mxu0 %v1775
    %2655 = vmatprep.subr.mxu0 %v1784
    %2656 = vmatpush1.msra.mxu0 %v1783
    %2657 = vmatprep.subr.mxu0 %v1792
    %2658 = vmatpush1.msra.mxu0 %v1791
    %2659 = vmatprep.subr.mxu0 %v1800
    %2660 = vmatpush1.msra.mxu0 %v1799
    %2661 = vmatprep.subr.mxu0 %v1808
    %2662 = vmatpush1.msra.mxu0 %v1807
    %2663 = vmatprep.subr.mxu0 %v1816
    %2664 = vmatpush1.msra.mxu0 %v1815
    %2665 = vmatprep.subr.mxu0 %v1824
    %2666 = vmatpush1.msra.mxu0 %v1823
    %2667 = vmatprep.subr.mxu0 %v1832
    %2668 = vmatpush1.msra.mxu0 %v1831
    %2669 = vmatprep.subr.mxu0 %v1840
    %2670 = vmatpush1.msra.mxu0 %v1839
    %2671 = vmatprep.subr.mxu0 %v1848
    %2672 = vmatpush1.msra.mxu0 %v1847
    %2673 = vmatprep.subr.mxu0 %v1856
    %2674 = vmatpush1.msra.mxu0 %v1855
    %2675 = vmatprep.subr.mxu0 %v1864
    %2676 = vmatpush1.msra.mxu0 %v1863
    %2677 = vmatprep.subr.mxu0 %v1872
    %2678 = vmatpush1.msra.mxu0 %v1871
    %2679 = vmatprep.subr.mxu0 %v1880
    %2680 = vmatpush1.msra.mxu0 %v1879
    %2681 = vmatprep.subr.mxu0 %v1888
    %2682 = vmatpush1.msra.mxu0 %v1887
    %2683 = vmatprep.subr.mxu0 %v1896
    %2684 = vmatpush1.msra.mxu0 %v1895
    %2685 = vmatprep.mubr.f32.mxu0 %v1638
    %2686 = vmatmul.mubr.f32.gmra.mrb[0].mxu0 %v1637
    %v2687 = vpop.f32.mrb[0].mxu0
    %v2688 = vadd.f32 %v2182, %v2687
    %v2689 = vpop.f32.mrb[0].mxu0
    %v2690 = vadd.f32 %v2186, %v2689
    %2691 = vdwg.mxu0
    %2692 = vmatprep.subr.mxu0 %v1904
    %2693 = vmatpush1.msra.mxu0 %v1903
    %2694 = vmatprep.subr.mxu0 %v1912
    %2695 = vmatpush1.msra.mxu0 %v1911
    %2696 = vmatprep.subr.mxu0 %v1920
    %2697 = vmatpush1.msra.mxu0 %v1919
    %2698 = vmatprep.subr.mxu0 %v1928
    %2699 = vmatpush1.msra.mxu0 %v1927
    %2700 = vmatprep.subr.mxu0 %v1936
    %2701 = vmatpush1.msra.mxu0 %v1935
    %2702 = vmatprep.subr.mxu0 %v1944
    %2703 = vmatpush1.msra.mxu0 %v1943
    %2704 = vmatprep.subr.mxu0 %v1952
    %2705 = vmatpush1.msra.mxu0 %v1951
    %2706 = vmatprep.subr.mxu0 %v1960
    %2707 = vmatpush1.msra.mxu0 %v1959
    %2708 = vmatprep.subr.mxu0 %v1968
    %2709 = vmatpush1.msra.mxu0 %v1967
    %2710 = vmatprep.subr.mxu0 %v1976
    %2711 = vmatpush1.msra.mxu0 %v1975
    %2712 = vmatprep.subr.mxu0 %v1984
    %2713 = vmatpush1.msra.mxu0 %v1983
    %2714 = vmatprep.subr.mxu0 %v1992
    %2715 = vmatpush1.msra.mxu0 %v1991
    %2716 = vmatprep.subr.mxu0 %v2000
    %2717 = vmatpush1.msra.mxu0 %v1999
    %2718 = vmatprep.subr.mxu0 %v2008
    %2719 = vmatpush1.msra.mxu0 %v2007
    %2720 = vmatprep.subr.mxu0 %v2016
    %2721 = vmatpush1.msra.mxu0 %v2015
    %2722 = vmatprep.subr.mxu0 %v2024
    %2723 = vmatpush1.msra.mxu0 %v2023
    %2724 = vmatprep.subr.mxu0 %v2032
    %2725 = vmatpush1.msra.mxu0 %v2031
    %2726 = vmatprep.subr.mxu0 %v2040
    %2727 = vmatpush1.msra.mxu0 %v2039
    %2728 = vmatprep.subr.mxu0 %v2048
    %2729 = vmatpush1.msra.mxu0 %v2047
    %2730 = vmatprep.subr.mxu0 %v2056
    %2731 = vmatpush1.msra.mxu0 %v2055
    %2732 = vmatprep.subr.mxu0 %v2064
    %2733 = vmatpush1.msra.mxu0 %v2063
    %2734 = vmatprep.subr.mxu0 %v2072
    %2735 = vmatpush1.msra.mxu0 %v2071
    %2736 = vmatprep.subr.mxu0 %v2080
    %2737 = vmatpush1.msra.mxu0 %v2079
    %2738 = vmatprep.subr.mxu0 %v2088
    %2739 = vmatpush1.msra.mxu0 %v2087
    %2740 = vmatprep.subr.mxu0 %v2096
    %2741 = vmatpush1.msra.mxu0 %v2095
    %2742 = vmatprep.subr.mxu0 %v2104
    %2743 = vmatpush1.msra.mxu0 %v2103
    %2744 = vmatprep.subr.mxu0 %v2112
    %2745 = vmatpush1.msra.mxu0 %v2111
    %2746 = vmatprep.subr.mxu0 %v2120
    %2747 = vmatpush1.msra.mxu0 %v2119
    %2748 = vmatprep.subr.mxu0 %v2128
    %2749 = vmatpush1.msra.mxu0 %v2127
    %2750 = vmatprep.subr.mxu0 %v2136
    %2751 = vmatpush1.msra.mxu0 %v2135
    %2752 = vmatprep.subr.mxu0 %v2144
    %2753 = vmatpush1.msra.mxu0 %v2143
    %2754 = vmatprep.subr.mxu0 %v2152
    %2755 = vmatpush1.msra.mxu0 %v2151
    %2756 = vmatprep.mubr.f32.mxu0 %v1640
    %2757 = vmatmul.mubr.f32.gmra.mrb[0].mxu0 %v1639
    %v2758 = vpop.f32.mrb[0].mxu0
    %v2759 = vadd.f32 %v2688, %v2758
    %v2760 = vpop.f32.mrb[0].mxu0
    %v2761 = vadd.f32 %v2690, %v2760
    %2762 = vdwg.mxu0
    %v2763 = vmax.f32 %v2333, 0.0
    %v2764 = vmax.f32 %v2335, 0.0
    %v2765 = vmax.f32 %v2475, 0.0
    %v2766 = vmax.f32 %v2477, 0.0
    %v2767 = vmax.f32 %v2617, 0.0
    %v2768 = vmax.f32 %v2619, 0.0
    %v2769 = vmax.f32 %v2759, 0.0
    %v2770 = vmax.f32 %v2761, 0.0
    %v2771 = vld [vmem:[#allocation26] sm:$0xff]
    %v2772 = vld [vmem:[#allocation26 + $0x8] sm:$0xff]
    %v2773 = vld [vmem:[#allocation26 + $0x10] sm:$0xff]
    %v2774 = vld [vmem:[#allocation26 + $0x18] sm:$0xff]
    %v2775 = vld [vmem:[#allocation26 + $0x20] sm:$0xff]
    %v2776 = vld [vmem:[#allocation26 + $0x28] sm:$0xff]
    %v2777 = vld [vmem:[#allocation26 + $0x30] sm:$0xff]
    %v2778 = vld [vmem:[#allocation26 + $0x38] sm:$0xff]
    %v2779 = vld [vmem:[#allocation26 + $0x40] sm:$0xff]
    %v2780 = vld [vmem:[#allocation26 + $0x48] sm:$0xff]
    %v2781 = vld [vmem:[#allocation26 + $0x50] sm:$0xff]
    %v2782 = vld [vmem:[#allocation26 + $0x58] sm:$0xff]
    %v2783 = vld [vmem:[#allocation26 + $0x60] sm:$0xff]
    %v2784 = vld [vmem:[#allocation26 + $0x68] sm:$0xff]
    %v2785 = vld [vmem:[#allocation26 + $0x70] sm:$0xff]
    %v2786 = vld [vmem:[#allocation26 + $0x78] sm:$0xff]
    %v2787 = vld [vmem:[#allocation26 + $0x80] sm:$0xff]
    %v2788 = vld [vmem:[#allocation26 + $0x88] sm:$0xff]
    %v2789 = vld [vmem:[#allocation26 + $0x90] sm:$0xff]
    %v2790 = vld [vmem:[#allocation26 + $0x98] sm:$0xff]
    %v2791 = vld [vmem:[#allocation26 + $0xa0] sm:$0xff]
    %v2792 = vld [vmem:[#allocation26 + $0xa8] sm:$0xff]
    %v2793 = vld [vmem:[#allocation26 + $0xb0] sm:$0xff]
    %v2794 = vld [vmem:[#allocation26 + $0xb8] sm:$0xff]
    %v2795 = vld [vmem:[#allocation26 + $0xc0] sm:$0xff]
    %v2796 = vld [vmem:[#allocation26 + $0xc8] sm:$0xff]
    %v2797 = vld [vmem:[#allocation26 + $0xd0] sm:$0xff]
    %v2798 = vld [vmem:[#allocation26 + $0xd8] sm:$0xff]
    %v2799 = vld [vmem:[#allocation26 + $0xe0] sm:$0xff]
    %v2800 = vld [vmem:[#allocation26 + $0xe8] sm:$0xff]
    %v2801 = vld [vmem:[#allocation26 + $0xf0] sm:$0xff]
    %v2802 = vld [vmem:[#allocation26 + $0xf8] sm:$0xff]
    %v2803 = vld [vmem:[#allocation26 + $0x100] sm:$0xff]
    %v2804 = vld [vmem:[#allocation26 + $0x108] sm:$0xff]
    %v2805 = vld [vmem:[#allocation26 + $0x110] sm:$0xff]
    %v2806 = vld [vmem:[#allocation26 + $0x118] sm:$0xff]
    %v2807 = vld [vmem:[#allocation26 + $0x120] sm:$0xff]
    %v2808 = vld [vmem:[#allocation26 + $0x128] sm:$0xff]
    %v2809 = vld [vmem:[#allocation26 + $0x130] sm:$0xff]
    %v2810 = vld [vmem:[#allocation26 + $0x138] sm:$0xff]
    %v2811 = vld [vmem:[#allocation26 + $0x140] sm:$0xff]
    %v2812 = vld [vmem:[#allocation26 + $0x148] sm:$0xff]
    %v2813 = vld [vmem:[#allocation26 + $0x150] sm:$0xff]
    %v2814 = vld [vmem:[#allocation26 + $0x158] sm:$0xff]
    %v2815 = vld [vmem:[#allocation26 + $0x160] sm:$0xff]
    %v2816 = vld [vmem:[#allocation26 + $0x168] sm:$0xff]
    %v2817 = vld [vmem:[#allocation26 + $0x170] sm:$0xff]
    %v2818 = vld [vmem:[#allocation26 + $0x178] sm:$0xff]
    %v2819 = vld [vmem:[#allocation26 + $0x180] sm:$0xff]
    %v2820 = vld [vmem:[#allocation26 + $0x188] sm:$0xff]
    %v2821 = vld [vmem:[#allocation26 + $0x190] sm:$0xff]
    %v2822 = vld [vmem:[#allocation26 + $0x198] sm:$0xff]
    %v2823 = vld [vmem:[#allocation26 + $0x1a0] sm:$0xff]
    %v2824 = vld [vmem:[#allocation26 + $0x1a8] sm:$0xff]
    %v2825 = vld [vmem:[#allocation26 + $0x1b0] sm:$0xff]
    %v2826 = vld [vmem:[#allocation26 + $0x1b8] sm:$0xff]
    %v2827 = vld [vmem:[#allocation26 + $0x1c0] sm:$0xff]
    %v2828 = vld [vmem:[#allocation26 + $0x1c8] sm:$0xff]
    %v2829 = vld [vmem:[#allocation26 + $0x1d0] sm:$0xff]
    %v2830 = vld [vmem:[#allocation26 + $0x1d8] sm:$0xff]
    %v2831 = vld [vmem:[#allocation26 + $0x1e0] sm:$0xff]
    %v2832 = vld [vmem:[#allocation26 + $0x1e8] sm:$0xff]
    %v2833 = vld [vmem:[#allocation26 + $0x1f0] sm:$0xff]
    %v2834 = vld [vmem:[#allocation26 + $0x1f8] sm:$0xff]
    %v2835 = vld [vmem:[#allocation26 + $0x200] sm:$0xff]
    %v2836 = vld [vmem:[#allocation26 + $0x208] sm:$0xff]
    %v2837 = vld [vmem:[#allocation26 + $0x210] sm:$0xff]
    %v2838 = vld [vmem:[#allocation26 + $0x218] sm:$0xff]
    %v2839 = vld [vmem:[#allocation26 + $0x220] sm:$0xff]
    %v2840 = vld [vmem:[#allocation26 + $0x228] sm:$0xff]
    %v2841 = vld [vmem:[#allocation26 + $0x230] sm:$0xff]
    %v2842 = vld [vmem:[#allocation26 + $0x238] sm:$0xff]
    %v2843 = vld [vmem:[#allocation26 + $0x240] sm:$0xff]
    %v2844 = vld [vmem:[#allocation26 + $0x248] sm:$0xff]
    %v2845 = vld [vmem:[#allocation26 + $0x250] sm:$0xff]
    %v2846 = vld [vmem:[#allocation26 + $0x258] sm:$0xff]
    %v2847 = vld [vmem:[#allocation26 + $0x260] sm:$0xff]
    %v2848 = vld [vmem:[#allocation26 + $0x268] sm:$0xff]
    %v2849 = vld [vmem:[#allocation26 + $0x270] sm:$0xff]
    %v2850 = vld [vmem:[#allocation26 + $0x278] sm:$0xff]
    %v2851 = vld [vmem:[#allocation26 + $0x280] sm:$0xff]
    %v2852 = vld [vmem:[#allocation26 + $0x288] sm:$0xff]
    %v2853 = vld [vmem:[#allocation26 + $0x290] sm:$0xff]
    %v2854 = vld [vmem:[#allocation26 + $0x298] sm:$0xff]
    %v2855 = vld [vmem:[#allocation26 + $0x2a0] sm:$0xff]
    %v2856 = vld [vmem:[#allocation26 + $0x2a8] sm:$0xff]
    %v2857 = vld [vmem:[#allocation26 + $0x2b0] sm:$0xff]
    %v2858 = vld [vmem:[#allocation26 + $0x2b8] sm:$0xff]
    %v2859 = vld [vmem:[#allocation26 + $0x2c0] sm:$0xff]
    %v2860 = vld [vmem:[#allocation26 + $0x2c8] sm:$0xff]
    %v2861 = vld [vmem:[#allocation26 + $0x2d0] sm:$0xff]
    %v2862 = vld [vmem:[#allocation26 + $0x2d8] sm:$0xff]
    %v2863 = vld [vmem:[#allocation26 + $0x2e0] sm:$0xff]
    %v2864 = vld [vmem:[#allocation26 + $0x2e8] sm:$0xff]
    %v2865 = vld [vmem:[#allocation26 + $0x2f0] sm:$0xff]
    %v2866 = vld [vmem:[#allocation26 + $0x2f8] sm:$0xff]
    %v2867 = vld [vmem:[#allocation26 + $0x300] sm:$0xff]
    %v2868 = vld [vmem:[#allocation26 + $0x308] sm:$0xff]
    %v2869 = vld [vmem:[#allocation26 + $0x310] sm:$0xff]
    %v2870 = vld [vmem:[#allocation26 + $0x318] sm:$0xff]
    %v2871 = vld [vmem:[#allocation26 + $0x320] sm:$0xff]
    %v2872 = vld [vmem:[#allocation26 + $0x328] sm:$0xff]
    %v2873 = vld [vmem:[#allocation26 + $0x330] sm:$0xff]
    %v2874 = vld [vmem:[#allocation26 + $0x338] sm:$0xff]
    %v2875 = vld [vmem:[#allocation26 + $0x340] sm:$0xff]
    %v2876 = vld [vmem:[#allocation26 + $0x348] sm:$0xff]
    %v2877 = vld [vmem:[#allocation26 + $0x350] sm:$0xff]
    %v2878 = vld [vmem:[#allocation26 + $0x358] sm:$0xff]
    %v2879 = vld [vmem:[#allocation26 + $0x360] sm:$0xff]
    %v2880 = vld [vmem:[#allocation26 + $0x368] sm:$0xff]
    %v2881 = vld [vmem:[#allocation26 + $0x370] sm:$0xff]
    %v2882 = vld [vmem:[#allocation26 + $0x378] sm:$0xff]
    %v2883 = vld [vmem:[#allocation26 + $0x380] sm:$0xff]
    %v2884 = vld [vmem:[#allocation26 + $0x388] sm:$0xff]
    %v2885 = vld [vmem:[#allocation26 + $0x390] sm:$0xff]
    %v2886 = vld [vmem:[#allocation26 + $0x398] sm:$0xff]
    %v2887 = vld [vmem:[#allocation26 + $0x3a0] sm:$0xff]
    %v2888 = vld [vmem:[#allocation26 + $0x3a8] sm:$0xff]
    %v2889 = vld [vmem:[#allocation26 + $0x3b0] sm:$0xff]
    %v2890 = vld [vmem:[#allocation26 + $0x3b8] sm:$0xff]
    %v2891 = vld [vmem:[#allocation26 + $0x3c0] sm:$0xff]
    %v2892 = vld [vmem:[#allocation26 + $0x3c8] sm:$0xff]
    %v2893 = vld [vmem:[#allocation26 + $0x3d0] sm:$0xff]
    %v2894 = vld [vmem:[#allocation26 + $0x3d8] sm:$0xff]
    %v2895 = vld [vmem:[#allocation26 + $0x3e0] sm:$0xff]
    %v2896 = vld [vmem:[#allocation26 + $0x3e8] sm:$0xff]
    %v2897 = vld [vmem:[#allocation26 + $0x3f0] sm:$0xff]
    %v2898 = vld [vmem:[#allocation26 + $0x3f8] sm:$0xff]
    %v2899 = vld [vmem:[#allocation26 + $0x400] sm:$0xff]
    %v2900 = vld [vmem:[#allocation26 + $0x408] sm:$0xff]
    %v2901 = vld [vmem:[#allocation26 + $0x410] sm:$0xff]
    %v2902 = vld [vmem:[#allocation26 + $0x418] sm:$0xff]
    %v2903 = vld [vmem:[#allocation26 + $0x420] sm:$0xff]
    %v2904 = vld [vmem:[#allocation26 + $0x428] sm:$0xff]
    %v2905 = vld [vmem:[#allocation26 + $0x430] sm:$0xff]
    %v2906 = vld [vmem:[#allocation26 + $0x438] sm:$0xff]
    %v2907 = vld [vmem:[#allocation26 + $0x440] sm:$0xff]
    %v2908 = vld [vmem:[#allocation26 + $0x448] sm:$0xff]
    %v2909 = vld [vmem:[#allocation26 + $0x450] sm:$0xff]
    %v2910 = vld [vmem:[#allocation26 + $0x458] sm:$0xff]
    %v2911 = vld [vmem:[#allocation26 + $0x460] sm:$0xff]
    %v2912 = vld [vmem:[#allocation26 + $0x468] sm:$0xff]
    %v2913 = vld [vmem:[#allocation26 + $0x470] sm:$0xff]
    %v2914 = vld [vmem:[#allocation26 + $0x478] sm:$0xff]
    %v2915 = vld [vmem:[#allocation26 + $0x480] sm:$0xff]
    %v2916 = vld [vmem:[#allocation26 + $0x488] sm:$0xff]
    %v2917 = vld [vmem:[#allocation26 + $0x490] sm:$0xff]
    %v2918 = vld [vmem:[#allocation26 + $0x498] sm:$0xff]
    %v2919 = vld [vmem:[#allocation26 + $0x4a0] sm:$0xff]
    %v2920 = vld [vmem:[#allocation26 + $0x4a8] sm:$0xff]
    %v2921 = vld [vmem:[#allocation26 + $0x4b0] sm:$0xff]
    %v2922 = vld [vmem:[#allocation26 + $0x4b8] sm:$0xff]
    %v2923 = vld [vmem:[#allocation26 + $0x4c0] sm:$0xff]
    %v2924 = vld [vmem:[#allocation26 + $0x4c8] sm:$0xff]
    %v2925 = vld [vmem:[#allocation26 + $0x4d0] sm:$0xff]
    %v2926 = vld [vmem:[#allocation26 + $0x4d8] sm:$0xff]
    %v2927 = vld [vmem:[#allocation26 + $0x4e0] sm:$0xff]
    %v2928 = vld [vmem:[#allocation26 + $0x4e8] sm:$0xff]
    %v2929 = vld [vmem:[#allocation26 + $0x4f0] sm:$0xff]
    %v2930 = vld [vmem:[#allocation26 + $0x4f8] sm:$0xff]
    %v2931 = vld [vmem:[#allocation26 + $0x500] sm:$0xff]
    %v2932 = vld [vmem:[#allocation26 + $0x508] sm:$0xff]
    %v2933 = vld [vmem:[#allocation26 + $0x510] sm:$0xff]
    %v2934 = vld [vmem:[#allocation26 + $0x518] sm:$0xff]
    %v2935 = vld [vmem:[#allocation26 + $0x520] sm:$0xff]
    %v2936 = vld [vmem:[#allocation26 + $0x528] sm:$0xff]
    %v2937 = vld [vmem:[#allocation26 + $0x530] sm:$0xff]
    %v2938 = vld [vmem:[#allocation26 + $0x538] sm:$0xff]
    %v2939 = vld [vmem:[#allocation26 + $0x540] sm:$0xff]
    %v2940 = vld [vmem:[#allocation26 + $0x548] sm:$0xff]
    %v2941 = vld [vmem:[#allocation26 + $0x550] sm:$0xff]
    %v2942 = vld [vmem:[#allocation26 + $0x558] sm:$0xff]
    %v2943 = vld [vmem:[#allocation26 + $0x560] sm:$0xff]
    %v2944 = vld [vmem:[#allocation26 + $0x568] sm:$0xff]
    %v2945 = vld [vmem:[#allocation26 + $0x570] sm:$0xff]
    %v2946 = vld [vmem:[#allocation26 + $0x578] sm:$0xff]
    %v2947 = vld [vmem:[#allocation26 + $0x580] sm:$0xff]
    %v2948 = vld [vmem:[#allocation26 + $0x588] sm:$0xff]
    %v2949 = vld [vmem:[#allocation26 + $0x590] sm:$0xff]
    %v2950 = vld [vmem:[#allocation26 + $0x598] sm:$0xff]
    %v2951 = vld [vmem:[#allocation26 + $0x5a0] sm:$0xff]
    %v2952 = vld [vmem:[#allocation26 + $0x5a8] sm:$0xff]
    %v2953 = vld [vmem:[#allocation26 + $0x5b0] sm:$0xff]
    %v2954 = vld [vmem:[#allocation26 + $0x5b8] sm:$0xff]
    %v2955 = vld [vmem:[#allocation26 + $0x5c0] sm:$0xff]
    %v2956 = vld [vmem:[#allocation26 + $0x5c8] sm:$0xff]
    %v2957 = vld [vmem:[#allocation26 + $0x5d0] sm:$0xff]
    %v2958 = vld [vmem:[#allocation26 + $0x5d8] sm:$0xff]
    %v2959 = vld [vmem:[#allocation26 + $0x5e0] sm:$0xff]
    %v2960 = vld [vmem:[#allocation26 + $0x5e8] sm:$0xff]
    %v2961 = vld [vmem:[#allocation26 + $0x5f0] sm:$0xff]
    %v2962 = vld [vmem:[#allocation26 + $0x5f8] sm:$0xff]
    %v2963 = vld [vmem:[#allocation26 + $0x600] sm:$0xff]
    %v2964 = vld [vmem:[#allocation26 + $0x608] sm:$0xff]
    %v2965 = vld [vmem:[#allocation26 + $0x610] sm:$0xff]
    %v2966 = vld [vmem:[#allocation26 + $0x618] sm:$0xff]
    %v2967 = vld [vmem:[#allocation26 + $0x620] sm:$0xff]
    %v2968 = vld [vmem:[#allocation26 + $0x628] sm:$0xff]
    %v2969 = vld [vmem:[#allocation26 + $0x630] sm:$0xff]
    %v2970 = vld [vmem:[#allocation26 + $0x638] sm:$0xff]
    %v2971 = vld [vmem:[#allocation26 + $0x640] sm:$0xff]
    %v2972 = vld [vmem:[#allocation26 + $0x648] sm:$0xff]
    %v2973 = vld [vmem:[#allocation26 + $0x650] sm:$0xff]
    %v2974 = vld [vmem:[#allocation26 + $0x658] sm:$0xff]
    %v2975 = vld [vmem:[#allocation26 + $0x660] sm:$0xff]
    %v2976 = vld [vmem:[#allocation26 + $0x668] sm:$0xff]
    %v2977 = vld [vmem:[#allocation26 + $0x670] sm:$0xff]
    %v2978 = vld [vmem:[#allocation26 + $0x678] sm:$0xff]
    %v2979 = vld [vmem:[#allocation26 + $0x680] sm:$0xff]
    %v2980 = vld [vmem:[#allocation26 + $0x688] sm:$0xff]
    %v2981 = vld [vmem:[#allocation26 + $0x690] sm:$0xff]
    %v2982 = vld [vmem:[#allocation26 + $0x698] sm:$0xff]
    %v2983 = vld [vmem:[#allocation26 + $0x6a0] sm:$0xff]
    %v2984 = vld [vmem:[#allocation26 + $0x6a8] sm:$0xff]
    %v2985 = vld [vmem:[#allocation26 + $0x6b0] sm:$0xff]
    %v2986 = vld [vmem:[#allocation26 + $0x6b8] sm:$0xff]
    %v2987 = vld [vmem:[#allocation26 + $0x6c0] sm:$0xff]
    %v2988 = vld [vmem:[#allocation26 + $0x6c8] sm:$0xff]
    %v2989 = vld [vmem:[#allocation26 + $0x6d0] sm:$0xff]
    %v2990 = vld [vmem:[#allocation26 + $0x6d8] sm:$0xff]
    %v2991 = vld [vmem:[#allocation26 + $0x6e0] sm:$0xff]
    %v2992 = vld [vmem:[#allocation26 + $0x6e8] sm:$0xff]
    %v2993 = vld [vmem:[#allocation26 + $0x6f0] sm:$0xff]
    %v2994 = vld [vmem:[#allocation26 + $0x6f8] sm:$0xff]
    %v2995 = vld [vmem:[#allocation26 + $0x700] sm:$0xff]
    %v2996 = vld [vmem:[#allocation26 + $0x708] sm:$0xff]
    %v2997 = vld [vmem:[#allocation26 + $0x710] sm:$0xff]
    %v2998 = vld [vmem:[#allocation26 + $0x718] sm:$0xff]
    %v2999 = vld [vmem:[#allocation26 + $0x720] sm:$0xff]
    %v3000 = vld [vmem:[#allocation26 + $0x728] sm:$0xff]
    %v3001 = vld [vmem:[#allocation26 + $0x730] sm:$0xff]
    %v3002 = vld [vmem:[#allocation26 + $0x738] sm:$0xff]
    %v3003 = vld [vmem:[#allocation26 + $0x740] sm:$0xff]
    %v3004 = vld [vmem:[#allocation26 + $0x748] sm:$0xff]
    %v3005 = vld [vmem:[#allocation26 + $0x750] sm:$0xff]
    %v3006 = vld [vmem:[#allocation26 + $0x758] sm:$0xff]
    %v3007 = vld [vmem:[#allocation26 + $0x760] sm:$0xff]
    %v3008 = vld [vmem:[#allocation26 + $0x768] sm:$0xff]
    %v3009 = vld [vmem:[#allocation26 + $0x770] sm:$0xff]
    %v3010 = vld [vmem:[#allocation26 + $0x778] sm:$0xff]
    %v3011 = vld [vmem:[#allocation26 + $0x780] sm:$0xff]
    %v3012 = vld [vmem:[#allocation26 + $0x788] sm:$0xff]
    %v3013 = vld [vmem:[#allocation26 + $0x790] sm:$0xff]
    %v3014 = vld [vmem:[#allocation26 + $0x798] sm:$0xff]
    %v3015 = vld [vmem:[#allocation26 + $0x7a0] sm:$0xff]
    %v3016 = vld [vmem:[#allocation26 + $0x7a8] sm:$0xff]
    %v3017 = vld [vmem:[#allocation26 + $0x7b0] sm:$0xff]
    %v3018 = vld [vmem:[#allocation26 + $0x7b8] sm:$0xff]
    %v3019 = vld [vmem:[#allocation26 + $0x7c0] sm:$0xff]
    %v3020 = vld [vmem:[#allocation26 + $0x7c8] sm:$0xff]
    %v3021 = vld [vmem:[#allocation26 + $0x7d0] sm:$0xff]
    %v3022 = vld [vmem:[#allocation26 + $0x7d8] sm:$0xff]
    %v3023 = vld [vmem:[#allocation26 + $0x7e0] sm:$0xff]
    %v3024 = vld [vmem:[#allocation26 + $0x7e8] sm:$0xff]
    %v3025 = vld [vmem:[#allocation26 + $0x7f0] sm:$0xff]
    %v3026 = vld [vmem:[#allocation26 + $0x7f8] sm:$0xff]
    %v3027 = vld [vmem:[#allocation26 + $0x800] sm:$0xff]
    %v3028 = vld [vmem:[#allocation26 + $0x808] sm:$0xff]
    %v3029 = vld [vmem:[#allocation26 + $0x810] sm:$0xff]
    %v3030 = vld [vmem:[#allocation26 + $0x818] sm:$0xff]
    %v3031 = vld [vmem:[#allocation26 + $0x820] sm:$0xff]
    %v3032 = vld [vmem:[#allocation26 + $0x828] sm:$0xff]
    %v3033 = vld [vmem:[#allocation26 + $0x830] sm:$0xff]
    %v3034 = vld [vmem:[#allocation26 + $0x838] sm:$0xff]
    %v3035 = vld [vmem:[#allocation26 + $0x840] sm:$0xff]
    %v3036 = vld [vmem:[#allocation26 + $0x848] sm:$0xff]
    %v3037 = vld [vmem:[#allocation26 + $0x850] sm:$0xff]
    %v3038 = vld [vmem:[#allocation26 + $0x858] sm:$0xff]
    %v3039 = vld [vmem:[#allocation26 + $0x860] sm:$0xff]
    %v3040 = vld [vmem:[#allocation26 + $0x868] sm:$0xff]
    %v3041 = vld [vmem:[#allocation26 + $0x870] sm:$0xff]
    %v3042 = vld [vmem:[#allocation26 + $0x878] sm:$0xff]
    %v3043 = vld [vmem:[#allocation26 + $0x880] sm:$0xff]
    %v3044 = vld [vmem:[#allocation26 + $0x888] sm:$0xff]
    %v3045 = vld [vmem:[#allocation26 + $0x890] sm:$0xff]
    %v3046 = vld [vmem:[#allocation26 + $0x898] sm:$0xff]
    %v3047 = vld [vmem:[#allocation26 + $0x8a0] sm:$0xff]
    %v3048 = vld [vmem:[#allocation26 + $0x8a8] sm:$0xff]
    %v3049 = vld [vmem:[#allocation26 + $0x8b0] sm:$0xff]
    %v3050 = vld [vmem:[#allocation26 + $0x8b8] sm:$0xff]
    %v3051 = vld [vmem:[#allocation26 + $0x8c0] sm:$0xff]
    %v3052 = vld [vmem:[#allocation26 + $0x8c8] sm:$0xff]
    %v3053 = vld [vmem:[#allocation26 + $0x8d0] sm:$0xff]
    %v3054 = vld [vmem:[#allocation26 + $0x8d8] sm:$0xff]
    %v3055 = vld [vmem:[#allocation26 + $0x8e0] sm:$0xff]
    %v3056 = vld [vmem:[#allocation26 + $0x8e8] sm:$0xff]
    %v3057 = vld [vmem:[#allocation26 + $0x8f0] sm:$0xff]
    %v3058 = vld [vmem:[#allocation26 + $0x8f8] sm:$0xff]
    %v3059 = vld [vmem:[#allocation26 + $0x900] sm:$0xff]
    %v3060 = vld [vmem:[#allocation26 + $0x908] sm:$0xff]
    %v3061 = vld [vmem:[#allocation26 + $0x910] sm:$0xff]
    %v3062 = vld [vmem:[#allocation26 + $0x918] sm:$0xff]
    %v3063 = vld [vmem:[#allocation26 + $0x920] sm:$0xff]
    %v3064 = vld [vmem:[#allocation26 + $0x928] sm:$0xff]
    %v3065 = vld [vmem:[#allocation26 + $0x930] sm:$0xff]
    %v3066 = vld [vmem:[#allocation26 + $0x938] sm:$0xff]
    %v3067 = vld [vmem:[#allocation26 + $0x940] sm:$0xff]
    %v3068 = vld [vmem:[#allocation26 + $0x948] sm:$0xff]
    %v3069 = vld [vmem:[#allocation26 + $0x950] sm:$0xff]
    %v3070 = vld [vmem:[#allocation26 + $0x958] sm:$0xff]
    %v3071 = vld [vmem:[#allocation26 + $0x960] sm:$0xff]
    %v3072 = vld [vmem:[#allocation26 + $0x968] sm:$0xff]
    %v3073 = vld [vmem:[#allocation26 + $0x970] sm:$0xff]
    %v3074 = vld [vmem:[#allocation26 + $0x978] sm:$0xff]
    %v3075 = vld [vmem:[#allocation26 + $0x980] sm:$0xff]
    %v3076 = vld [vmem:[#allocation26 + $0x988] sm:$0xff]
    %v3077 = vld [vmem:[#allocation26 + $0x990] sm:$0xff]
    %v3078 = vld [vmem:[#allocation26 + $0x998] sm:$0xff]
    %v3079 = vld [vmem:[#allocation26 + $0x9a0] sm:$0xff]
    %v3080 = vld [vmem:[#allocation26 + $0x9a8] sm:$0xff]
    %v3081 = vld [vmem:[#allocation26 + $0x9b0] sm:$0xff]
    %v3082 = vld [vmem:[#allocation26 + $0x9b8] sm:$0xff]
    %v3083 = vld [vmem:[#allocation26 + $0x9c0] sm:$0xff]
    %v3084 = vld [vmem:[#allocation26 + $0x9c8] sm:$0xff]
    %v3085 = vld [vmem:[#allocation26 + $0x9d0] sm:$0xff]
    %v3086 = vld [vmem:[#allocation26 + $0x9d8] sm:$0xff]
    %v3087 = vld [vmem:[#allocation26 + $0x9e0] sm:$0xff]
    %v3088 = vld [vmem:[#allocation26 + $0x9e8] sm:$0xff]
    %v3089 = vld [vmem:[#allocation26 + $0x9f0] sm:$0xff]
    %v3090 = vld [vmem:[#allocation26 + $0x9f8] sm:$0xff]
    %v3091 = vld [vmem:[#allocation26 + $0xa00] sm:$0xff]
    %v3092 = vld [vmem:[#allocation26 + $0xa08] sm:$0xff]
    %v3093 = vld [vmem:[#allocation26 + $0xa10] sm:$0xff]
    %v3094 = vld [vmem:[#allocation26 + $0xa18] sm:$0xff]
    %v3095 = vld [vmem:[#allocation26 + $0xa20] sm:$0xff]
    %v3096 = vld [vmem:[#allocation26 + $0xa28] sm:$0xff]
    %v3097 = vld [vmem:[#allocation26 + $0xa30] sm:$0xff]
    %v3098 = vld [vmem:[#allocation26 + $0xa38] sm:$0xff]
    %v3099 = vld [vmem:[#allocation26 + $0xa40] sm:$0xff]
    %v3100 = vld [vmem:[#allocation26 + $0xa48] sm:$0xff]
    %v3101 = vld [vmem:[#allocation26 + $0xa50] sm:$0xff]
    %v3102 = vld [vmem:[#allocation26 + $0xa58] sm:$0xff]
    %v3103 = vld [vmem:[#allocation26 + $0xa60] sm:$0xff]
    %v3104 = vld [vmem:[#allocation26 + $0xa68] sm:$0xff]
    %v3105 = vld [vmem:[#allocation26 + $0xa70] sm:$0xff]
    %v3106 = vld [vmem:[#allocation26 + $0xa78] sm:$0xff]
    %v3107 = vld [vmem:[#allocation26 + $0xa80] sm:$0xff]
    %v3108 = vld [vmem:[#allocation26 + $0xa88] sm:$0xff]
    %v3109 = vld [vmem:[#allocation26 + $0xa90] sm:$0xff]
    %v3110 = vld [vmem:[#allocation26 + $0xa98] sm:$0xff]
    %v3111 = vld [vmem:[#allocation26 + $0xaa0] sm:$0xff]
    %v3112 = vld [vmem:[#allocation26 + $0xaa8] sm:$0xff]
    %v3113 = vld [vmem:[#allocation26 + $0xab0] sm:$0xff]
    %v3114 = vld [vmem:[#allocation26 + $0xab8] sm:$0xff]
    %v3115 = vld [vmem:[#allocation26 + $0xac0] sm:$0xff]
    %v3116 = vld [vmem:[#allocation26 + $0xac8] sm:$0xff]
    %v3117 = vld [vmem:[#allocation26 + $0xad0] sm:$0xff]
    %v3118 = vld [vmem:[#allocation26 + $0xad8] sm:$0xff]
    %v3119 = vld [vmem:[#allocation26 + $0xae0] sm:$0xff]
    %v3120 = vld [vmem:[#allocation26 + $0xae8] sm:$0xff]
    %v3121 = vld [vmem:[#allocation26 + $0xaf0] sm:$0xff]
    %v3122 = vld [vmem:[#allocation26 + $0xaf8] sm:$0xff]
    %v3123 = vld [vmem:[#allocation26 + $0xb00] sm:$0xff]
    %v3124 = vld [vmem:[#allocation26 + $0xb08] sm:$0xff]
    %v3125 = vld [vmem:[#allocation26 + $0xb10] sm:$0xff]
    %v3126 = vld [vmem:[#allocation26 + $0xb18] sm:$0xff]
    %v3127 = vld [vmem:[#allocation26 + $0xb20] sm:$0xff]
    %v3128 = vld [vmem:[#allocation26 + $0xb28] sm:$0xff]
    %v3129 = vld [vmem:[#allocation26 + $0xb30] sm:$0xff]
    %v3130 = vld [vmem:[#allocation26 + $0xb38] sm:$0xff]
    %v3131 = vld [vmem:[#allocation26 + $0xb40] sm:$0xff]
    %v3132 = vld [vmem:[#allocation26 + $0xb48] sm:$0xff]
    %v3133 = vld [vmem:[#allocation26 + $0xb50] sm:$0xff]
    %v3134 = vld [vmem:[#allocation26 + $0xb58] sm:$0xff]
    %v3135 = vld [vmem:[#allocation26 + $0xb60] sm:$0xff]
    %v3136 = vld [vmem:[#allocation26 + $0xb68] sm:$0xff]
    %v3137 = vld [vmem:[#allocation26 + $0xb70] sm:$0xff]
    %v3138 = vld [vmem:[#allocation26 + $0xb78] sm:$0xff]
    %v3139 = vld [vmem:[#allocation26 + $0xb80] sm:$0xff]
    %v3140 = vld [vmem:[#allocation26 + $0xb88] sm:$0xff]
    %v3141 = vld [vmem:[#allocation26 + $0xb90] sm:$0xff]
    %v3142 = vld [vmem:[#allocation26 + $0xb98] sm:$0xff]
    %v3143 = vld [vmem:[#allocation26 + $0xba0] sm:$0xff]
    %v3144 = vld [vmem:[#allocation26 + $0xba8] sm:$0xff]
    %v3145 = vld [vmem:[#allocation26 + $0xbb0] sm:$0xff]
    %v3146 = vld [vmem:[#allocation26 + $0xbb8] sm:$0xff]
    %v3147 = vld [vmem:[#allocation26 + $0xbc0] sm:$0xff]
    %v3148 = vld [vmem:[#allocation26 + $0xbc8] sm:$0xff]
    %v3149 = vld [vmem:[#allocation26 + $0xbd0] sm:$0xff]
    %v3150 = vld [vmem:[#allocation26 + $0xbd8] sm:$0xff]
    %v3151 = vld [vmem:[#allocation26 + $0xbe0] sm:$0xff]
    %v3152 = vld [vmem:[#allocation26 + $0xbe8] sm:$0xff]
    %v3153 = vld [vmem:[#allocation26 + $0xbf0] sm:$0xff]
    %v3154 = vld [vmem:[#allocation26 + $0xbf8] sm:$0xff]
    %v3155 = vld [vmem:[#allocation26 + $0xc00] sm:$0xff]
    %v3156 = vld [vmem:[#allocation26 + $0xc08] sm:$0xff]
    %v3157 = vld [vmem:[#allocation26 + $0xc10] sm:$0xff]
    %v3158 = vld [vmem:[#allocation26 + $0xc18] sm:$0xff]
    %v3159 = vld [vmem:[#allocation26 + $0xc20] sm:$0xff]
    %v3160 = vld [vmem:[#allocation26 + $0xc28] sm:$0xff]
    %v3161 = vld [vmem:[#allocation26 + $0xc30] sm:$0xff]
    %v3162 = vld [vmem:[#allocation26 + $0xc38] sm:$0xff]
    %v3163 = vld [vmem:[#allocation26 + $0xc40] sm:$0xff]
    %v3164 = vld [vmem:[#allocation26 + $0xc48] sm:$0xff]
    %v3165 = vld [vmem:[#allocation26 + $0xc50] sm:$0xff]
    %v3166 = vld [vmem:[#allocation26 + $0xc58] sm:$0xff]
    %v3167 = vld [vmem:[#allocation26 + $0xc60] sm:$0xff]
    %v3168 = vld [vmem:[#allocation26 + $0xc68] sm:$0xff]
    %v3169 = vld [vmem:[#allocation26 + $0xc70] sm:$0xff]
    %v3170 = vld [vmem:[#allocation26 + $0xc78] sm:$0xff]
    %v3171 = vld [vmem:[#allocation26 + $0xc80] sm:$0xff]
    %v3172 = vld [vmem:[#allocation26 + $0xc88] sm:$0xff]
    %v3173 = vld [vmem:[#allocation26 + $0xc90] sm:$0xff]
    %v3174 = vld [vmem:[#allocation26 + $0xc98] sm:$0xff]
    %v3175 = vld [vmem:[#allocation26 + $0xca0] sm:$0xff]
    %v3176 = vld [vmem:[#allocation26 + $0xca8] sm:$0xff]
    %v3177 = vld [vmem:[#allocation26 + $0xcb0] sm:$0xff]
    %v3178 = vld [vmem:[#allocation26 + $0xcb8] sm:$0xff]
    %v3179 = vld [vmem:[#allocation26 + $0xcc0] sm:$0xff]
    %v3180 = vld [vmem:[#allocation26 + $0xcc8] sm:$0xff]
    %v3181 = vld [vmem:[#allocation26 + $0xcd0] sm:$0xff]
    %v3182 = vld [vmem:[#allocation26 + $0xcd8] sm:$0xff]
    %v3183 = vld [vmem:[#allocation26 + $0xce0] sm:$0xff]
    %v3184 = vld [vmem:[#allocation26 + $0xce8] sm:$0xff]
    %v3185 = vld [vmem:[#allocation26 + $0xcf0] sm:$0xff]
    %v3186 = vld [vmem:[#allocation26 + $0xcf8] sm:$0xff]
    %v3187 = vld [vmem:[#allocation26 + $0xd00] sm:$0xff]
    %v3188 = vld [vmem:[#allocation26 + $0xd08] sm:$0xff]
    %v3189 = vld [vmem:[#allocation26 + $0xd10] sm:$0xff]
    %v3190 = vld [vmem:[#allocation26 + $0xd18] sm:$0xff]
    %v3191 = vld [vmem:[#allocation26 + $0xd20] sm:$0xff]
    %v3192 = vld [vmem:[#allocation26 + $0xd28] sm:$0xff]
    %v3193 = vld [vmem:[#allocation26 + $0xd30] sm:$0xff]
    %v3194 = vld [vmem:[#allocation26 + $0xd38] sm:$0xff]
    %v3195 = vld [vmem:[#allocation26 + $0xd40] sm:$0xff]
    %v3196 = vld [vmem:[#allocation26 + $0xd48] sm:$0xff]
    %v3197 = vld [vmem:[#allocation26 + $0xd50] sm:$0xff]
    %v3198 = vld [vmem:[#allocation26 + $0xd58] sm:$0xff]
    %v3199 = vld [vmem:[#allocation26 + $0xd60] sm:$0xff]
    %v3200 = vld [vmem:[#allocation26 + $0xd68] sm:$0xff]
    %v3201 = vld [vmem:[#allocation26 + $0xd70] sm:$0xff]
    %v3202 = vld [vmem:[#allocation26 + $0xd78] sm:$0xff]
    %v3203 = vld [vmem:[#allocation26 + $0xd80] sm:$0xff]
    %v3204 = vld [vmem:[#allocation26 + $0xd88] sm:$0xff]
    %v3205 = vld [vmem:[#allocation26 + $0xd90] sm:$0xff]
    %v3206 = vld [vmem:[#allocation26 + $0xd98] sm:$0xff]
    %v3207 = vld [vmem:[#allocation26 + $0xda0] sm:$0xff]
    %v3208 = vld [vmem:[#allocation26 + $0xda8] sm:$0xff]
    %v3209 = vld [vmem:[#allocation26 + $0xdb0] sm:$0xff]
    %v3210 = vld [vmem:[#allocation26 + $0xdb8] sm:$0xff]
    %v3211 = vld [vmem:[#allocation26 + $0xdc0] sm:$0xff]
    %v3212 = vld [vmem:[#allocation26 + $0xdc8] sm:$0xff]
    %v3213 = vld [vmem:[#allocation26 + $0xdd0] sm:$0xff]
    %v3214 = vld [vmem:[#allocation26 + $0xdd8] sm:$0xff]
    %v3215 = vld [vmem:[#allocation26 + $0xde0] sm:$0xff]
    %v3216 = vld [vmem:[#allocation26 + $0xde8] sm:$0xff]
    %v3217 = vld [vmem:[#allocation26 + $0xdf0] sm:$0xff]
    %v3218 = vld [vmem:[#allocation26 + $0xdf8] sm:$0xff]
    %v3219 = vld [vmem:[#allocation26 + $0xe00] sm:$0xff]
    %v3220 = vld [vmem:[#allocation26 + $0xe08] sm:$0xff]
    %v3221 = vld [vmem:[#allocation26 + $0xe10] sm:$0xff]
    %v3222 = vld [vmem:[#allocation26 + $0xe18] sm:$0xff]
    %v3223 = vld [vmem:[#allocation26 + $0xe20] sm:$0xff]
    %v3224 = vld [vmem:[#allocation26 + $0xe28] sm:$0xff]
    %v3225 = vld [vmem:[#allocation26 + $0xe30] sm:$0xff]
    %v3226 = vld [vmem:[#allocation26 + $0xe38] sm:$0xff]
    %v3227 = vld [vmem:[#allocation26 + $0xe40] sm:$0xff]
    %v3228 = vld [vmem:[#allocation26 + $0xe48] sm:$0xff]
    %v3229 = vld [vmem:[#allocation26 + $0xe50] sm:$0xff]
    %v3230 = vld [vmem:[#allocation26 + $0xe58] sm:$0xff]
    %v3231 = vld [vmem:[#allocation26 + $0xe60] sm:$0xff]
    %v3232 = vld [vmem:[#allocation26 + $0xe68] sm:$0xff]
    %v3233 = vld [vmem:[#allocation26 + $0xe70] sm:$0xff]
    %v3234 = vld [vmem:[#allocation26 + $0xe78] sm:$0xff]
    %v3235 = vld [vmem:[#allocation26 + $0xe80] sm:$0xff]
    %v3236 = vld [vmem:[#allocation26 + $0xe88] sm:$0xff]
    %v3237 = vld [vmem:[#allocation26 + $0xe90] sm:$0xff]
    %v3238 = vld [vmem:[#allocation26 + $0xe98] sm:$0xff]
    %v3239 = vld [vmem:[#allocation26 + $0xea0] sm:$0xff]
    %v3240 = vld [vmem:[#allocation26 + $0xea8] sm:$0xff]
    %v3241 = vld [vmem:[#allocation26 + $0xeb0] sm:$0xff]
    %v3242 = vld [vmem:[#allocation26 + $0xeb8] sm:$0xff]
    %v3243 = vld [vmem:[#allocation26 + $0xec0] sm:$0xff]
    %v3244 = vld [vmem:[#allocation26 + $0xec8] sm:$0xff]
    %v3245 = vld [vmem:[#allocation26 + $0xed0] sm:$0xff]
    %v3246 = vld [vmem:[#allocation26 + $0xed8] sm:$0xff]
    %v3247 = vld [vmem:[#allocation26 + $0xee0] sm:$0xff]
    %v3248 = vld [vmem:[#allocation26 + $0xee8] sm:$0xff]
    %v3249 = vld [vmem:[#allocation26 + $0xef0] sm:$0xff]
    %v3250 = vld [vmem:[#allocation26 + $0xef8] sm:$0xff]
    %v3251 = vld [vmem:[#allocation26 + $0xf00] sm:$0xff]
    %v3252 = vld [vmem:[#allocation26 + $0xf08] sm:$0xff]
    %v3253 = vld [vmem:[#allocation26 + $0xf10] sm:$0xff]
    %v3254 = vld [vmem:[#allocation26 + $0xf18] sm:$0xff]
    %v3255 = vld [vmem:[#allocation26 + $0xf20] sm:$0xff]
    %v3256 = vld [vmem:[#allocation26 + $0xf28] sm:$0xff]
    %v3257 = vld [vmem:[#allocation26 + $0xf30] sm:$0xff]
    %v3258 = vld [vmem:[#allocation26 + $0xf38] sm:$0xff]
    %v3259 = vld [vmem:[#allocation26 + $0xf40] sm:$0xff]
    %v3260 = vld [vmem:[#allocation26 + $0xf48] sm:$0xff]
    %v3261 = vld [vmem:[#allocation26 + $0xf50] sm:$0xff]
    %v3262 = vld [vmem:[#allocation26 + $0xf58] sm:$0xff]
    %v3263 = vld [vmem:[#allocation26 + $0xf60] sm:$0xff]
    %v3264 = vld [vmem:[#allocation26 + $0xf68] sm:$0xff]
    %v3265 = vld [vmem:[#allocation26 + $0xf70] sm:$0xff]
    %v3266 = vld [vmem:[#allocation26 + $0xf78] sm:$0xff]
    %v3267 = vld [vmem:[#allocation26 + $0xf80] sm:$0xff]
    %v3268 = vld [vmem:[#allocation26 + $0xf88] sm:$0xff]
    %v3269 = vld [vmem:[#allocation26 + $0xf90] sm:$0xff]
    %v3270 = vld [vmem:[#allocation26 + $0xf98] sm:$0xff]
    %v3271 = vld [vmem:[#allocation26 + $0xfa0] sm:$0xff]
    %v3272 = vld [vmem:[#allocation26 + $0xfa8] sm:$0xff]
    %v3273 = vld [vmem:[#allocation26 + $0xfb0] sm:$0xff]
    %v3274 = vld [vmem:[#allocation26 + $0xfb8] sm:$0xff]
    %v3275 = vld [vmem:[#allocation26 + $0xfc0] sm:$0xff]
    %v3276 = vld [vmem:[#allocation26 + $0xfc8] sm:$0xff]
    %v3277 = vld [vmem:[#allocation26 + $0xfd0] sm:$0xff]
    %v3278 = vld [vmem:[#allocation26 + $0xfd8] sm:$0xff]
    %v3279 = vld [vmem:[#allocation26 + $0xfe0] sm:$0xff]
    %v3280 = vld [vmem:[#allocation26 + $0xfe8] sm:$0xff]
    %v3281 = vld [vmem:[#allocation26 + $0xff0] sm:$0xff]
    %v3282 = vld [vmem:[#allocation26 + $0xff8] sm:$0xff]
    %v3283 = vld [vmem:[#allocation27] sm:$0xf]
    %v3285 = vlaneseq
    %v3286 = vshrl.u32 %v3285, 7
    %v3287 = vsub.s32 0, %v3286
    %v3288 = vrot.slane %v3283, %v3287
    %v3289 = vlaneseq
    %v3290 = vshrl.u32 %v3289, 7
    %v3291 = vsub.s32 1, %v3290
    %v3292 = vrot.slane %v3283, %v3291
    %v3293 = vlaneseq
    %v3294 = vshrl.u32 %v3293, 7
    %v3295 = vsub.s32 2, %v3294
    %v3296 = vrot.slane %v3283, %v3295
    %v3297 = vlaneseq
    %v3298 = vshrl.u32 %v3297, 7
    %v3299 = vsub.s32 3, %v3298
    %v3300 = vrot.slane %v3283, %v3299
    %3305 = vmatprep.subr.mxu0 %v2772
    %3306 = vmatpush1.msra.mxu0 %v2771
    %3307 = vmatprep.subr.mxu0 %v2776
    %3308 = vmatpush1.msra.mxu0 %v2775
    %3309 = vmatprep.subr.mxu0 %v2780
    %3310 = vmatpush1.msra.mxu0 %v2779
    %3311 = vmatprep.subr.mxu0 %v2784
    %3312 = vmatpush1.msra.mxu0 %v2783
    %3313 = vmatprep.subr.mxu0 %v2788
    %3314 = vmatpush1.msra.mxu0 %v2787
    %3315 = vmatprep.subr.mxu0 %v2792
    %3316 = vmatpush1.msra.mxu0 %v2791
    %3317 = vmatprep.subr.mxu0 %v2796
    %3318 = vmatpush1.msra.mxu0 %v2795
    %3319 = vmatprep.subr.mxu0 %v2800
    %3320 = vmatpush1.msra.mxu0 %v2799
    %3321 = vmatprep.subr.mxu0 %v2804
    %3322 = vmatpush1.msra.mxu0 %v2803
    %3323 = vmatprep.subr.mxu0 %v2808
    %3324 = vmatpush1.msra.mxu0 %v2807
    %3325 = vmatprep.subr.mxu0 %v2812
    %3326 = vmatpush1.msra.mxu0 %v2811
    %3327 = vmatprep.subr.mxu0 %v2816
    %3328 = vmatpush1.msra.mxu0 %v2815
    %3329 = vmatprep.subr.mxu0 %v2820
    %3330 = vmatpush1.msra.mxu0 %v2819
    %3331 = vmatprep.subr.mxu0 %v2824
    %3332 = vmatpush1.msra.mxu0 %v2823
    %3333 = vmatprep.subr.mxu0 %v2828
    %3334 = vmatpush1.msra.mxu0 %v2827
    %3335 = vmatprep.subr.mxu0 %v2832
    %3336 = vmatpush1.msra.mxu0 %v2831
    %3337 = vmatprep.subr.mxu0 %v2836
    %3338 = vmatpush1.msra.mxu0 %v2835
    %3339 = vmatprep.subr.mxu0 %v2840
    %3340 = vmatpush1.msra.mxu0 %v2839
    %3341 = vmatprep.subr.mxu0 %v2844
    %3342 = vmatpush1.msra.mxu0 %v2843
    %3343 = vmatprep.subr.mxu0 %v2848
    %3344 = vmatpush1.msra.mxu0 %v2847
    %3345 = vmatprep.subr.mxu0 %v2852
    %3346 = vmatpush1.msra.mxu0 %v2851
    %3347 = vmatprep.subr.mxu0 %v2856
    %3348 = vmatpush1.msra.mxu0 %v2855
    %3349 = vmatprep.subr.mxu0 %v2860
    %3350 = vmatpush1.msra.mxu0 %v2859
    %3351 = vmatprep.subr.mxu0 %v2864
    %3352 = vmatpush1.msra.mxu0 %v2863
    %3353 = vmatprep.subr.mxu0 %v2868
    %3354 = vmatpush1.msra.mxu0 %v2867
    %3355 = vmatprep.subr.mxu0 %v2872
    %3356 = vmatpush1.msra.mxu0 %v2871
    %3357 = vmatprep.subr.mxu0 %v2876
    %3358 = vmatpush1.msra.mxu0 %v2875
    %3359 = vmatprep.subr.mxu0 %v2880
    %3360 = vmatpush1.msra.mxu0 %v2879
    %3361 = vmatprep.subr.mxu0 %v2884
    %3362 = vmatpush1.msra.mxu0 %v2883
    %3363 = vmatprep.subr.mxu0 %v2888
    %3364 = vmatpush1.msra.mxu0 %v2887
    %3365 = vmatprep.subr.mxu0 %v2892
    %3366 = vmatpush1.msra.mxu0 %v2891
    %3367 = vmatprep.subr.mxu0 %v2896
    %3368 = vmatpush1.msra.mxu0 %v2895
    %3369 = vmatprep.mubr.f32.mxu0 %v2764
    %3370 = vmatmul.mubr.f32.gmra.mrb[0].mxu0 %v2763
    %v3371 = vpop.f32.mrb[0].mxu0
    %v3372 = vadd.f32 %v3288, %v3371
    %v3373 = vpop.f32.mrb[0].mxu0
    %v3374 = vadd.f32 %v3292, %v3373
    %3375 = vdwg.mxu0
    %3376 = vmatprep.subr.mxu0 %v2900
    %3377 = vmatpush1.msra.mxu0 %v2899
    %3378 = vmatprep.subr.mxu0 %v2904
    %3379 = vmatpush1.msra.mxu0 %v2903
    %3380 = vmatprep.subr.mxu0 %v2908
    %3381 = vmatpush1.msra.mxu0 %v2907
    %3382 = vmatprep.subr.mxu0 %v2912
    %3383 = vmatpush1.msra.mxu0 %v2911
    %3384 = vmatprep.subr.mxu0 %v2916
    %3385 = vmatpush1.msra.mxu0 %v2915
    %3386 = vmatprep.subr.mxu0 %v2920
    %3387 = vmatpush1.msra.mxu0 %v2919
    %3388 = vmatprep.subr.mxu0 %v2924
    %3389 = vmatpush1.msra.mxu0 %v2923
    %3390 = vmatprep.subr.mxu0 %v2928
    %3391 = vmatpush1.msra.mxu0 %v2927
    %3392 = vmatprep.subr.mxu0 %v2932
    %3393 = vmatpush1.msra.mxu0 %v2931
    %3394 = vmatprep.subr.mxu0 %v2936
    %3395 = vmatpush1.msra.mxu0 %v2935
    %3396 = vmatprep.subr.mxu0 %v2940
    %3397 = vmatpush1.msra.mxu0 %v2939
    %3398 = vmatprep.subr.mxu0 %v2944
    %3399 = vmatpush1.msra.mxu0 %v2943
    %3400 = vmatprep.subr.mxu0 %v2948
    %3401 = vmatpush1.msra.mxu0 %v2947
    %3402 = vmatprep.subr.mxu0 %v2952
    %3403 = vmatpush1.msra.mxu0 %v2951
    %3404 = vmatprep.subr.mxu0 %v2956
    %3405 = vmatpush1.msra.mxu0 %v2955
    %3406 = vmatprep.subr.mxu0 %v2960
    %3407 = vmatpush1.msra.mxu0 %v2959
    %3408 = vmatprep.subr.mxu0 %v2964
    %3409 = vmatpush1.msra.mxu0 %v2963
    %3410 = vmatprep.subr.mxu0 %v2968
    %3411 = vmatpush1.msra.mxu0 %v2967
    %3412 = vmatprep.subr.mxu0 %v2972
    %3413 = vmatpush1.msra.mxu0 %v2971
    %3414 = vmatprep.subr.mxu0 %v2976
    %3415 = vmatpush1.msra.mxu0 %v2975
    %3416 = vmatprep.subr.mxu0 %v2980
    %3417 = vmatpush1.msra.mxu0 %v2979
    %3418 = vmatprep.subr.mxu0 %v2984
    %3419 = vmatpush1.msra.mxu0 %v2983
    %3420 = vmatprep.subr.mxu0 %v2988
    %3421 = vmatpush1.msra.mxu0 %v2987
    %3422 = vmatprep.subr.mxu0 %v2992
    %3423 = vmatpush1.msra.mxu0 %v2991
    %3424 = vmatprep.subr.mxu0 %v2996
    %3425 = vmatpush1.msra.mxu0 %v2995
    %3426 = vmatprep.subr.mxu0 %v3000
    %3427 = vmatpush1.msra.mxu0 %v2999
    %3428 = vmatprep.subr.mxu0 %v3004
    %3429 = vmatpush1.msra.mxu0 %v3003
    %3430 = vmatprep.subr.mxu0 %v3008
    %3431 = vmatpush1.msra.mxu0 %v3007
    %3432 = vmatprep.subr.mxu0 %v3012
    %3433 = vmatpush1.msra.mxu0 %v3011
    %3434 = vmatprep.subr.mxu0 %v3016
    %3435 = vmatpush1.msra.mxu0 %v3015
    %3436 = vmatprep.subr.mxu0 %v3020
    %3437 = vmatpush1.msra.mxu0 %v3019
    %3438 = vmatprep.subr.mxu0 %v3024
    %3439 = vmatpush1.msra.mxu0 %v3023
    %3440 = vmatprep.mubr.f32.mxu0 %v2766
    %3441 = vmatmul.mubr.f32.gmra.mrb[0].mxu0 %v2765
    %v3442 = vpop.f32.mrb[0].mxu0
    %v3443 = vadd.f32 %v3372, %v3442
    %v3444 = vpop.f32.mrb[0].mxu0
    %v3445 = vadd.f32 %v3374, %v3444
    %3446 = vdwg.mxu0
    %3447 = vmatprep.subr.mxu0 %v3028
    %3448 = vmatpush1.msra.mxu0 %v3027
    %3449 = vmatprep.subr.mxu0 %v3032
    %3450 = vmatpush1.msra.mxu0 %v3031
    %3451 = vmatprep.subr.mxu0 %v3036
    %3452 = vmatpush1.msra.mxu0 %v3035
    %3453 = vmatprep.subr.mxu0 %v3040
    %3454 = vmatpush1.msra.mxu0 %v3039
    %3455 = vmatprep.subr.mxu0 %v3044
    %3456 = vmatpush1.msra.mxu0 %v3043
    %3457 = vmatprep.subr.mxu0 %v3048
    %3458 = vmatpush1.msra.mxu0 %v3047
    %3459 = vmatprep.subr.mxu0 %v3052
    %3460 = vmatpush1.msra.mxu0 %v3051
    %3461 = vmatprep.subr.mxu0 %v3056
    %3462 = vmatpush1.msra.mxu0 %v3055
    %3463 = vmatprep.subr.mxu0 %v3060
    %3464 = vmatpush1.msra.mxu0 %v3059
    %3465 = vmatprep.subr.mxu0 %v3064
    %3466 = vmatpush1.msra.mxu0 %v3063
    %3467 = vmatprep.subr.mxu0 %v3068
    %3468 = vmatpush1.msra.mxu0 %v3067
    %3469 = vmatprep.subr.mxu0 %v3072
    %3470 = vmatpush1.msra.mxu0 %v3071
    %3471 = vmatprep.subr.mxu0 %v3076
    %3472 = vmatpush1.msra.mxu0 %v3075
    %3473 = vmatprep.subr.mxu0 %v3080
    %3474 = vmatpush1.msra.mxu0 %v3079
    %3475 = vmatprep.subr.mxu0 %v3084
    %3476 = vmatpush1.msra.mxu0 %v3083
    %3477 = vmatprep.subr.mxu0 %v3088
    %3478 = vmatpush1.msra.mxu0 %v3087
    %3479 = vmatprep.subr.mxu0 %v3092
    %3480 = vmatpush1.msra.mxu0 %v3091
    %3481 = vmatprep.subr.mxu0 %v3096
    %3482 = vmatpush1.msra.mxu0 %v3095
    %3483 = vmatprep.subr.mxu0 %v3100
    %3484 = vmatpush1.msra.mxu0 %v3099
    %3485 = vmatprep.subr.mxu0 %v3104
    %3486 = vmatpush1.msra.mxu0 %v3103
    %3487 = vmatprep.subr.mxu0 %v3108
    %3488 = vmatpush1.msra.mxu0 %v3107
    %3489 = vmatprep.subr.mxu0 %v3112
    %3490 = vmatpush1.msra.mxu0 %v3111
    %3491 = vmatprep.subr.mxu0 %v3116
    %3492 = vmatpush1.msra.mxu0 %v3115
    %3493 = vmatprep.subr.mxu0 %v3120
    %3494 = vmatpush1.msra.mxu0 %v3119
    %3495 = vmatprep.subr.mxu0 %v3124
    %3496 = vmatpush1.msra.mxu0 %v3123
    %3497 = vmatprep.subr.mxu0 %v3128
    %3498 = vmatpush1.msra.mxu0 %v3127
    %3499 = vmatprep.subr.mxu0 %v3132
    %3500 = vmatpush1.msra.mxu0 %v3131
    %3501 = vmatprep.subr.mxu0 %v3136
    %3502 = vmatpush1.msra.mxu0 %v3135
    %3503 = vmatprep.subr.mxu0 %v3140
    %3504 = vmatpush1.msra.mxu0 %v3139
    %3505 = vmatprep.subr.mxu0 %v3144
    %3506 = vmatpush1.msra.mxu0 %v3143
    %3507 = vmatprep.subr.mxu0 %v3148
    %3508 = vmatpush1.msra.mxu0 %v3147
    %3509 = vmatprep.subr.mxu0 %v3152
    %3510 = vmatpush1.msra.mxu0 %v3151
    %3511 = vmatprep.mubr.f32.mxu0 %v2768
    %3512 = vmatmul.mubr.f32.gmra.mrb[0].mxu0 %v2767
    %v3513 = vpop.f32.mrb[0].mxu0
    %v3514 = vadd.f32 %v3443, %v3513
    %v3515 = vpop.f32.mrb[0].mxu0
    %v3516 = vadd.f32 %v3445, %v3515
    %3517 = vdwg.mxu0
    %3518 = vmatprep.subr.mxu0 %v3156
    %3519 = vmatpush1.msra.mxu0 %v3155
    %3520 = vmatprep.subr.mxu0 %v3160
    %3521 = vmatpush1.msra.mxu0 %v3159
    %3522 = vmatprep.subr.mxu0 %v3164
    %3523 = vmatpush1.msra.mxu0 %v3163
    %3524 = vmatprep.subr.mxu0 %v3168
    %3525 = vmatpush1.msra.mxu0 %v3167
    %3526 = vmatprep.subr.mxu0 %v3172
    %3527 = vmatpush1.msra.mxu0 %v3171
    %3528 = vmatprep.subr.mxu0 %v3176
    %3529 = vmatpush1.msra.mxu0 %v3175
    %3530 = vmatprep.subr.mxu0 %v3180
    %3531 = vmatpush1.msra.mxu0 %v3179
    %3532 = vmatprep.subr.mxu0 %v3184
    %3533 = vmatpush1.msra.mxu0 %v3183
    %3534 = vmatprep.subr.mxu0 %v3188
    %3535 = vmatpush1.msra.mxu0 %v3187
    %3536 = vmatprep.subr.mxu0 %v3192
    %3537 = vmatpush1.msra.mxu0 %v3191
    %3538 = vmatprep.subr.mxu0 %v3196
    %3539 = vmatpush1.msra.mxu0 %v3195
    %3540 = vmatprep.subr.mxu0 %v3200
    %3541 = vmatpush1.msra.mxu0 %v3199
    %3542 = vmatprep.subr.mxu0 %v3204
    %3543 = vmatpush1.msra.mxu0 %v3203
    %3544 = vmatprep.subr.mxu0 %v3208
    %3545 = vmatpush1.msra.mxu0 %v3207
    %3546 = vmatprep.subr.mxu0 %v3212
    %3547 = vmatpush1.msra.mxu0 %v3211
    %3548 = vmatprep.subr.mxu0 %v3216
    %3549 = vmatpush1.msra.mxu0 %v3215
    %3550 = vmatprep.subr.mxu0 %v3220
    %3551 = vmatpush1.msra.mxu0 %v3219
    %3552 = vmatprep.subr.mxu0 %v3224
    %3553 = vmatpush1.msra.mxu0 %v3223
    %3554 = vmatprep.subr.mxu0 %v3228
    %3555 = vmatpush1.msra.mxu0 %v3227
    %3556 = vmatprep.subr.mxu0 %v3232
    %3557 = vmatpush1.msra.mxu0 %v3231
    %3558 = vmatprep.subr.mxu0 %v3236
    %3559 = vmatpush1.msra.mxu0 %v3235
    %3560 = vmatprep.subr.mxu0 %v3240
    %3561 = vmatpush1.msra.mxu0 %v3239
    %3562 = vmatprep.subr.mxu0 %v3244
    %3563 = vmatpush1.msra.mxu0 %v3243
    %3564 = vmatprep.subr.mxu0 %v3248
    %3565 = vmatpush1.msra.mxu0 %v3247
    %3566 = vmatprep.subr.mxu0 %v3252
    %3567 = vmatpush1.msra.mxu0 %v3251
    %3568 = vmatprep.subr.mxu0 %v3256
    %3569 = vmatpush1.msra.mxu0 %v3255
    %3570 = vmatprep.subr.mxu0 %v3260
    %3571 = vmatpush1.msra.mxu0 %v3259
    %3572 = vmatprep.subr.mxu0 %v3264
    %3573 = vmatpush1.msra.mxu0 %v3263
    %3574 = vmatprep.subr.mxu0 %v3268
    %3575 = vmatpush1.msra.mxu0 %v3267
    %3576 = vmatprep.subr.mxu0 %v3272
    %3577 = vmatpush1.msra.mxu0 %v3271
    %3578 = vmatprep.subr.mxu0 %v3276
    %3579 = vmatpush1.msra.mxu0 %v3275
    %3580 = vmatprep.subr.mxu0 %v3280
    %3581 = vmatpush1.msra.mxu0 %v3279
    %3582 = vmatprep.mubr.f32.mxu0 %v2770
    %3583 = vmatmul.mubr.f32.gmra.mrb[0].mxu0 %v2769
    %v3584 = vpop.f32.mrb[0].mxu0
    %v3585 = vadd.f32 %v3514, %v3584
    %v3586 = vpop.f32.mrb[0].mxu0
    %v3587 = vadd.f32 %v3516, %v3586
    %3588 = vdwg.mxu0
    %3589 = vmatprep.subr.mxu0 %v2774
    %3590 = vmatpush1.msra.mxu0 %v2773
    %3591 = vmatprep.subr.mxu0 %v2778
    %3592 = vmatpush1.msra.mxu0 %v2777
    %3593 = vmatprep.subr.mxu0 %v2782
    %3594 = vmatpush1.msra.mxu0 %v2781
    %3595 = vmatprep.subr.mxu0 %v2786
    %3596 = vmatpush1.msra.mxu0 %v2785
    %3597 = vmatprep.subr.mxu0 %v2790
    %3598 = vmatpush1.msra.mxu0 %v2789
    %3599 = vmatprep.subr.mxu0 %v2794
    %3600 = vmatpush1.msra.mxu0 %v2793
    %3601 = vmatprep.subr.mxu0 %v2798
    %3602 = vmatpush1.msra.mxu0 %v2797
    %3603 = vmatprep.subr.mxu0 %v2802
    %3604 = vmatpush1.msra.mxu0 %v2801
    %3605 = vmatprep.subr.mxu0 %v2806
    %3606 = vmatpush1.msra.mxu0 %v2805
    %3607 = vmatprep.subr.mxu0 %v2810
    %3608 = vmatpush1.msra.mxu0 %v2809
    %3609 = vmatprep.subr.mxu0 %v2814
    %3610 = vmatpush1.msra.mxu0 %v2813
    %3611 = vmatprep.subr.mxu0 %v2818
    %3612 = vmatpush1.msra.mxu0 %v2817
    %3613 = vmatprep.subr.mxu0 %v2822
    %3614 = vmatpush1.msra.mxu0 %v2821
    %3615 = vmatprep.subr.mxu0 %v2826
    %3616 = vmatpush1.msra.mxu0 %v2825
    %3617 = vmatprep.subr.mxu0 %v2830
    %3618 = vmatpush1.msra.mxu0 %v2829
    %3619 = vmatprep.subr.mxu0 %v2834
    %3620 = vmatpush1.msra.mxu0 %v2833
    %3621 = vmatprep.subr.mxu0 %v2838
    %3622 = vmatpush1.msra.mxu0 %v2837
    %3623 = vmatprep.subr.mxu0 %v2842
    %3624 = vmatpush1.msra.mxu0 %v2841
    %3625 = vmatprep.subr.mxu0 %v2846
    %3626 = vmatpush1.msra.mxu0 %v2845
    %3627 = vmatprep.subr.mxu0 %v2850
    %3628 = vmatpush1.msra.mxu0 %v2849
    %3629 = vmatprep.subr.mxu0 %v2854
    %3630 = vmatpush1.msra.mxu0 %v2853
    %3631 = vmatprep.subr.mxu0 %v2858
    %3632 = vmatpush1.msra.mxu0 %v2857
    %3633 = vmatprep.subr.mxu0 %v2862
    %3634 = vmatpush1.msra.mxu0 %v2861
    %3635 = vmatprep.subr.mxu0 %v2866
    %3636 = vmatpush1.msra.mxu0 %v2865
    %3637 = vmatprep.subr.mxu0 %v2870
    %3638 = vmatpush1.msra.mxu0 %v2869
    %3639 = vmatprep.subr.mxu0 %v2874
    %3640 = vmatpush1.msra.mxu0 %v2873
    %3641 = vmatprep.subr.mxu0 %v2878
    %3642 = vmatpush1.msra.mxu0 %v2877
    %3643 = vmatprep.subr.mxu0 %v2882
    %3644 = vmatpush1.msra.mxu0 %v2881
    %3645 = vmatprep.subr.mxu0 %v2886
    %3646 = vmatpush1.msra.mxu0 %v2885
    %3647 = vmatprep.subr.mxu0 %v2890
    %3648 = vmatpush1.msra.mxu0 %v2889
    %3649 = vmatprep.subr.mxu0 %v2894
    %3650 = vmatpush1.msra.mxu0 %v2893
    %3651 = vmatprep.subr.mxu0 %v2898
    %3652 = vmatpush1.msra.mxu0 %v2897
    %3653 = vmatprep.mubr.f32.mxu0 %v2764
    %3654 = vmatmul.mubr.f32.gmra.mrb[0].mxu0 %v2763
    %v3655 = vpop.f32.mrb[0].mxu0
    %v3656 = vadd.f32 %v3296, %v3655
    %v3657 = vpop.f32.mrb[0].mxu0
    %v3658 = vadd.f32 %v3300, %v3657
    %3659 = vdwg.mxu0
    %3660 = vmatprep.subr.mxu0 %v2902
    %3661 = vmatpush1.msra.mxu0 %v2901
    %3662 = vmatprep.subr.mxu0 %v2906
    %3663 = vmatpush1.msra.mxu0 %v2905
    %3664 = vmatprep.subr.mxu0 %v2910
    %3665 = vmatpush1.msra.mxu0 %v2909
    %3666 = vmatprep.subr.mxu0 %v2914
    %3667 = vmatpush1.msra.mxu0 %v2913
    %3668 = vmatprep.subr.mxu0 %v2918
    %3669 = vmatpush1.msra.mxu0 %v2917
    %3670 = vmatprep.subr.mxu0 %v2922
    %3671 = vmatpush1.msra.mxu0 %v2921
    %3672 = vmatprep.subr.mxu0 %v2926
    %3673 = vmatpush1.msra.mxu0 %v2925
    %3674 = vmatprep.subr.mxu0 %v2930
    %3675 = vmatpush1.msra.mxu0 %v2929
    %3676 = vmatprep.subr.mxu0 %v2934
    %3677 = vmatpush1.msra.mxu0 %v2933
    %3678 = vmatprep.subr.mxu0 %v2938
    %3679 = vmatpush1.msra.mxu0 %v2937
    %3680 = vmatprep.subr.mxu0 %v2942
    %3681 = vmatpush1.msra.mxu0 %v2941
    %3682 = vmatprep.subr.mxu0 %v2946
    %3683 = vmatpush1.msra.mxu0 %v2945
    %3684 = vmatprep.subr.mxu0 %v2950
    %3685 = vmatpush1.msra.mxu0 %v2949
    %3686 = vmatprep.subr.mxu0 %v2954
    %3687 = vmatpush1.msra.mxu0 %v2953
    %3688 = vmatprep.subr.mxu0 %v2958
    %3689 = vmatpush1.msra.mxu0 %v2957
    %3690 = vmatprep.subr.mxu0 %v2962
    %3691 = vmatpush1.msra.mxu0 %v2961
    %3692 = vmatprep.subr.mxu0 %v2966
    %3693 = vmatpush1.msra.mxu0 %v2965
    %3694 = vmatprep.subr.mxu0 %v2970
    %3695 = vmatpush1.msra.mxu0 %v2969
    %3696 = vmatprep.subr.mxu0 %v2974
    %3697 = vmatpush1.msra.mxu0 %v2973
    %3698 = vmatprep.subr.mxu0 %v2978
    %3699 = vmatpush1.msra.mxu0 %v2977
    %3700 = vmatprep.subr.mxu0 %v2982
    %3701 = vmatpush1.msra.mxu0 %v2981
    %3702 = vmatprep.subr.mxu0 %v2986
    %3703 = vmatpush1.msra.mxu0 %v2985
    %3704 = vmatprep.subr.mxu0 %v2990
    %3705 = vmatpush1.msra.mxu0 %v2989
    %3706 = vmatprep.subr.mxu0 %v2994
    %3707 = vmatpush1.msra.mxu0 %v2993
    %3708 = vmatprep.subr.mxu0 %v2998
    %3709 = vmatpush1.msra.mxu0 %v2997
    %3710 = vmatprep.subr.mxu0 %v3002
    %3711 = vmatpush1.msra.mxu0 %v3001
    %3712 = vmatprep.subr.mxu0 %v3006
    %3713 = vmatpush1.msra.mxu0 %v3005
    %3714 = vmatprep.subr.mxu0 %v3010
    %3715 = vmatpush1.msra.mxu0 %v3009
    %3716 = vmatprep.subr.mxu0 %v3014
    %3717 = vmatpush1.msra.mxu0 %v3013
    %3718 = vmatprep.subr.mxu0 %v3018
    %3719 = vmatpush1.msra.mxu0 %v3017
    %3720 = vmatprep.subr.mxu0 %v3022
    %3721 = vmatpush1.msra.mxu0 %v3021
    %3722 = vmatprep.subr.mxu0 %v3026
    %3723 = vmatpush1.msra.mxu0 %v3025
    %3724 = vmatprep.mubr.f32.mxu0 %v2766
    %3725 = vmatmul.mubr.f32.gmra.mrb[0].mxu0 %v2765
    %v3726 = vpop.f32.mrb[0].mxu0
    %v3727 = vadd.f32 %v3656, %v3726
    %v3728 = vpop.f32.mrb[0].mxu0
    %v3729 = vadd.f32 %v3658, %v3728
    %3730 = vdwg.mxu0
    %3731 = vmatprep.subr.mxu0 %v3030
    %3732 = vmatpush1.msra.mxu0 %v3029
    %3733 = vmatprep.subr.mxu0 %v3034
    %3734 = vmatpush1.msra.mxu0 %v3033
    %3735 = vmatprep.subr.mxu0 %v3038
    %3736 = vmatpush1.msra.mxu0 %v3037
    %3737 = vmatprep.subr.mxu0 %v3042
    %3738 = vmatpush1.msra.mxu0 %v3041
    %3739 = vmatprep.subr.mxu0 %v3046
    %3740 = vmatpush1.msra.mxu0 %v3045
    %3741 = vmatprep.subr.mxu0 %v3050
    %3742 = vmatpush1.msra.mxu0 %v3049
    %3743 = vmatprep.subr.mxu0 %v3054
    %3744 = vmatpush1.msra.mxu0 %v3053
    %3745 = vmatprep.subr.mxu0 %v3058
    %3746 = vmatpush1.msra.mxu0 %v3057
    %3747 = vmatprep.subr.mxu0 %v3062
    %3748 = vmatpush1.msra.mxu0 %v3061
    %3749 = vmatprep.subr.mxu0 %v3066
    %3750 = vmatpush1.msra.mxu0 %v3065
    %3751 = vmatprep.subr.mxu0 %v3070
    %3752 = vmatpush1.msra.mxu0 %v3069
    %3753 = vmatprep.subr.mxu0 %v3074
    %3754 = vmatpush1.msra.mxu0 %v3073
    %3755 = vmatprep.subr.mxu0 %v3078
    %3756 = vmatpush1.msra.mxu0 %v3077
    %3757 = vmatprep.subr.mxu0 %v3082
    %3758 = vmatpush1.msra.mxu0 %v3081
    %3759 = vmatprep.subr.mxu0 %v3086
    %3760 = vmatpush1.msra.mxu0 %v3085
    %3761 = vmatprep.subr.mxu0 %v3090
    %3762 = vmatpush1.msra.mxu0 %v3089
    %3763 = vmatprep.subr.mxu0 %v3094
    %3764 = vmatpush1.msra.mxu0 %v3093
    %3765 = vmatprep.subr.mxu0 %v3098
    %3766 = vmatpush1.msra.mxu0 %v3097
    %3767 = vmatprep.subr.mxu0 %v3102
    %3768 = vmatpush1.msra.mxu0 %v3101
    %3769 = vmatprep.subr.mxu0 %v3106
    %3770 = vmatpush1.msra.mxu0 %v3105
    %3771 = vmatprep.subr.mxu0 %v3110
    %3772 = vmatpush1.msra.mxu0 %v3109
    %3773 = vmatprep.subr.mxu0 %v3114
    %3774 = vmatpush1.msra.mxu0 %v3113
    %3775 = vmatprep.subr.mxu0 %v3118
    %3776 = vmatpush1.msra.mxu0 %v3117
    %3777 = vmatprep.subr.mxu0 %v3122
    %3778 = vmatpush1.msra.mxu0 %v3121
    %3779 = vmatprep.subr.mxu0 %v3126
    %3780 = vmatpush1.msra.mxu0 %v3125
    %3781 = vmatprep.subr.mxu0 %v3130
    %3782 = vmatpush1.msra.mxu0 %v3129
    %3783 = vmatprep.subr.mxu0 %v3134
    %3784 = vmatpush1.msra.mxu0 %v3133
    %3785 = vmatprep.subr.mxu0 %v3138
    %3786 = vmatpush1.msra.mxu0 %v3137
    %3787 = vmatprep.subr.mxu0 %v3142
    %3788 = vmatpush1.msra.mxu0 %v3141
    %3789 = vmatprep.subr.mxu0 %v3146
    %3790 = vmatpush1.msra.mxu0 %v3145
    %3791 = vmatprep.subr.mxu0 %v3150
    %3792 = vmatpush1.msra.mxu0 %v3149
    %3793 = vmatprep.subr.mxu0 %v3154
    %3794 = vmatpush1.msra.mxu0 %v3153
    %3795 = vmatprep.mubr.f32.mxu0 %v2768
    %3796 = vmatmul.mubr.f32.gmra.mrb[0].mxu0 %v2767
    %v3797 = vpop.f32.mrb[0].mxu0
    %v3798 = vadd.f32 %v3727, %v3797
    %v3799 = vpop.f32.mrb[0].mxu0
    %v3800 = vadd.f32 %v3729, %v3799
    %3801 = vdwg.mxu0
    %3802 = vmatprep.subr.mxu0 %v3158
    %3803 = vmatpush1.msra.mxu0 %v3157
    %3804 = vmatprep.subr.mxu0 %v3162
    %3805 = vmatpush1.msra.mxu0 %v3161
    %3806 = vmatprep.subr.mxu0 %v3166
    %3807 = vmatpush1.msra.mxu0 %v3165
    %3808 = vmatprep.subr.mxu0 %v3170
    %3809 = vmatpush1.msra.mxu0 %v3169
    %3810 = vmatprep.subr.mxu0 %v3174
    %3811 = vmatpush1.msra.mxu0 %v3173
    %3812 = vmatprep.subr.mxu0 %v3178
    %3813 = vmatpush1.msra.mxu0 %v3177
    %3814 = vmatprep.subr.mxu0 %v3182
    %3815 = vmatpush1.msra.mxu0 %v3181
    %3816 = vmatprep.subr.mxu0 %v3186
    %3817 = vmatpush1.msra.mxu0 %v3185
    %3818 = vmatprep.subr.mxu0 %v3190
    %3819 = vmatpush1.msra.mxu0 %v3189
    %3820 = vmatprep.subr.mxu0 %v3194
    %3821 = vmatpush1.msra.mxu0 %v3193
    %3822 = vmatprep.subr.mxu0 %v3198
    %3823 = vmatpush1.msra.mxu0 %v3197
    %3824 = vmatprep.subr.mxu0 %v3202
    %3825 = vmatpush1.msra.mxu0 %v3201
    %3826 = vmatprep.subr.mxu0 %v3206
    %3827 = vmatpush1.msra.mxu0 %v3205
    %3828 = vmatprep.subr.mxu0 %v3210
    %3829 = vmatpush1.msra.mxu0 %v3209
    %3830 = vmatprep.subr.mxu0 %v3214
    %3831 = vmatpush1.msra.mxu0 %v3213
    %3832 = vmatprep.subr.mxu0 %v3218
    %3833 = vmatpush1.msra.mxu0 %v3217
    %3834 = vmatprep.subr.mxu0 %v3222
    %3835 = vmatpush1.msra.mxu0 %v3221
    %3836 = vmatprep.subr.mxu0 %v3226
    %3837 = vmatpush1.msra.mxu0 %v3225
    %3838 = vmatprep.subr.mxu0 %v3230
    %3839 = vmatpush1.msra.mxu0 %v3229
    %3840 = vmatprep.subr.mxu0 %v3234
    %3841 = vmatpush1.msra.mxu0 %v3233
    %3842 = vmatprep.subr.mxu0 %v3238
    %3843 = vmatpush1.msra.mxu0 %v3237
    %3844 = vmatprep.subr.mxu0 %v3242
    %3845 = vmatpush1.msra.mxu0 %v3241
    %3846 = vmatprep.subr.mxu0 %v3246
    %3847 = vmatpush1.msra.mxu0 %v3245
    %3848 = vmatprep.subr.mxu0 %v3250
    %3849 = vmatpush1.msra.mxu0 %v3249
    %3850 = vmatprep.subr.mxu0 %v3254
    %3851 = vmatpush1.msra.mxu0 %v3253
    %3852 = vmatprep.subr.mxu0 %v3258
    %3853 = vmatpush1.msra.mxu0 %v3257
    %3854 = vmatprep.subr.mxu0 %v3262
    %3855 = vmatpush1.msra.mxu0 %v3261
    %3856 = vmatprep.subr.mxu0 %v3266
    %3857 = vmatpush1.msra.mxu0 %v3265
    %3858 = vmatprep.subr.mxu0 %v3270
    %3859 = vmatpush1.msra.mxu0 %v3269
    %3860 = vmatprep.subr.mxu0 %v3274
    %3861 = vmatpush1.msra.mxu0 %v3273
    %3862 = vmatprep.subr.mxu0 %v3278
    %3863 = vmatpush1.msra.mxu0 %v3277
    %3864 = vmatprep.subr.mxu0 %v3282
    %3865 = vmatpush1.msra.mxu0 %v3281
    %3866 = vmatprep.mubr.f32.mxu0 %v2770
    %3867 = vmatmul.mubr.f32.gmra.mrb[0].mxu0 %v2769
    %v3868 = vpop.f32.mrb[0].mxu0
    %v3869 = vadd.f32 %v3798, %v3868
    %v3870 = vpop.f32.mrb[0].mxu0
    %v3871 = vadd.f32 %v3800, %v3870
    %3872 = vdwg.mxu0
    %v3873 = vmax.f32 %v3585, 0.0
    %v3874 = vmax.f32 %v3587, 0.0
    %v3875 = vmax.f32 %v3869, 0.0
    %v3876 = vmax.f32 %v3871, 0.0
    %v3877 = vld [vmem:[#allocation29] sm:$0xff]
    %v3878 = vld [vmem:[#allocation29 + $0x8] sm:$0xff]
    %v3879 = vld [vmem:[#allocation29 + $0x10] sm:$0xff]
    %v3880 = vld [vmem:[#allocation29 + $0x18] sm:$0xff]
    %v3881 = vld [vmem:[#allocation29 + $0x20] sm:$0xff]
    %v3882 = vld [vmem:[#allocation29 + $0x28] sm:$0xff]
    %v3883 = vld [vmem:[#allocation29 + $0x30] sm:$0xff]
    %v3884 = vld [vmem:[#allocation29 + $0x38] sm:$0xff]
    %v3885 = vld [vmem:[#allocation29 + $0x40] sm:$0xff]
    %v3886 = vld [vmem:[#allocation29 + $0x48] sm:$0xff]
    %v3887 = vld [vmem:[#allocation29 + $0x50] sm:$0xff]
    %v3888 = vld [vmem:[#allocation29 + $0x58] sm:$0xff]
    %v3889 = vld [vmem:[#allocation29 + $0x60] sm:$0xff]
    %v3890 = vld [vmem:[#allocation29 + $0x68] sm:$0xff]
    %v3891 = vld [vmem:[#allocation29 + $0x70] sm:$0xff]
    %v3892 = vld [vmem:[#allocation29 + $0x78] sm:$0xff]
    %v3893 = vld [vmem:[#allocation29 + $0x80] sm:$0xff]
    %v3894 = vld [vmem:[#allocation29 + $0x88] sm:$0xff]
    %v3895 = vld [vmem:[#allocation29 + $0x90] sm:$0xff]
    %v3896 = vld [vmem:[#allocation29 + $0x98] sm:$0xff]
    %v3897 = vld [vmem:[#allocation29 + $0xa0] sm:$0xff]
    %v3898 = vld [vmem:[#allocation29 + $0xa8] sm:$0xff]
    %v3899 = vld [vmem:[#allocation29 + $0xb0] sm:$0xff]
    %v3900 = vld [vmem:[#allocation29 + $0xb8] sm:$0xff]
    %v3901 = vld [vmem:[#allocation29 + $0xc0] sm:$0xff]
    %v3902 = vld [vmem:[#allocation29 + $0xc8] sm:$0xff]
    %v3903 = vld [vmem:[#allocation29 + $0xd0] sm:$0xff]
    %v3904 = vld [vmem:[#allocation29 + $0xd8] sm:$0xff]
    %v3905 = vld [vmem:[#allocation29 + $0xe0] sm:$0xff]
    %v3906 = vld [vmem:[#allocation29 + $0xe8] sm:$0xff]
    %v3907 = vld [vmem:[#allocation29 + $0xf0] sm:$0xff]
    %v3908 = vld [vmem:[#allocation29 + $0xf8] sm:$0xff]
    %v3909 = vld [vmem:[#allocation29 + $0x100] sm:$0xff]
    %v3910 = vld [vmem:[#allocation29 + $0x108] sm:$0xff]
    %v3911 = vld [vmem:[#allocation29 + $0x110] sm:$0xff]
    %v3912 = vld [vmem:[#allocation29 + $0x118] sm:$0xff]
    %v3913 = vld [vmem:[#allocation29 + $0x120] sm:$0xff]
    %v3914 = vld [vmem:[#allocation29 + $0x128] sm:$0xff]
    %v3915 = vld [vmem:[#allocation29 + $0x130] sm:$0xff]
    %v3916 = vld [vmem:[#allocation29 + $0x138] sm:$0xff]
    %v3917 = vld [vmem:[#allocation29 + $0x140] sm:$0xff]
    %v3918 = vld [vmem:[#allocation29 + $0x148] sm:$0xff]
    %v3919 = vld [vmem:[#allocation29 + $0x150] sm:$0xff]
    %v3920 = vld [vmem:[#allocation29 + $0x158] sm:$0xff]
    %v3921 = vld [vmem:[#allocation29 + $0x160] sm:$0xff]
    %v3922 = vld [vmem:[#allocation29 + $0x168] sm:$0xff]
    %v3923 = vld [vmem:[#allocation29 + $0x170] sm:$0xff]
    %v3924 = vld [vmem:[#allocation29 + $0x178] sm:$0xff]
    %v3925 = vld [vmem:[#allocation29 + $0x180] sm:$0xff]
    %v3926 = vld [vmem:[#allocation29 + $0x188] sm:$0xff]
    %v3927 = vld [vmem:[#allocation29 + $0x190] sm:$0xff]
    %v3928 = vld [vmem:[#allocation29 + $0x198] sm:$0xff]
    %v3929 = vld [vmem:[#allocation29 + $0x1a0] sm:$0xff]
    %v3930 = vld [vmem:[#allocation29 + $0x1a8] sm:$0xff]
    %v3931 = vld [vmem:[#allocation29 + $0x1b0] sm:$0xff]
    %v3932 = vld [vmem:[#allocation29 + $0x1b8] sm:$0xff]
    %v3933 = vld [vmem:[#allocation29 + $0x1c0] sm:$0xff]
    %v3934 = vld [vmem:[#allocation29 + $0x1c8] sm:$0xff]
    %v3935 = vld [vmem:[#allocation29 + $0x1d0] sm:$0xff]
    %v3936 = vld [vmem:[#allocation29 + $0x1d8] sm:$0xff]
    %v3937 = vld [vmem:[#allocation29 + $0x1e0] sm:$0xff]
    %v3938 = vld [vmem:[#allocation29 + $0x1e8] sm:$0xff]
    %v3939 = vld [vmem:[#allocation29 + $0x1f0] sm:$0xff]
    %v3940 = vld [vmem:[#allocation29 + $0x1f8] sm:$0xff]
    %v3941 = vld [vmem:[#allocation29 + $0x200] sm:$0xff]
    %v3942 = vld [vmem:[#allocation29 + $0x208] sm:$0xff]
    %v3943 = vld [vmem:[#allocation29 + $0x210] sm:$0xff]
    %v3944 = vld [vmem:[#allocation29 + $0x218] sm:$0xff]
    %v3945 = vld [vmem:[#allocation29 + $0x220] sm:$0xff]
    %v3946 = vld [vmem:[#allocation29 + $0x228] sm:$0xff]
    %v3947 = vld [vmem:[#allocation29 + $0x230] sm:$0xff]
    %v3948 = vld [vmem:[#allocation29 + $0x238] sm:$0xff]
    %v3949 = vld [vmem:[#allocation29 + $0x240] sm:$0xff]
    %v3950 = vld [vmem:[#allocation29 + $0x248] sm:$0xff]
    %v3951 = vld [vmem:[#allocation29 + $0x250] sm:$0xff]
    %v3952 = vld [vmem:[#allocation29 + $0x258] sm:$0xff]
    %v3953 = vld [vmem:[#allocation29 + $0x260] sm:$0xff]
    %v3954 = vld [vmem:[#allocation29 + $0x268] sm:$0xff]
    %v3955 = vld [vmem:[#allocation29 + $0x270] sm:$0xff]
    %v3956 = vld [vmem:[#allocation29 + $0x278] sm:$0xff]
    %v3957 = vld [vmem:[#allocation29 + $0x280] sm:$0xff]
    %v3958 = vld [vmem:[#allocation29 + $0x288] sm:$0xff]
    %v3959 = vld [vmem:[#allocation29 + $0x290] sm:$0xff]
    %v3960 = vld [vmem:[#allocation29 + $0x298] sm:$0xff]
    %v3961 = vld [vmem:[#allocation29 + $0x2a0] sm:$0xff]
    %v3962 = vld [vmem:[#allocation29 + $0x2a8] sm:$0xff]
    %v3963 = vld [vmem:[#allocation29 + $0x2b0] sm:$0xff]
    %v3964 = vld [vmem:[#allocation29 + $0x2b8] sm:$0xff]
    %v3965 = vld [vmem:[#allocation29 + $0x2c0] sm:$0xff]
    %v3966 = vld [vmem:[#allocation29 + $0x2c8] sm:$0xff]
    %v3967 = vld [vmem:[#allocation29 + $0x2d0] sm:$0xff]
    %v3968 = vld [vmem:[#allocation29 + $0x2d8] sm:$0xff]
    %v3969 = vld [vmem:[#allocation29 + $0x2e0] sm:$0xff]
    %v3970 = vld [vmem:[#allocation29 + $0x2e8] sm:$0xff]
    %v3971 = vld [vmem:[#allocation29 + $0x2f0] sm:$0xff]
    %v3972 = vld [vmem:[#allocation29 + $0x2f8] sm:$0xff]
    %v3973 = vld [vmem:[#allocation29 + $0x300] sm:$0xff]
    %v3974 = vld [vmem:[#allocation29 + $0x308] sm:$0xff]
    %v3975 = vld [vmem:[#allocation29 + $0x310] sm:$0xff]
    %v3976 = vld [vmem:[#allocation29 + $0x318] sm:$0xff]
    %v3977 = vld [vmem:[#allocation29 + $0x320] sm:$0xff]
    %v3978 = vld [vmem:[#allocation29 + $0x328] sm:$0xff]
    %v3979 = vld [vmem:[#allocation29 + $0x330] sm:$0xff]
    %v3980 = vld [vmem:[#allocation29 + $0x338] sm:$0xff]
    %v3981 = vld [vmem:[#allocation29 + $0x340] sm:$0xff]
    %v3982 = vld [vmem:[#allocation29 + $0x348] sm:$0xff]
    %v3983 = vld [vmem:[#allocation29 + $0x350] sm:$0xff]
    %v3984 = vld [vmem:[#allocation29 + $0x358] sm:$0xff]
    %v3985 = vld [vmem:[#allocation29 + $0x360] sm:$0xff]
    %v3986 = vld [vmem:[#allocation29 + $0x368] sm:$0xff]
    %v3987 = vld [vmem:[#allocation29 + $0x370] sm:$0xff]
    %v3988 = vld [vmem:[#allocation29 + $0x378] sm:$0xff]
    %v3989 = vld [vmem:[#allocation29 + $0x380] sm:$0xff]
    %v3990 = vld [vmem:[#allocation29 + $0x388] sm:$0xff]
    %v3991 = vld [vmem:[#allocation29 + $0x390] sm:$0xff]
    %v3992 = vld [vmem:[#allocation29 + $0x398] sm:$0xff]
    %v3993 = vld [vmem:[#allocation29 + $0x3a0] sm:$0xff]
    %v3994 = vld [vmem:[#allocation29 + $0x3a8] sm:$0xff]
    %v3995 = vld [vmem:[#allocation29 + $0x3b0] sm:$0xff]
    %v3996 = vld [vmem:[#allocation29 + $0x3b8] sm:$0xff]
    %v3997 = vld [vmem:[#allocation29 + $0x3c0] sm:$0xff]
    %v3998 = vld [vmem:[#allocation29 + $0x3c8] sm:$0xff]
    %v3999 = vld [vmem:[#allocation29 + $0x3d0] sm:$0xff]
    %v4000 = vld [vmem:[#allocation29 + $0x3d8] sm:$0xff]
    %v4001 = vld [vmem:[#allocation29 + $0x3e0] sm:$0xff]
    %v4002 = vld [vmem:[#allocation29 + $0x3e8] sm:$0xff]
    %v4003 = vld [vmem:[#allocation29 + $0x3f0] sm:$0xff]
    %v4004 = vld [vmem:[#allocation29 + $0x3f8] sm:$0xff]
    %v4005 = vld [vmem:[#allocation29 + $0x400] sm:$0xff]
    %v4006 = vld [vmem:[#allocation29 + $0x408] sm:$0xff]
    %v4007 = vld [vmem:[#allocation29 + $0x410] sm:$0xff]
    %v4008 = vld [vmem:[#allocation29 + $0x418] sm:$0xff]
    %v4009 = vld [vmem:[#allocation29 + $0x420] sm:$0xff]
    %v4010 = vld [vmem:[#allocation29 + $0x428] sm:$0xff]
    %v4011 = vld [vmem:[#allocation29 + $0x430] sm:$0xff]
    %v4012 = vld [vmem:[#allocation29 + $0x438] sm:$0xff]
    %v4013 = vld [vmem:[#allocation29 + $0x440] sm:$0xff]
    %v4014 = vld [vmem:[#allocation29 + $0x448] sm:$0xff]
    %v4015 = vld [vmem:[#allocation29 + $0x450] sm:$0xff]
    %v4016 = vld [vmem:[#allocation29 + $0x458] sm:$0xff]
    %v4017 = vld [vmem:[#allocation29 + $0x460] sm:$0xff]
    %v4018 = vld [vmem:[#allocation29 + $0x468] sm:$0xff]
    %v4019 = vld [vmem:[#allocation29 + $0x470] sm:$0xff]
    %v4020 = vld [vmem:[#allocation29 + $0x478] sm:$0xff]
    %v4021 = vld [vmem:[#allocation29 + $0x480] sm:$0xff]
    %v4022 = vld [vmem:[#allocation29 + $0x488] sm:$0xff]
    %v4023 = vld [vmem:[#allocation29 + $0x490] sm:$0xff]
    %v4024 = vld [vmem:[#allocation29 + $0x498] sm:$0xff]
    %v4025 = vld [vmem:[#allocation29 + $0x4a0] sm:$0xff]
    %v4026 = vld [vmem:[#allocation29 + $0x4a8] sm:$0xff]
    %v4027 = vld [vmem:[#allocation29 + $0x4b0] sm:$0xff]
    %v4028 = vld [vmem:[#allocation29 + $0x4b8] sm:$0xff]
    %v4029 = vld [vmem:[#allocation29 + $0x4c0] sm:$0xff]
    %v4030 = vld [vmem:[#allocation29 + $0x4c8] sm:$0xff]
    %v4031 = vld [vmem:[#allocation29 + $0x4d0] sm:$0xff]
    %v4032 = vld [vmem:[#allocation29 + $0x4d8] sm:$0xff]
    %v4033 = vld [vmem:[#allocation29 + $0x4e0] sm:$0xff]
    %v4034 = vld [vmem:[#allocation29 + $0x4e8] sm:$0xff]
    %v4035 = vld [vmem:[#allocation29 + $0x4f0] sm:$0xff]
    %v4036 = vld [vmem:[#allocation29 + $0x4f8] sm:$0xff]
    %v4037 = vld [vmem:[#allocation29 + $0x500] sm:$0xff]
    %v4038 = vld [vmem:[#allocation29 + $0x508] sm:$0xff]
    %v4039 = vld [vmem:[#allocation29 + $0x510] sm:$0xff]
    %v4040 = vld [vmem:[#allocation29 + $0x518] sm:$0xff]
    %v4041 = vld [vmem:[#allocation29 + $0x520] sm:$0xff]
    %v4042 = vld [vmem:[#allocation29 + $0x528] sm:$0xff]
    %v4043 = vld [vmem:[#allocation29 + $0x530] sm:$0xff]
    %v4044 = vld [vmem:[#allocation29 + $0x538] sm:$0xff]
    %v4045 = vld [vmem:[#allocation29 + $0x540] sm:$0xff]
    %v4046 = vld [vmem:[#allocation29 + $0x548] sm:$0xff]
    %v4047 = vld [vmem:[#allocation29 + $0x550] sm:$0xff]
    %v4048 = vld [vmem:[#allocation29 + $0x558] sm:$0xff]
    %v4049 = vld [vmem:[#allocation29 + $0x560] sm:$0xff]
    %v4050 = vld [vmem:[#allocation29 + $0x568] sm:$0xff]
    %v4051 = vld [vmem:[#allocation29 + $0x570] sm:$0xff]
    %v4052 = vld [vmem:[#allocation29 + $0x578] sm:$0xff]
    %v4053 = vld [vmem:[#allocation29 + $0x580] sm:$0xff]
    %v4054 = vld [vmem:[#allocation29 + $0x588] sm:$0xff]
    %v4055 = vld [vmem:[#allocation29 + $0x590] sm:$0xff]
    %v4056 = vld [vmem:[#allocation29 + $0x598] sm:$0xff]
    %v4057 = vld [vmem:[#allocation29 + $0x5a0] sm:$0xff]
    %v4058 = vld [vmem:[#allocation29 + $0x5a8] sm:$0xff]
    %v4059 = vld [vmem:[#allocation29 + $0x5b0] sm:$0xff]
    %v4060 = vld [vmem:[#allocation29 + $0x5b8] sm:$0xff]
    %v4061 = vld [vmem:[#allocation29 + $0x5c0] sm:$0xff]
    %v4062 = vld [vmem:[#allocation29 + $0x5c8] sm:$0xff]
    %v4063 = vld [vmem:[#allocation29 + $0x5d0] sm:$0xff]
    %v4064 = vld [vmem:[#allocation29 + $0x5d8] sm:$0xff]
    %v4065 = vld [vmem:[#allocation29 + $0x5e0] sm:$0xff]
    %v4066 = vld [vmem:[#allocation29 + $0x5e8] sm:$0xff]
    %v4067 = vld [vmem:[#allocation29 + $0x5f0] sm:$0xff]
    %v4068 = vld [vmem:[#allocation29 + $0x5f8] sm:$0xff]
    %v4069 = vld [vmem:[#allocation29 + $0x600] sm:$0xff]
    %v4070 = vld [vmem:[#allocation29 + $0x608] sm:$0xff]
    %v4071 = vld [vmem:[#allocation29 + $0x610] sm:$0xff]
    %v4072 = vld [vmem:[#allocation29 + $0x618] sm:$0xff]
    %v4073 = vld [vmem:[#allocation29 + $0x620] sm:$0xff]
    %v4074 = vld [vmem:[#allocation29 + $0x628] sm:$0xff]
    %v4075 = vld [vmem:[#allocation29 + $0x630] sm:$0xff]
    %v4076 = vld [vmem:[#allocation29 + $0x638] sm:$0xff]
    %v4077 = vld [vmem:[#allocation29 + $0x640] sm:$0xff]
    %v4078 = vld [vmem:[#allocation29 + $0x648] sm:$0xff]
    %v4079 = vld [vmem:[#allocation29 + $0x650] sm:$0xff]
    %v4080 = vld [vmem:[#allocation29 + $0x658] sm:$0xff]
    %v4081 = vld [vmem:[#allocation29 + $0x660] sm:$0xff]
    %v4082 = vld [vmem:[#allocation29 + $0x668] sm:$0xff]
    %v4083 = vld [vmem:[#allocation29 + $0x670] sm:$0xff]
    %v4084 = vld [vmem:[#allocation29 + $0x678] sm:$0xff]
    %v4085 = vld [vmem:[#allocation29 + $0x680] sm:$0xff]
    %v4086 = vld [vmem:[#allocation29 + $0x688] sm:$0xff]
    %v4087 = vld [vmem:[#allocation29 + $0x690] sm:$0xff]
    %v4088 = vld [vmem:[#allocation29 + $0x698] sm:$0xff]
    %v4089 = vld [vmem:[#allocation29 + $0x6a0] sm:$0xff]
    %v4090 = vld [vmem:[#allocation29 + $0x6a8] sm:$0xff]
    %v4091 = vld [vmem:[#allocation29 + $0x6b0] sm:$0xff]
    %v4092 = vld [vmem:[#allocation29 + $0x6b8] sm:$0xff]
    %v4093 = vld [vmem:[#allocation29 + $0x6c0] sm:$0xff]
    %v4094 = vld [vmem:[#allocation29 + $0x6c8] sm:$0xff]
    %v4095 = vld [vmem:[#allocation29 + $0x6d0] sm:$0xff]
    %v4096 = vld [vmem:[#allocation29 + $0x6d8] sm:$0xff]
    %v4097 = vld [vmem:[#allocation29 + $0x6e0] sm:$0xff]
    %v4098 = vld [vmem:[#allocation29 + $0x6e8] sm:$0xff]
    %v4099 = vld [vmem:[#allocation29 + $0x6f0] sm:$0xff]
    %v4100 = vld [vmem:[#allocation29 + $0x6f8] sm:$0xff]
    %v4101 = vld [vmem:[#allocation29 + $0x700] sm:$0xff]
    %v4102 = vld [vmem:[#allocation29 + $0x708] sm:$0xff]
    %v4103 = vld [vmem:[#allocation29 + $0x710] sm:$0xff]
    %v4104 = vld [vmem:[#allocation29 + $0x718] sm:$0xff]
    %v4105 = vld [vmem:[#allocation29 + $0x720] sm:$0xff]
    %v4106 = vld [vmem:[#allocation29 + $0x728] sm:$0xff]
    %v4107 = vld [vmem:[#allocation29 + $0x730] sm:$0xff]
    %v4108 = vld [vmem:[#allocation29 + $0x738] sm:$0xff]
    %v4109 = vld [vmem:[#allocation29 + $0x740] sm:$0xff]
    %v4110 = vld [vmem:[#allocation29 + $0x748] sm:$0xff]
    %v4111 = vld [vmem:[#allocation29 + $0x750] sm:$0xff]
    %v4112 = vld [vmem:[#allocation29 + $0x758] sm:$0xff]
    %v4113 = vld [vmem:[#allocation29 + $0x760] sm:$0xff]
    %v4114 = vld [vmem:[#allocation29 + $0x768] sm:$0xff]
    %v4115 = vld [vmem:[#allocation29 + $0x770] sm:$0xff]
    %v4116 = vld [vmem:[#allocation29 + $0x778] sm:$0xff]
    %v4117 = vld [vmem:[#allocation29 + $0x780] sm:$0xff]
    %v4118 = vld [vmem:[#allocation29 + $0x788] sm:$0xff]
    %v4119 = vld [vmem:[#allocation29 + $0x790] sm:$0xff]
    %v4120 = vld [vmem:[#allocation29 + $0x798] sm:$0xff]
    %v4121 = vld [vmem:[#allocation29 + $0x7a0] sm:$0xff]
    %v4122 = vld [vmem:[#allocation29 + $0x7a8] sm:$0xff]
    %v4123 = vld [vmem:[#allocation29 + $0x7b0] sm:$0xff]
    %v4124 = vld [vmem:[#allocation29 + $0x7b8] sm:$0xff]
    %v4125 = vld [vmem:[#allocation29 + $0x7c0] sm:$0xff]
    %v4126 = vld [vmem:[#allocation29 + $0x7c8] sm:$0xff]
    %v4127 = vld [vmem:[#allocation29 + $0x7d0] sm:$0xff]
    %v4128 = vld [vmem:[#allocation29 + $0x7d8] sm:$0xff]
    %v4129 = vld [vmem:[#allocation29 + $0x7e0] sm:$0xff]
    %v4130 = vld [vmem:[#allocation29 + $0x7e8] sm:$0xff]
    %v4131 = vld [vmem:[#allocation29 + $0x7f0] sm:$0xff]
    %v4132 = vld [vmem:[#allocation29 + $0x7f8] sm:$0xff]
    %v4133 = vld [vmem:[#allocation30] sm:$0xf]
    %v4135 = vlaneseq
    %v4136 = vshrl.u32 %v4135, 7
    %v4137 = vsub.s32 0, %v4136
    %v4138 = vrot.slane %v4133, %v4137
    %v4139 = vlaneseq
    %v4140 = vshrl.u32 %v4139, 7
    %v4141 = vsub.s32 1, %v4140
    %v4142 = vrot.slane %v4133, %v4141
    %v4143 = vlaneseq
    %v4144 = vshrl.u32 %v4143, 7
    %v4145 = vsub.s32 2, %v4144
    %v4146 = vrot.slane %v4133, %v4145
    %v4147 = vlaneseq
    %v4148 = vshrl.u32 %v4147, 7
    %v4149 = vsub.s32 3, %v4148
    %v4150 = vrot.slane %v4133, %v4149
    %4155 = vmatprep.subr.mxu0 %v3878
    %4156 = vmatpush1.msra.mxu0 %v3877
    %4157 = vmatprep.subr.mxu0 %v3882
    %4158 = vmatpush1.msra.mxu0 %v3881
    %4159 = vmatprep.subr.mxu0 %v3886
    %4160 = vmatpush1.msra.mxu0 %v3885
    %4161 = vmatprep.subr.mxu0 %v3890
    %4162 = vmatpush1.msra.mxu0 %v3889
    %4163 = vmatprep.subr.mxu0 %v3894
    %4164 = vmatpush1.msra.mxu0 %v3893
    %4165 = vmatprep.subr.mxu0 %v3898
    %4166 = vmatpush1.msra.mxu0 %v3897
    %4167 = vmatprep.subr.mxu0 %v3902
    %4168 = vmatpush1.msra.mxu0 %v3901
    %4169 = vmatprep.subr.mxu0 %v3906
    %4170 = vmatpush1.msra.mxu0 %v3905
    %4171 = vmatprep.subr.mxu0 %v3910
    %4172 = vmatpush1.msra.mxu0 %v3909
    %4173 = vmatprep.subr.mxu0 %v3914
    %4174 = vmatpush1.msra.mxu0 %v3913
    %4175 = vmatprep.subr.mxu0 %v3918
    %4176 = vmatpush1.msra.mxu0 %v3917
    %4177 = vmatprep.subr.mxu0 %v3922
    %4178 = vmatpush1.msra.mxu0 %v3921
    %4179 = vmatprep.subr.mxu0 %v3926
    %4180 = vmatpush1.msra.mxu0 %v3925
    %4181 = vmatprep.subr.mxu0 %v3930
    %4182 = vmatpush1.msra.mxu0 %v3929
    %4183 = vmatprep.subr.mxu0 %v3934
    %4184 = vmatpush1.msra.mxu0 %v3933
    %4185 = vmatprep.subr.mxu0 %v3938
    %4186 = vmatpush1.msra.mxu0 %v3937
    %4187 = vmatprep.subr.mxu0 %v3942
    %4188 = vmatpush1.msra.mxu0 %v3941
    %4189 = vmatprep.subr.mxu0 %v3946
    %4190 = vmatpush1.msra.mxu0 %v3945
    %4191 = vmatprep.subr.mxu0 %v3950
    %4192 = vmatpush1.msra.mxu0 %v3949
    %4193 = vmatprep.subr.mxu0 %v3954
    %4194 = vmatpush1.msra.mxu0 %v3953
    %4195 = vmatprep.subr.mxu0 %v3958
    %4196 = vmatpush1.msra.mxu0 %v3957
    %4197 = vmatprep.subr.mxu0 %v3962
    %4198 = vmatpush1.msra.mxu0 %v3961
    %4199 = vmatprep.subr.mxu0 %v3966
    %4200 = vmatpush1.msra.mxu0 %v3965
    %4201 = vmatprep.subr.mxu0 %v3970
    %4202 = vmatpush1.msra.mxu0 %v3969
    %4203 = vmatprep.subr.mxu0 %v3974
    %4204 = vmatpush1.msra.mxu0 %v3973
    %4205 = vmatprep.subr.mxu0 %v3978
    %4206 = vmatpush1.msra.mxu0 %v3977
    %4207 = vmatprep.subr.mxu0 %v3982
    %4208 = vmatpush1.msra.mxu0 %v3981
    %4209 = vmatprep.subr.mxu0 %v3986
    %4210 = vmatpush1.msra.mxu0 %v3985
    %4211 = vmatprep.subr.mxu0 %v3990
    %4212 = vmatpush1.msra.mxu0 %v3989
    %4213 = vmatprep.subr.mxu0 %v3994
    %4214 = vmatpush1.msra.mxu0 %v3993
    %4215 = vmatprep.subr.mxu0 %v3998
    %4216 = vmatpush1.msra.mxu0 %v3997
    %4217 = vmatprep.subr.mxu0 %v4002
    %4218 = vmatpush1.msra.mxu0 %v4001
    %4219 = vmatprep.mubr.f32.mxu0 %v3874
    %4220 = vmatmul.mubr.f32.gmra.mrb[0].mxu0 %v3873
    %v4221 = vpop.f32.mrb[0].mxu0
    %v4222 = vadd.f32 %v4138, %v4221
    %v4223 = vpop.f32.mrb[0].mxu0
    %v4224 = vadd.f32 %v4142, %v4223
    %4225 = vdwg.mxu0
    %4226 = vmatprep.subr.mxu0 %v4006
    %4227 = vmatpush1.msra.mxu0 %v4005
    %4228 = vmatprep.subr.mxu0 %v4010
    %4229 = vmatpush1.msra.mxu0 %v4009
    %4230 = vmatprep.subr.mxu0 %v4014
    %4231 = vmatpush1.msra.mxu0 %v4013
    %4232 = vmatprep.subr.mxu0 %v4018
    %4233 = vmatpush1.msra.mxu0 %v4017
    %4234 = vmatprep.subr.mxu0 %v4022
    %4235 = vmatpush1.msra.mxu0 %v4021
    %4236 = vmatprep.subr.mxu0 %v4026
    %4237 = vmatpush1.msra.mxu0 %v4025
    %4238 = vmatprep.subr.mxu0 %v4030
    %4239 = vmatpush1.msra.mxu0 %v4029
    %4240 = vmatprep.subr.mxu0 %v4034
    %4241 = vmatpush1.msra.mxu0 %v4033
    %4242 = vmatprep.subr.mxu0 %v4038
    %4243 = vmatpush1.msra.mxu0 %v4037
    %4244 = vmatprep.subr.mxu0 %v4042
    %4245 = vmatpush1.msra.mxu0 %v4041
    %4246 = vmatprep.subr.mxu0 %v4046
    %4247 = vmatpush1.msra.mxu0 %v4045
    %4248 = vmatprep.subr.mxu0 %v4050
    %4249 = vmatpush1.msra.mxu0 %v4049
    %4250 = vmatprep.subr.mxu0 %v4054
    %4251 = vmatpush1.msra.mxu0 %v4053
    %4252 = vmatprep.subr.mxu0 %v4058
    %4253 = vmatpush1.msra.mxu0 %v4057
    %4254 = vmatprep.subr.mxu0 %v4062
    %4255 = vmatpush1.msra.mxu0 %v4061
    %4256 = vmatprep.subr.mxu0 %v4066
    %4257 = vmatpush1.msra.mxu0 %v4065
    %4258 = vmatprep.subr.mxu0 %v4070
    %4259 = vmatpush1.msra.mxu0 %v4069
    %4260 = vmatprep.subr.mxu0 %v4074
    %4261 = vmatpush1.msra.mxu0 %v4073
    %4262 = vmatprep.subr.mxu0 %v4078
    %4263 = vmatpush1.msra.mxu0 %v4077
    %4264 = vmatprep.subr.mxu0 %v4082
    %4265 = vmatpush1.msra.mxu0 %v4081
    %4266 = vmatprep.subr.mxu0 %v4086
    %4267 = vmatpush1.msra.mxu0 %v4085
    %4268 = vmatprep.subr.mxu0 %v4090
    %4269 = vmatpush1.msra.mxu0 %v4089
    %4270 = vmatprep.subr.mxu0 %v4094
    %4271 = vmatpush1.msra.mxu0 %v4093
    %4272 = vmatprep.subr.mxu0 %v4098
    %4273 = vmatpush1.msra.mxu0 %v4097
    %4274 = vmatprep.subr.mxu0 %v4102
    %4275 = vmatpush1.msra.mxu0 %v4101
    %4276 = vmatprep.subr.mxu0 %v4106
    %4277 = vmatpush1.msra.mxu0 %v4105
    %4278 = vmatprep.subr.mxu0 %v4110
    %4279 = vmatpush1.msra.mxu0 %v4109
    %4280 = vmatprep.subr.mxu0 %v4114
    %4281 = vmatpush1.msra.mxu0 %v4113
    %4282 = vmatprep.subr.mxu0 %v4118
    %4283 = vmatpush1.msra.mxu0 %v4117
    %4284 = vmatprep.subr.mxu0 %v4122
    %4285 = vmatpush1.msra.mxu0 %v4121
    %4286 = vmatprep.subr.mxu0 %v4126
    %4287 = vmatpush1.msra.mxu0 %v4125
    %4288 = vmatprep.subr.mxu0 %v4130
    %4289 = vmatpush1.msra.mxu0 %v4129
    %4290 = vmatprep.mubr.f32.mxu0 %v3876
    %4291 = vmatmul.mubr.f32.gmra.mrb[0].mxu0 %v3875
    %v4292 = vpop.f32.mrb[0].mxu0
    %v4293 = vadd.f32 %v4222, %v4292
    %v4294 = vpop.f32.mrb[0].mxu0
    %v4295 = vadd.f32 %v4224, %v4294
    %4296 = vdwg.mxu0
    %4297 = vmatprep.subr.mxu0 %v3880
    %4298 = vmatpush1.msra.mxu0 %v3879
    %4299 = vmatprep.subr.mxu0 %v3884
    %4300 = vmatpush1.msra.mxu0 %v3883
    %4301 = vmatprep.subr.mxu0 %v3888
    %4302 = vmatpush1.msra.mxu0 %v3887
    %4303 = vmatprep.subr.mxu0 %v3892
    %4304 = vmatpush1.msra.mxu0 %v3891
    %4305 = vmatprep.subr.mxu0 %v3896
    %4306 = vmatpush1.msra.mxu0 %v3895
    %4307 = vmatprep.subr.mxu0 %v3900
    %4308 = vmatpush1.msra.mxu0 %v3899
    %4309 = vmatprep.subr.mxu0 %v3904
    %4310 = vmatpush1.msra.mxu0 %v3903
    %4311 = vmatprep.subr.mxu0 %v3908
    %4312 = vmatpush1.msra.mxu0 %v3907
    %4313 = vmatprep.subr.mxu0 %v3912
    %4314 = vmatpush1.msra.mxu0 %v3911
    %4315 = vmatprep.subr.mxu0 %v3916
    %4316 = vmatpush1.msra.mxu0 %v3915
    %4317 = vmatprep.subr.mxu0 %v3920
    %4318 = vmatpush1.msra.mxu0 %v3919
    %4319 = vmatprep.subr.mxu0 %v3924
    %4320 = vmatpush1.msra.mxu0 %v3923
    %4321 = vmatprep.subr.mxu0 %v3928
    %4322 = vmatpush1.msra.mxu0 %v3927
    %4323 = vmatprep.subr.mxu0 %v3932
    %4324 = vmatpush1.msra.mxu0 %v3931
    %4325 = vmatprep.subr.mxu0 %v3936
    %4326 = vmatpush1.msra.mxu0 %v3935
    %4327 = vmatprep.subr.mxu0 %v3940
    %4328 = vmatpush1.msra.mxu0 %v3939
    %4329 = vmatprep.subr.mxu0 %v3944
    %4330 = vmatpush1.msra.mxu0 %v3943
    %4331 = vmatprep.subr.mxu0 %v3948
    %4332 = vmatpush1.msra.mxu0 %v3947
    %4333 = vmatprep.subr.mxu0 %v3952
    %4334 = vmatpush1.msra.mxu0 %v3951
    %4335 = vmatprep.subr.mxu0 %v3956
    %4336 = vmatpush1.msra.mxu0 %v3955
    %4337 = vmatprep.subr.mxu0 %v3960
    %4338 = vmatpush1.msra.mxu0 %v3959
    %4339 = vmatprep.subr.mxu0 %v3964
    %4340 = vmatpush1.msra.mxu0 %v3963
    %4341 = vmatprep.subr.mxu0 %v3968
    %4342 = vmatpush1.msra.mxu0 %v3967
    %4343 = vmatprep.subr.mxu0 %v3972
    %4344 = vmatpush1.msra.mxu0 %v3971
    %4345 = vmatprep.subr.mxu0 %v3976
    %4346 = vmatpush1.msra.mxu0 %v3975
    %4347 = vmatprep.subr.mxu0 %v3980
    %4348 = vmatpush1.msra.mxu0 %v3979
    %4349 = vmatprep.subr.mxu0 %v3984
    %4350 = vmatpush1.msra.mxu0 %v3983
    %4351 = vmatprep.subr.mxu0 %v3988
    %4352 = vmatpush1.msra.mxu0 %v3987
    %4353 = vmatprep.subr.mxu0 %v3992
    %4354 = vmatpush1.msra.mxu0 %v3991
    %4355 = vmatprep.subr.mxu0 %v3996
    %4356 = vmatpush1.msra.mxu0 %v3995
    %4357 = vmatprep.subr.mxu0 %v4000
    %4358 = vmatpush1.msra.mxu0 %v3999
    %4359 = vmatprep.subr.mxu0 %v4004
    %4360 = vmatpush1.msra.mxu0 %v4003
    %4361 = vmatprep.mubr.f32.mxu0 %v3874
    %4362 = vmatmul.mubr.f32.gmra.mrb[0].mxu0 %v3873
    %v4363 = vpop.f32.mrb[0].mxu0
    %v4364 = vadd.f32 %v4146, %v4363
    %v4365 = vpop.f32.mrb[0].mxu0
    %v4366 = vadd.f32 %v4150, %v4365
    %4367 = vdwg.mxu0
    %4368 = vmatprep.subr.mxu0 %v4008
    %4369 = vmatpush1.msra.mxu0 %v4007
    %4370 = vmatprep.subr.mxu0 %v4012
    %4371 = vmatpush1.msra.mxu0 %v4011
    %4372 = vmatprep.subr.mxu0 %v4016
    %4373 = vmatpush1.msra.mxu0 %v4015
    %4374 = vmatprep.subr.mxu0 %v4020
    %4375 = vmatpush1.msra.mxu0 %v4019
    %4376 = vmatprep.subr.mxu0 %v4024
    %4377 = vmatpush1.msra.mxu0 %v4023
    %4378 = vmatprep.subr.mxu0 %v4028
    %4379 = vmatpush1.msra.mxu0 %v4027
    %4380 = vmatprep.subr.mxu0 %v4032
    %4381 = vmatpush1.msra.mxu0 %v4031
    %4382 = vmatprep.subr.mxu0 %v4036
    %4383 = vmatpush1.msra.mxu0 %v4035
    %4384 = vmatprep.subr.mxu0 %v4040
    %4385 = vmatpush1.msra.mxu0 %v4039
    %4386 = vmatprep.subr.mxu0 %v4044
    %4387 = vmatpush1.msra.mxu0 %v4043
    %4388 = vmatprep.subr.mxu0 %v4048
    %4389 = vmatpush1.msra.mxu0 %v4047
    %4390 = vmatprep.subr.mxu0 %v4052
    %4391 = vmatpush1.msra.mxu0 %v4051
    %4392 = vmatprep.subr.mxu0 %v4056
    %4393 = vmatpush1.msra.mxu0 %v4055
    %4394 = vmatprep.subr.mxu0 %v4060
    %4395 = vmatpush1.msra.mxu0 %v4059
    %4396 = vmatprep.subr.mxu0 %v4064
    %4397 = vmatpush1.msra.mxu0 %v4063
    %4398 = vmatprep.subr.mxu0 %v4068
    %4399 = vmatpush1.msra.mxu0 %v4067
    %4400 = vmatprep.subr.mxu0 %v4072
    %4401 = vmatpush1.msra.mxu0 %v4071
    %4402 = vmatprep.subr.mxu0 %v4076
    %4403 = vmatpush1.msra.mxu0 %v4075
    %4404 = vmatprep.subr.mxu0 %v4080
    %4405 = vmatpush1.msra.mxu0 %v4079
    %4406 = vmatprep.subr.mxu0 %v4084
    %4407 = vmatpush1.msra.mxu0 %v4083
    %4408 = vmatprep.subr.mxu0 %v4088
    %4409 = vmatpush1.msra.mxu0 %v4087
    %4410 = vmatprep.subr.mxu0 %v4092
    %4411 = vmatpush1.msra.mxu0 %v4091
    %4412 = vmatprep.subr.mxu0 %v4096
    %4413 = vmatpush1.msra.mxu0 %v4095
    %4414 = vmatprep.subr.mxu0 %v4100
    %4415 = vmatpush1.msra.mxu0 %v4099
    %4416 = vmatprep.subr.mxu0 %v4104
    %4417 = vmatpush1.msra.mxu0 %v4103
    %4418 = vmatprep.subr.mxu0 %v4108
    %4419 = vmatpush1.msra.mxu0 %v4107
    %4420 = vmatprep.subr.mxu0 %v4112
    %4421 = vmatpush1.msra.mxu0 %v4111
    %4422 = vmatprep.subr.mxu0 %v4116
    %4423 = vmatpush1.msra.mxu0 %v4115
    %4424 = vmatprep.subr.mxu0 %v4120
    %4425 = vmatpush1.msra.mxu0 %v4119
    %4426 = vmatprep.subr.mxu0 %v4124
    %4427 = vmatpush1.msra.mxu0 %v4123
    %4428 = vmatprep.subr.mxu0 %v4128
    %4429 = vmatpush1.msra.mxu0 %v4127
    %4430 = vmatprep.subr.mxu0 %v4132
    %4431 = vmatpush1.msra.mxu0 %v4131
    %4432 = vmatprep.mubr.f32.mxu0 %v3876
    %4433 = vmatmul.mubr.f32.gmra.mrb[0].mxu0 %v3875
    %v4434 = vpop.f32.mrb[0].mxu0
    %v4435 = vadd.f32 %v4364, %v4434
    %v4436 = vpop.f32.mrb[0].mxu0
    %v4437 = vadd.f32 %v4366, %v4436
    %4438 = vdwg.mxu0
    %v4439 = vmax.f32 %v4293, 0.0
    %v4440 = vmax.f32 %v4295, 0.0
    %v4441 = vmax.f32 %v4435, 0.0
    %v4442 = vmax.f32 %v4437, 0.0
    %v4443 = vld [vmem:[#allocation32] sm:$0xff]
    %v4444 = vld [vmem:[#allocation32 + $0x8] sm:$0xff]
    %v4445 = vld [vmem:[#allocation32 + $0x10] sm:$0xff]
    %v4446 = vld [vmem:[#allocation32 + $0x18] sm:$0xff]
    %v4447 = vld [vmem:[#allocation32 + $0x20] sm:$0xff]
    %v4448 = vld [vmem:[#allocation32 + $0x28] sm:$0xff]
    %v4449 = vld [vmem:[#allocation32 + $0x30] sm:$0xff]
    %v4450 = vld [vmem:[#allocation32 + $0x38] sm:$0xff]
    %v4451 = vld [vmem:[#allocation32 + $0x40] sm:$0xff]
    %v4452 = vld [vmem:[#allocation32 + $0x48] sm:$0xff]
    %v4453 = vld [vmem:[#allocation32 + $0x50] sm:$0xff]
    %v4454 = vld [vmem:[#allocation32 + $0x58] sm:$0xff]
    %v4455 = vld [vmem:[#allocation32 + $0x60] sm:$0xff]
    %v4456 = vld [vmem:[#allocation32 + $0x68] sm:$0xff]
    %v4457 = vld [vmem:[#allocation32 + $0x70] sm:$0xff]
    %v4458 = vld [vmem:[#allocation32 + $0x78] sm:$0xff]
    %v4459 = vld [vmem:[#allocation32 + $0x80] sm:$0xff]
    %v4460 = vld [vmem:[#allocation32 + $0x88] sm:$0xff]
    %v4461 = vld [vmem:[#allocation32 + $0x90] sm:$0xff]
    %v4462 = vld [vmem:[#allocation32 + $0x98] sm:$0xff]
    %v4463 = vld [vmem:[#allocation32 + $0xa0] sm:$0xff]
    %v4464 = vld [vmem:[#allocation32 + $0xa8] sm:$0xff]
    %v4465 = vld [vmem:[#allocation32 + $0xb0] sm:$0xff]
    %v4466 = vld [vmem:[#allocation32 + $0xb8] sm:$0xff]
    %v4467 = vld [vmem:[#allocation32 + $0xc0] sm:$0xff]
    %v4468 = vld [vmem:[#allocation32 + $0xc8] sm:$0xff]
    %v4469 = vld [vmem:[#allocation32 + $0xd0] sm:$0xff]
    %v4470 = vld [vmem:[#allocation32 + $0xd8] sm:$0xff]
    %v4471 = vld [vmem:[#allocation32 + $0xe0] sm:$0xff]
    %v4472 = vld [vmem:[#allocation32 + $0xe8] sm:$0xff]
    %v4473 = vld [vmem:[#allocation32 + $0xf0] sm:$0xff]
    %v4474 = vld [vmem:[#allocation32 + $0xf8] sm:$0xff]
    %v4475 = vld [vmem:[#allocation32 + $0x100] sm:$0xff]
    %v4476 = vld [vmem:[#allocation32 + $0x108] sm:$0xff]
    %v4477 = vld [vmem:[#allocation32 + $0x110] sm:$0xff]
    %v4478 = vld [vmem:[#allocation32 + $0x118] sm:$0xff]
    %v4479 = vld [vmem:[#allocation32 + $0x120] sm:$0xff]
    %v4480 = vld [vmem:[#allocation32 + $0x128] sm:$0xff]
    %v4481 = vld [vmem:[#allocation32 + $0x130] sm:$0xff]
    %v4482 = vld [vmem:[#allocation32 + $0x138] sm:$0xff]
    %v4483 = vld [vmem:[#allocation32 + $0x140] sm:$0xff]
    %v4484 = vld [vmem:[#allocation32 + $0x148] sm:$0xff]
    %v4485 = vld [vmem:[#allocation32 + $0x150] sm:$0xff]
    %v4486 = vld [vmem:[#allocation32 + $0x158] sm:$0xff]
    %v4487 = vld [vmem:[#allocation32 + $0x160] sm:$0xff]
    %v4488 = vld [vmem:[#allocation32 + $0x168] sm:$0xff]
    %v4489 = vld [vmem:[#allocation32 + $0x170] sm:$0xff]
    %v4490 = vld [vmem:[#allocation32 + $0x178] sm:$0xff]
    %v4491 = vld [vmem:[#allocation32 + $0x180] sm:$0xff]
    %v4492 = vld [vmem:[#allocation32 + $0x188] sm:$0xff]
    %v4493 = vld [vmem:[#allocation32 + $0x190] sm:$0xff]
    %v4494 = vld [vmem:[#allocation32 + $0x198] sm:$0xff]
    %v4495 = vld [vmem:[#allocation32 + $0x1a0] sm:$0xff]
    %v4496 = vld [vmem:[#allocation32 + $0x1a8] sm:$0xff]
    %v4497 = vld [vmem:[#allocation32 + $0x1b0] sm:$0xff]
    %v4498 = vld [vmem:[#allocation32 + $0x1b8] sm:$0xff]
    %v4499 = vld [vmem:[#allocation32 + $0x1c0] sm:$0xff]
    %v4500 = vld [vmem:[#allocation32 + $0x1c8] sm:$0xff]
    %v4501 = vld [vmem:[#allocation32 + $0x1d0] sm:$0xff]
    %v4502 = vld [vmem:[#allocation32 + $0x1d8] sm:$0xff]
    %v4503 = vld [vmem:[#allocation32 + $0x1e0] sm:$0xff]
    %v4504 = vld [vmem:[#allocation32 + $0x1e8] sm:$0xff]
    %v4505 = vld [vmem:[#allocation32 + $0x1f0] sm:$0xff]
    %v4506 = vld [vmem:[#allocation32 + $0x1f8] sm:$0xff]
    %v4507 = vld [vmem:[#allocation32 + $0x200] sm:$0xff]
    %v4508 = vld [vmem:[#allocation32 + $0x208] sm:$0xff]
    %v4509 = vld [vmem:[#allocation32 + $0x210] sm:$0xff]
    %v4510 = vld [vmem:[#allocation32 + $0x218] sm:$0xff]
    %v4511 = vld [vmem:[#allocation32 + $0x220] sm:$0xff]
    %v4512 = vld [vmem:[#allocation32 + $0x228] sm:$0xff]
    %v4513 = vld [vmem:[#allocation32 + $0x230] sm:$0xff]
    %v4514 = vld [vmem:[#allocation32 + $0x238] sm:$0xff]
    %v4515 = vld [vmem:[#allocation32 + $0x240] sm:$0xff]
    %v4516 = vld [vmem:[#allocation32 + $0x248] sm:$0xff]
    %v4517 = vld [vmem:[#allocation32 + $0x250] sm:$0xff]
    %v4518 = vld [vmem:[#allocation32 + $0x258] sm:$0xff]
    %v4519 = vld [vmem:[#allocation32 + $0x260] sm:$0xff]
    %v4520 = vld [vmem:[#allocation32 + $0x268] sm:$0xff]
    %v4521 = vld [vmem:[#allocation32 + $0x270] sm:$0xff]
    %v4522 = vld [vmem:[#allocation32 + $0x278] sm:$0xff]
    %v4523 = vld [vmem:[#allocation32 + $0x280] sm:$0xff]
    %v4524 = vld [vmem:[#allocation32 + $0x288] sm:$0xff]
    %v4525 = vld [vmem:[#allocation32 + $0x290] sm:$0xff]
    %v4526 = vld [vmem:[#allocation32 + $0x298] sm:$0xff]
    %v4527 = vld [vmem:[#allocation32 + $0x2a0] sm:$0xff]
    %v4528 = vld [vmem:[#allocation32 + $0x2a8] sm:$0xff]
    %v4529 = vld [vmem:[#allocation32 + $0x2b0] sm:$0xff]
    %v4530 = vld [vmem:[#allocation32 + $0x2b8] sm:$0xff]
    %v4531 = vld [vmem:[#allocation32 + $0x2c0] sm:$0xff]
    %v4532 = vld [vmem:[#allocation32 + $0x2c8] sm:$0xff]
    %v4533 = vld [vmem:[#allocation32 + $0x2d0] sm:$0xff]
    %v4534 = vld [vmem:[#allocation32 + $0x2d8] sm:$0xff]
    %v4535 = vld [vmem:[#allocation32 + $0x2e0] sm:$0xff]
    %v4536 = vld [vmem:[#allocation32 + $0x2e8] sm:$0xff]
    %v4537 = vld [vmem:[#allocation32 + $0x2f0] sm:$0xff]
    %v4538 = vld [vmem:[#allocation32 + $0x2f8] sm:$0xff]
    %v4539 = vld [vmem:[#allocation32 + $0x300] sm:$0xff]
    %v4540 = vld [vmem:[#allocation32 + $0x308] sm:$0xff]
    %v4541 = vld [vmem:[#allocation32 + $0x310] sm:$0xff]
    %v4542 = vld [vmem:[#allocation32 + $0x318] sm:$0xff]
    %v4543 = vld [vmem:[#allocation32 + $0x320] sm:$0xff]
    %v4544 = vld [vmem:[#allocation32 + $0x328] sm:$0xff]
    %v4545 = vld [vmem:[#allocation32 + $0x330] sm:$0xff]
    %v4546 = vld [vmem:[#allocation32 + $0x338] sm:$0xff]
    %v4547 = vld [vmem:[#allocation32 + $0x340] sm:$0xff]
    %v4548 = vld [vmem:[#allocation32 + $0x348] sm:$0xff]
    %v4549 = vld [vmem:[#allocation32 + $0x350] sm:$0xff]
    %v4550 = vld [vmem:[#allocation32 + $0x358] sm:$0xff]
    %v4551 = vld [vmem:[#allocation32 + $0x360] sm:$0xff]
    %v4552 = vld [vmem:[#allocation32 + $0x368] sm:$0xff]
    %v4553 = vld [vmem:[#allocation32 + $0x370] sm:$0xff]
    %v4554 = vld [vmem:[#allocation32 + $0x378] sm:$0xff]
    %v4555 = vld [vmem:[#allocation32 + $0x380] sm:$0xff]
    %v4556 = vld [vmem:[#allocation32 + $0x388] sm:$0xff]
    %v4557 = vld [vmem:[#allocation32 + $0x390] sm:$0xff]
    %v4558 = vld [vmem:[#allocation32 + $0x398] sm:$0xff]
    %v4559 = vld [vmem:[#allocation32 + $0x3a0] sm:$0xff]
    %v4560 = vld [vmem:[#allocation32 + $0x3a8] sm:$0xff]
    %v4561 = vld [vmem:[#allocation32 + $0x3b0] sm:$0xff]
    %v4562 = vld [vmem:[#allocation32 + $0x3b8] sm:$0xff]
    %v4563 = vld [vmem:[#allocation32 + $0x3c0] sm:$0xff]
    %v4564 = vld [vmem:[#allocation32 + $0x3c8] sm:$0xff]
    %v4565 = vld [vmem:[#allocation32 + $0x3d0] sm:$0xff]
    %v4566 = vld [vmem:[#allocation32 + $0x3d8] sm:$0xff]
    %v4567 = vld [vmem:[#allocation32 + $0x3e0] sm:$0xff]
    %v4568 = vld [vmem:[#allocation32 + $0x3e8] sm:$0xff]
    %v4569 = vld [vmem:[#allocation32 + $0x3f0] sm:$0xff]
    %v4570 = vld [vmem:[#allocation32 + $0x3f8] sm:$0xff]
    %v4571 = vld [vmem:[#allocation33] sm:$0x3]
    %v4573 = vlaneseq
    %v4574 = vshrl.u32 %v4573, 7
    %v4575 = vsub.s32 0, %v4574
    %v4576 = vrot.slane %v4571, %v4575
    %v4577 = vlaneseq
    %v4578 = vshrl.u32 %v4577, 7
    %v4579 = vsub.s32 1, %v4578
    %v4580 = vrot.slane %v4571, %v4579
    %4583 = vmatprep.subr.mxu0 %v4444
    %4584 = vmatpush1.msra.mxu0 %v4443
    %4585 = vmatprep.subr.mxu0 %v4446
    %4586 = vmatpush1.msra.mxu0 %v4445
    %4587 = vmatprep.subr.mxu0 %v4448
    %4588 = vmatpush1.msra.mxu0 %v4447
    %4589 = vmatprep.subr.mxu0 %v4450
    %4590 = vmatpush1.msra.mxu0 %v4449
    %4591 = vmatprep.subr.mxu0 %v4452
    %4592 = vmatpush1.msra.mxu0 %v4451
    %4593 = vmatprep.subr.mxu0 %v4454
    %4594 = vmatpush1.msra.mxu0 %v4453
    %4595 = vmatprep.subr.mxu0 %v4456
    %4596 = vmatpush1.msra.mxu0 %v4455
    %4597 = vmatprep.subr.mxu0 %v4458
    %4598 = vmatpush1.msra.mxu0 %v4457
    %4599 = vmatprep.subr.mxu0 %v4460
    %4600 = vmatpush1.msra.mxu0 %v4459
    %4601 = vmatprep.subr.mxu0 %v4462
    %4602 = vmatpush1.msra.mxu0 %v4461
    %4603 = vmatprep.subr.mxu0 %v4464
    %4604 = vmatpush1.msra.mxu0 %v4463
    %4605 = vmatprep.subr.mxu0 %v4466
    %4606 = vmatpush1.msra.mxu0 %v4465
    %4607 = vmatprep.subr.mxu0 %v4468
    %4608 = vmatpush1.msra.mxu0 %v4467
    %4609 = vmatprep.subr.mxu0 %v4470
    %4610 = vmatpush1.msra.mxu0 %v4469
    %4611 = vmatprep.subr.mxu0 %v4472
    %4612 = vmatpush1.msra.mxu0 %v4471
    %4613 = vmatprep.subr.mxu0 %v4474
    %4614 = vmatpush1.msra.mxu0 %v4473
    %4615 = vmatprep.subr.mxu0 %v4476
    %4616 = vmatpush1.msra.mxu0 %v4475
    %4617 = vmatprep.subr.mxu0 %v4478
    %4618 = vmatpush1.msra.mxu0 %v4477
    %4619 = vmatprep.subr.mxu0 %v4480
    %4620 = vmatpush1.msra.mxu0 %v4479
    %4621 = vmatprep.subr.mxu0 %v4482
    %4622 = vmatpush1.msra.mxu0 %v4481
    %4623 = vmatprep.subr.mxu0 %v4484
    %4624 = vmatpush1.msra.mxu0 %v4483
    %4625 = vmatprep.subr.mxu0 %v4486
    %4626 = vmatpush1.msra.mxu0 %v4485
    %4627 = vmatprep.subr.mxu0 %v4488
    %4628 = vmatpush1.msra.mxu0 %v4487
    %4629 = vmatprep.subr.mxu0 %v4490
    %4630 = vmatpush1.msra.mxu0 %v4489
    %4631 = vmatprep.subr.mxu0 %v4492
    %4632 = vmatpush1.msra.mxu0 %v4491
    %4633 = vmatprep.subr.mxu0 %v4494
    %4634 = vmatpush1.msra.mxu0 %v4493
    %4635 = vmatprep.subr.mxu0 %v4496
    %4636 = vmatpush1.msra.mxu0 %v4495
    %4637 = vmatprep.subr.mxu0 %v4498
    %4638 = vmatpush1.msra.mxu0 %v4497
    %4639 = vmatprep.subr.mxu0 %v4500
    %4640 = vmatpush1.msra.mxu0 %v4499
    %4641 = vmatprep.subr.mxu0 %v4502
    %4642 = vmatpush1.msra.mxu0 %v4501
    %4643 = vmatprep.subr.mxu0 %v4504
    %4644 = vmatpush1.msra.mxu0 %v4503
    %4645 = vmatprep.subr.mxu0 %v4506
    %4646 = vmatpush1.msra.mxu0 %v4505
    %4647 = vmatprep.mubr.f32.mxu0 %v4440
    %4648 = vmatmul.mubr.f32.gmra.mrb[0].mxu0 %v4439
    %v4649 = vpop.f32.mrb[0].mxu0
    %v4650 = vadd.f32 %v4576, %v4649
    %v4651 = vpop.f32.mrb[0].mxu0
    %v4652 = vadd.f32 %v4580, %v4651
    %4653 = vdwg.mxu0
    %4654 = vmatprep.subr.mxu0 %v4508
    %4655 = vmatpush1.msra.mxu0 %v4507
    %4656 = vmatprep.subr.mxu0 %v4510
    %4657 = vmatpush1.msra.mxu0 %v4509
    %4658 = vmatprep.subr.mxu0 %v4512
    %4659 = vmatpush1.msra.mxu0 %v4511
    %4660 = vmatprep.subr.mxu0 %v4514
    %4661 = vmatpush1.msra.mxu0 %v4513
    %4662 = vmatprep.subr.mxu0 %v4516
    %4663 = vmatpush1.msra.mxu0 %v4515
    %4664 = vmatprep.subr.mxu0 %v4518
    %4665 = vmatpush1.msra.mxu0 %v4517
    %4666 = vmatprep.subr.mxu0 %v4520
    %4667 = vmatpush1.msra.mxu0 %v4519
    %4668 = vmatprep.subr.mxu0 %v4522
    %4669 = vmatpush1.msra.mxu0 %v4521
    %4670 = vmatprep.subr.mxu0 %v4524
    %4671 = vmatpush1.msra.mxu0 %v4523
    %4672 = vmatprep.subr.mxu0 %v4526
    %4673 = vmatpush1.msra.mxu0 %v4525
    %4674 = vmatprep.subr.mxu0 %v4528
    %4675 = vmatpush1.msra.mxu0 %v4527
    %4676 = vmatprep.subr.mxu0 %v4530
    %4677 = vmatpush1.msra.mxu0 %v4529
    %4678 = vmatprep.subr.mxu0 %v4532
    %4679 = vmatpush1.msra.mxu0 %v4531
    %4680 = vmatprep.subr.mxu0 %v4534
    %4681 = vmatpush1.msra.mxu0 %v4533
    %4682 = vmatprep.subr.mxu0 %v4536
    %4683 = vmatpush1.msra.mxu0 %v4535
    %4684 = vmatprep.subr.mxu0 %v4538
    %4685 = vmatpush1.msra.mxu0 %v4537
    %4686 = vmatprep.subr.mxu0 %v4540
    %4687 = vmatpush1.msra.mxu0 %v4539
    %4688 = vmatprep.subr.mxu0 %v4542
    %4689 = vmatpush1.msra.mxu0 %v4541
    %4690 = vmatprep.subr.mxu0 %v4544
    %4691 = vmatpush1.msra.mxu0 %v4543
    %4692 = vmatprep.subr.mxu0 %v4546
    %4693 = vmatpush1.msra.mxu0 %v4545
    %4694 = vmatprep.subr.mxu0 %v4548
    %4695 = vmatpush1.msra.mxu0 %v4547
    %4696 = vmatprep.subr.mxu0 %v4550
    %4697 = vmatpush1.msra.mxu0 %v4549
    %4698 = vmatprep.subr.mxu0 %v4552
    %4699 = vmatpush1.msra.mxu0 %v4551
    %4700 = vmatprep.subr.mxu0 %v4554
    %4701 = vmatpush1.msra.mxu0 %v4553
    %4702 = vmatprep.subr.mxu0 %v4556
    %4703 = vmatpush1.msra.mxu0 %v4555
    %4704 = vmatprep.subr.mxu0 %v4558
    %4705 = vmatpush1.msra.mxu0 %v4557
    %4706 = vmatprep.subr.mxu0 %v4560
    %4707 = vmatpush1.msra.mxu0 %v4559
    %4708 = vmatprep.subr.mxu0 %v4562
    %4709 = vmatpush1.msra.mxu0 %v4561
    %4710 = vmatprep.subr.mxu0 %v4564
    %4711 = vmatpush1.msra.mxu0 %v4563
    %4712 = vmatprep.subr.mxu0 %v4566
    %4713 = vmatpush1.msra.mxu0 %v4565
    %4714 = vmatprep.subr.mxu0 %v4568
    %4715 = vmatpush1.msra.mxu0 %v4567
    %4716 = vmatprep.subr.mxu0 %v4570
    %4717 = vmatpush1.msra.mxu0 %v4569
    %4718 = vmatprep.mubr.f32.mxu0 %v4442
    %4719 = vmatmul.mubr.f32.gmra.mrb[0].mxu0 %v4441
    %v4720 = vpop.f32.mrb[0].mxu0
    %v4721 = vadd.f32 %v4650, %v4720
    %v4722 = vpop.f32.mrb[0].mxu0
    %v4723 = vadd.f32 %v4652, %v4722
    %4724 = vdwg.mxu0
    %v4725 = vmax.f32 %v4721, 0.0
    %v4726 = vmax.f32 %v4723, 0.0
    %v4727 = vld [vmem:[%s59] sm:$0xff]
    %v4728 = vld [vmem:[%s59 + $0x8] sm:$0xff]
    %v4729 = vld [vmem:[%s59 + $0x10] sm:$0xff]
    %v4730 = vld [vmem:[%s59 + $0x18] sm:$0xff]
    %v4731 = vld [vmem:[%s59 + $0x20] sm:$0xff]
    %v4732 = vld [vmem:[%s59 + $0x28] sm:$0xff]
    %v4733 = vld [vmem:[%s59 + $0x30] sm:$0xff]
    %v4734 = vld [vmem:[%s59 + $0x38] sm:$0xff]
    %v4735 = vld [vmem:[%s59 + $0x40] sm:$0xff]
    %v4736 = vld [vmem:[%s59 + $0x48] sm:$0xff]
    %v4737 = vld [vmem:[%s59 + $0x50] sm:$0xff]
    %v4738 = vld [vmem:[%s59 + $0x58] sm:$0xff]
    %v4739 = vld [vmem:[%s59 + $0x60] sm:$0xff]
    %v4740 = vld [vmem:[%s59 + $0x68] sm:$0xff]
    %v4741 = vld [vmem:[%s59 + $0x70] sm:$0xff]
    %v4742 = vld [vmem:[%s59 + $0x78] sm:$0xff]
    %v4743 = vld [vmem:[%s59 + $0x80] sm:$0xff]
    %v4744 = vld [vmem:[%s59 + $0x88] sm:$0xff]
    %v4745 = vld [vmem:[%s59 + $0x90] sm:$0xff]
    %v4746 = vld [vmem:[%s59 + $0x98] sm:$0xff]
    %v4747 = vld [vmem:[%s59 + $0xa0] sm:$0xff]
    %v4748 = vld [vmem:[%s59 + $0xa8] sm:$0xff]
    %v4749 = vld [vmem:[%s59 + $0xb0] sm:$0xff]
    %v4750 = vld [vmem:[%s59 + $0xb8] sm:$0xff]
    %v4751 = vld [vmem:[%s59 + $0xc0] sm:$0xff]
    %v4752 = vld [vmem:[%s59 + $0xc8] sm:$0xff]
    %v4753 = vld [vmem:[%s59 + $0xd0] sm:$0xff]
    %v4754 = vld [vmem:[%s59 + $0xd8] sm:$0xff]
    %v4755 = vld [vmem:[%s59 + $0xe0] sm:$0xff]
    %v4756 = vld [vmem:[%s59 + $0xe8] sm:$0xff]
    %v4757 = vld [vmem:[%s59 + $0xf0] sm:$0xff]
    %v4758 = vld [vmem:[%s59 + $0xf8] sm:$0xff]
    %v4759 = vld [vmem:[#allocation3] sm:$0x1]
    %v4761 = vlaneseq
    %v4762 = vshrl.u32 %v4761, 7
    %v4763 = vsub.s32 0, %v4762
    %v4764 = vrot.slane %v4759, %v4763
    %4766 = vmatprep.subr.mxu0 0.0
    %4767 = vmatpush1.msra.mxu0 %v4727
    %4768 = vmatprep.subr.mxu0 0.0
    %4769 = vmatpush1.msra.mxu0 %v4728
    %4770 = vmatprep.subr.mxu0 0.0
    %4771 = vmatpush1.msra.mxu0 %v4729
    %4772 = vmatprep.subr.mxu0 0.0
    %4773 = vmatpush1.msra.mxu0 %v4730
    %4774 = vmatprep.subr.mxu0 0.0
    %4775 = vmatpush1.msra.mxu0 %v4731
    %4776 = vmatprep.subr.mxu0 0.0
    %4777 = vmatpush1.msra.mxu0 %v4732
    %4778 = vmatprep.subr.mxu0 0.0
    %4779 = vmatpush1.msra.mxu0 %v4733
    %4780 = vmatprep.subr.mxu0 0.0
    %4781 = vmatpush1.msra.mxu0 %v4734
    %4782 = vmatprep.subr.mxu0 0.0
    %4783 = vmatpush1.msra.mxu0 %v4735
    %4784 = vmatprep.subr.mxu0 0.0
    %4785 = vmatpush1.msra.mxu0 %v4736
    %4786 = vmatprep.subr.mxu0 0.0
    %4787 = vmatpush1.msra.mxu0 %v4737
    %4788 = vmatprep.subr.mxu0 0.0
    %4789 = vmatpush1.msra.mxu0 %v4738
    %4790 = vmatprep.subr.mxu0 0.0
    %4791 = vmatpush1.msra.mxu0 %v4739
    %4792 = vmatprep.subr.mxu0 0.0
    %4793 = vmatpush1.msra.mxu0 %v4740
    %4794 = vmatprep.subr.mxu0 0.0
    %4795 = vmatpush1.msra.mxu0 %v4741
    %4796 = vmatprep.subr.mxu0 0.0
    %4797 = vmatpush1.msra.mxu0 %v4742
    %4798 = vmatprep.subr.mxu0 0.0
    %4799 = vmatpush1.msra.mxu0 %v4743
    %4800 = vmatprep.subr.mxu0 0.0
    %4801 = vmatpush1.msra.mxu0 %v4744
    %4802 = vmatprep.subr.mxu0 0.0
    %4803 = vmatpush1.msra.mxu0 %v4745
    %4804 = vmatprep.subr.mxu0 0.0
    %4805 = vmatpush1.msra.mxu0 %v4746
    %4806 = vmatprep.subr.mxu0 0.0
    %4807 = vmatpush1.msra.mxu0 %v4747
    %4808 = vmatprep.subr.mxu0 0.0
    %4809 = vmatpush1.msra.mxu0 %v4748
    %4810 = vmatprep.subr.mxu0 0.0
    %4811 = vmatpush1.msra.mxu0 %v4749
    %4812 = vmatprep.subr.mxu0 0.0
    %4813 = vmatpush1.msra.mxu0 %v4750
    %4814 = vmatprep.subr.mxu0 0.0
    %4815 = vmatpush1.msra.mxu0 %v4751
    %4816 = vmatprep.subr.mxu0 0.0
    %4817 = vmatpush1.msra.mxu0 %v4752
    %4818 = vmatprep.subr.mxu0 0.0
    %4819 = vmatpush1.msra.mxu0 %v4753
    %4820 = vmatprep.subr.mxu0 0.0
    %4821 = vmatpush1.msra.mxu0 %v4754
    %4822 = vmatprep.subr.mxu0 0.0
    %4823 = vmatpush1.msra.mxu0 %v4755
    %4824 = vmatprep.subr.mxu0 0.0
    %4825 = vmatpush1.msra.mxu0 %v4756
    %4826 = vmatprep.subr.mxu0 0.0
    %4827 = vmatpush1.msra.mxu0 %v4757
    %4828 = vmatprep.subr.mxu0 0.0
    %4829 = vmatpush1.msra.mxu0 %v4758
    %4830 = vmatprep.mubr.f32.mxu0 %v4726
    %4831 = vmatmul.mubr.f32.gmra.mrb[0].mxu0 %v4725
    %v4832 = vpop.f32.mrb[0].mxu0
    %v4833 = vadd.f32 %v4764, %v4832
    %v4834 = vpop.f32.mrb[0].mxu0
    %4835 = vdwg.mxu0
    %v4836 = vxor.u32 %v4833, 2147483648
    %v4837 = vmul.f32 %v4836, 1.442695
    %v4838 = vpow.pop %v4837
    %v4839 = vadd.f32 %v4838, 1.0
    %v4840 = vrcp.pop %v4839
    %v4841 = vmul.f32 1.0, %v4840
    %vm4842 = vcmask 7168
    %4843 = vst.msk [vmem:[%s63] sm:$0xff] %vm4842, %v4841
    // Predicated region
    $region206: #{tpu_custom_call.1} parent=1 // pred_check
      _
    $region207: #{tpu_custom_call.1} parent=1 // pred_check_branch
      %4845 = sbr.rel (0) target = $region209
    $region208: #{tpu_custom_call.1} parent=1 // pred_region
      _
    $region209: #{tpu_custom_call.1} parent=1 // pred_fallthru
      _
    // Predicated region
    $region210: #{tpu_custom_call.1} parent=1 // pred_check
      _
    $region211: #{tpu_custom_call.1} parent=1 // pred_check_branch
      %4847 = sbr.rel (0) target = $region213
    $region212: #{tpu_custom_call.1} parent=1 // pred_region
      _
    $region213: #{tpu_custom_call.1} parent=1 // pred_fallthru
      _
    %4848 = vsyncpa [#allocation5], 1
    %4849 = vsyncpa [#allocation7], 1
    %4850 = vsyncpa [#allocation10], 1
    %4851 = vsyncpa [#allocation13], 1
    %4852 = vsyncpa [#allocation16], 1
    %4853 = vsyncpa [#allocation19], 1
    %4854 = vsyncpa [#allocation22], 1
    %4855 = vsyncpa [#allocation25], 1
    %4856 = vsyncpa [#allocation28], 1
    %4857 = vsyncpa [#allocation31], 1
    %4858 = vsyncpa [#allocation34], 1

</llo_original>
